<compile_context>
chip_gen: v5e
topology: v5e:2x2
jax: 0.10.0
libtpu: 0.0.40
codegen_flags: <defaults>
</compile_context>

<pallas_src>
import functools

import jax
import jax.numpy as jnp
from jax.experimental import pallas as pl
from jax.experimental.pallas import tpu as pltpu


def _knn_body(x, y, rp, K):
    """x: (tN, C), y: (M, C), rp: (tN, M) or None -> (K, tN) int32 indices."""
    x = x.astype(jnp.float32)
    y = y.astype(jnp.float32)

    # F.normalize(p=2, dim=channels): v / max(||v||, 1e-12)
    #   == v * rsqrt(max(||v||^2, 1e-24))   (rsqrt runs on the EUP slot)
    xn = x * jax.lax.rsqrt(
        jnp.maximum(jnp.sum(x * x, axis=-1, keepdims=True), 1e-24))
    yn = y * jax.lax.rsqrt(
        jnp.maximum(jnp.sum(y * y, axis=-1, keepdims=True), 1e-24))

    # dist[i,j] = ||xi||^2 - 2 xi.yj + ||yj||^2 (+ rp).  ||xi||^2 is constant
    # per row so it never changes the per-row argmin -> dropped.  ||yj||^2 is
    # ~1 after normalization but kept (cheap (M,1) reduce) so degenerate
    # zero-norm rows rank exactly as in the PyTorch reference.
    y_sq = jnp.sum(yn * yn, axis=-1, keepdims=True)                  # (M, 1)
    inner = jnp.dot(xn, yn.T, preferred_element_type=jnp.float32)    # (tN, M) MXU
    d = y_sq.T - 2.0 * inner
    if rp is not None:
        d = d + rp.astype(jnp.float32)

    col = jax.lax.broadcasted_iota(jnp.int32, d.shape, 1)            # (tN, M)

    # Iterative top-k (K small & static): repeated row argmin + mask-out,
    # yielding neighbors sorted by increasing distance == torch.topk(-dist).
    # TODO(synk): packed-key (dist|col) single-min variant skipped to preserve
    # exact f32 ordering / tie behavior with signed relative_pos.
    cols = []
    for _ in range(K):
        nn = jnp.argmin(d, axis=-1).astype(jnp.int32)                # (tN,)
        cols.append(nn)
        d = jnp.where(col == nn[:, None], jnp.float32(3e38), d)

    # Lane-dense result: K on sublanes, tN on lanes -> unmasked vst.
    return jnp.stack(cols, axis=0)                                   # (K, tN)


def _knn_kernel(x_ref, y_ref, idx_ref, *, K):
    idx_ref[0] = _knn_body(x_ref[0], y_ref[0], None, K)


def _knn_kernel_rp(x_ref, y_ref, rp_ref, idx_ref, *, K):
    idx_ref[0] = _knn_body(x_ref[0], y_ref[0], rp_ref[0], K)


def _pick_query_tile(N):
    # Output lane dim == tN must be a multiple of 128 (or the full N); query
    # sublane dim == tN then also satisfies the 8-multiple rule.  512 keeps
    # live (tN, M) f32 intermediates small enough for v7x's 64 MiB VMEM at
    # moderate M; fall back to a monolithic block when N has no 128-divisor.
    for t in (512, 256, 128):
        if N % t == 0:
            return t
    return N


def _knn_pallas(xt, yt, relative_pos, K):
    """xt: (B, N, C), yt: (B, M, C),
    relative_pos: None | (N, M) | (1, N, M) | (B, N, M).
    Returns (B, K, N) int32 nearest-neighbor indices (lane-dense in N)."""
    B, N, C = xt.shape
    M = yt.shape[1]
    tN = _pick_query_tile(N)
    grid = (B, N // tN)

    x_spec = pl.BlockSpec((1, tN, C), lambda b, n: (b, n, 0))
    y_spec = pl.BlockSpec((1, M, C), lambda b, n: (b, 0, 0))
    out_spec = pl.BlockSpec((1, K, tN), lambda b, n: (b, 0, n))
    out_shape = jax.ShapeDtypeStruct((B, K, N), jnp.int32)
    cparams = pltpu.CompilerParams(
        dimension_semantics=("parallel", "parallel"))

    rp_bytes = 0 if relative_pos is None else 4 * B * N * M
    cost = pl.CostEstimate(
        flops=2 * B * N * M * C + K * B * N * M,
        transcendentals=B * (N + M * (N // tN)),
        bytes_accessed=4 * (B * N * C + B * M * C * (N // tN) + B * K * N)
        + rp_bytes,
    )

    if relative_pos is None:
        # No zero relative_pos tensor is built or DMA'd at all.
        return pl.pallas_call(
            functools.partial(_knn_kernel, K=K),
            out_shape=out_shape,
            grid=grid,
            in_specs=[x_spec, y_spec],
            out_specs=out_spec,
            compiler_params=cparams,
            cost_estimate=cost,
        )(xt, yt)

    rp = jnp.asarray(relative_pos, dtype=jnp.float32)
    if rp.ndim == 2:
        rp = rp[None]
    if rp.shape[0] == 1:
        # Broadcast over batch via the index_map: same HBM block every step.
        rp_spec = pl.BlockSpec((1, tN, M), lambda b, n: (0, n, 0))
    else:
        rp_spec = pl.BlockSpec((1, tN, M), lambda b, n: (b, n, 0))
    return pl.pallas_call(
        functools.partial(_knn_kernel_rp, K=K),
        out_shape=out_shape,
        grid=grid,
        in_specs=[x_spec, y_spec, rp_spec],
        out_specs=out_spec,
        compiler_params=cparams,
        cost_estimate=cost,
    )(xt, yt, rp)


class DenseDilatedKnnGraph:
    """JAX/Pallas port of DenseDilatedKnnGraph (inference path)."""

    def __init__(self, k=9, dilation=1, stochastic=False, epsilon=0.0):
        self.k = k
        self.dilation = dilation
        self.stochastic = stochastic
        self.epsilon = epsilon
        # TODO(synk): stochastic dilation (training-only randperm branch) is
        # not implemented; eval-mode behavior (strided slicing) is reproduced.

    def __call__(self, x, y=None, relative_pos=None):
        # x: (B, C, N, 1)  (NCHW with W == 1, as the PyTorch module expects)
        B, C, N, _ = x.shape
        K = self.k * self.dilation

        xt = jnp.transpose(x[..., 0], (0, 2, 1))                   # (B, N, C)
        if y is not None:
            yt = jnp.transpose(y[..., 0], (0, 2, 1))               # (B, M, C)
        else:
            yt = xt

        nn_idx_kn = _knn_pallas(xt, yt, relative_pos, K)           # (B, K, N)
        nn_idx = jnp.transpose(nn_idx_kn, (0, 2, 1))               # (B, N, K)
        center_idx = jnp.broadcast_to(
            jnp.arange(N, dtype=jnp.int32)[None, :, None], (B, N, K))
        edge_index = jnp.stack([nn_idx, center_idx], axis=0)       # (2,B,N,K)
        return edge_index[:, :, :, ::self.dilation]                # (2,B,N,k)


if __name__ == "__main__":
    key = jax.random.PRNGKey(0)
    B, C, H, W = 2, 4, 16, 16
    N = H * W
    # The module consumes (B, C, N, 1) point-cloud layout (H*W flattened).
    x = jax.random.normal(key, (B, C, N, 1), dtype=jnp.float32)

    graph = DenseDilatedKnnGraph(k=4, dilation=2)

    # Path 1: no relative_pos (no zero-bias DMA at all).
    edge_index = jax.block_until_ready(graph(x))
    assert edge_index.shape == (2, B, N, 4), edge_index.shape
    assert edge_index.dtype == jnp.int32
    assert int(jnp.min(edge_index[0])) >= 0
    assert int(jnp.max(edge_index[0])) < N

    # Path 2: relative_pos with broadcast leading dim (reused across batch).
    rp = 0.01 * jax.random.normal(
        jax.random.PRNGKey(1), (1, N, N), dtype=jnp.float32)
    edge_index_rp = jax.block_until_ready(graph(x, relative_pos=rp))
    assert edge_index_rp.shape == (2, B, N, 4), edge_index_rp.shape

    print("KERNEL_OK")
</pallas_src>

<mosaic_0001>
module attributes {stable_mosaic.version = 11 : i64} {
  func.func @_knn_kernel(%arg0: i32, %arg1: i32, %arg2: memref<1x256x4xf32, #tpu.memory_space<vmem>>, %arg3: memref<1x256x4xf32, #tpu.memory_space<vmem>>, %arg4: memref<1x8x256xi32, #tpu.memory_space<vmem>>) attributes {dimension_semantics = [#tpu.dimension_semantics<parallel>, #tpu.dimension_semantics<parallel>], iteration_bounds = array<i64: 2, 1>, scalar_prefetch = 0 : i64, scratch_operands = 0 : i64, tpu.core_type = #tpu.core_type<tc>, window_params = [{transform_indices = @transform_0, window_bounds = array<i64: 1, 256, 4>}, {transform_indices = @transform_1, window_bounds = array<i64: 1, 256, 4>}, {transform_indices = @transform_2, window_bounds = array<i64: 1, 8, 256>}]} {
    %c0 = arith.constant 0 : index
    %c0_0 = arith.constant 0 : index
    %c0_1 = arith.constant 0 : index
    %0 = vector.load %arg2[%c0, %c0_0, %c0_1] : memref<1x256x4xf32, #tpu.memory_space<vmem>>, vector<1x256x4xf32>
    %1 = vector.shape_cast %0 : vector<1x256x4xf32> to vector<256x4xf32>
    %c0_2 = arith.constant 0 : index
    %c0_3 = arith.constant 0 : index
    %c0_4 = arith.constant 0 : index
    %2 = vector.load %arg3[%c0_2, %c0_3, %c0_4] : memref<1x256x4xf32, #tpu.memory_space<vmem>>, vector<1x256x4xf32>
    %3 = vector.shape_cast %2 : vector<1x256x4xf32> to vector<256x4xf32>
    %4 = arith.mulf %1, %1 : vector<256x4xf32>
    %cst = arith.constant dense<0.000000e+00> : vector<256xf32>
    %5 = vector.multi_reduction <add>, %4, %cst [1] : vector<256x4xf32> to vector<256xf32>
    %6 = vector.shape_cast %5 : vector<256xf32> to vector<256x1xf32>
    %cst_5 = arith.constant 1.000000e-24 : f32
    %7 = vector.broadcast %cst_5 : f32 to vector<256x1xf32>
    %8 = arith.maximumf %6, %7 : vector<256x1xf32>
    %9 = math.rsqrt %8 : vector<256x1xf32>
    %10 = vector.broadcast %9 : vector<256x1xf32> to vector<256x4xf32>
    %11 = arith.mulf %1, %10 : vector<256x4xf32>
    %12 = arith.mulf %3, %3 : vector<256x4xf32>
    %cst_6 = arith.constant dense<0.000000e+00> : vector<256xf32>
    %13 = vector.multi_reduction <add>, %12, %cst_6 [1] : vector<256x4xf32> to vector<256xf32>
    %14 = vector.shape_cast %13 : vector<256xf32> to vector<256x1xf32>
    %cst_7 = arith.constant 1.000000e-24 : f32
    %15 = vector.broadcast %cst_7 : f32 to vector<256x1xf32>
    %16 = arith.maximumf %14, %15 : vector<256x1xf32>
    %17 = math.rsqrt %16 : vector<256x1xf32>
    %18 = vector.broadcast %17 : vector<256x1xf32> to vector<256x4xf32>
    %19 = arith.mulf %3, %18 : vector<256x4xf32>
    %20 = arith.mulf %19, %19 : vector<256x4xf32>
    %cst_8 = arith.constant dense<0.000000e+00> : vector<256xf32>
    %21 = vector.multi_reduction <add>, %20, %cst_8 [1] : vector<256x4xf32> to vector<256xf32>
    %22 = vector.shape_cast %21 : vector<256xf32> to vector<256x1xf32>
    %23 = tpu.transpose %19, [1, 0] : vector<256x4xf32> -> vector<4x256xf32>
    %cst_9 = arith.constant dense<0.000000e+00> : vector<256x256xf32>
    %24 = tpu.matmul %11, %23, %cst_9 {dimension_numbers = #tpu.dot_dimension_numbers<[1], [0], [0], [1], [0, 0, 1, 1], [], []>} : vector<256x4xf32>, vector<4x256xf32>, vector<256x256xf32> -> vector<256x256xf32>
    %25 = tpu.transpose %22, [1, 0] : vector<256x1xf32> -> vector<1x256xf32>
    %cst_10 = arith.constant 2.000000e+00 : f32
    %26 = vector.broadcast %cst_10 : f32 to vector<256x256xf32>
    %27 = arith.mulf %26, %24 : vector<256x256xf32>
    %28 = vector.broadcast %25 : vector<1x256xf32> to vector<256x256xf32>
    %29 = arith.subf %28, %27 : vector<256x256xf32>
    %30 = tpu.iota {dimensions = array<i32: 1>} : vector<256x256xi32>
    %31 = tpu.reduce_index %29 {axis = 1 : i32, kind = #tpu.reduction_kind<arg_min>} : vector<256x256xf32> -> vector<256xi32>
    %32 = vector.shape_cast %31 : vector<256xi32> to vector<256x1xi32>
    %33 = vector.broadcast %32 : vector<256x1xi32> to vector<256x256xi32>
    %34 = arith.cmpi eq, %30, %33 : vector<256x256xi32>
    %cst_11 = arith.constant 3.000000e+38 : f32
    %35 = vector.broadcast %cst_11 : f32 to vector<256x256xf32>
    %36 = arith.select %34, %35, %29 : vector<256x256xi1>, vector<256x256xf32>
    %37 = tpu.reduce_index %36 {axis = 1 : i32, kind = #tpu.reduction_kind<arg_min>} : vector<256x256xf32> -> vector<256xi32>
    %38 = vector.shape_cast %37 : vector<256xi32> to vector<256x1xi32>
    %39 = vector.broadcast %38 : vector<256x1xi32> to vector<256x256xi32>
    %40 = arith.cmpi eq, %30, %39 : vector<256x256xi32>
    %cst_12 = arith.constant 3.000000e+38 : f32
    %41 = vector.broadcast %cst_12 : f32 to vector<256x256xf32>
    %42 = arith.select %40, %41, %36 : vector<256x256xi1>, vector<256x256xf32>
    %43 = tpu.reduce_index %42 {axis = 1 : i32, kind = #tpu.reduction_kind<arg_min>} : vector<256x256xf32> -> vector<256xi32>
    %44 = vector.shape_cast %43 : vector<256xi32> to vector<256x1xi32>
    %45 = vector.broadcast %44 : vector<256x1xi32> to vector<256x256xi32>
    %46 = arith.cmpi eq, %30, %45 : vector<256x256xi32>
    %cst_13 = arith.constant 3.000000e+38 : f32
    %47 = vector.broadcast %cst_13 : f32 to vector<256x256xf32>
    %48 = arith.select %46, %47, %42 : vector<256x256xi1>, vector<256x256xf32>
    %49 = tpu.reduce_index %48 {axis = 1 : i32, kind = #tpu.reduction_kind<arg_min>} : vector<256x256xf32> -> vector<256xi32>
    %50 = vector.shape_cast %49 : vector<256xi32> to vector<256x1xi32>
    %51 = vector.broadcast %50 : vector<256x1xi32> to vector<256x256xi32>
    %52 = arith.cmpi eq, %30, %51 : vector<256x256xi32>
    %cst_14 = arith.constant 3.000000e+38 : f32
    %53 = vector.broadcast %cst_14 : f32 to vector<256x256xf32>
    %54 = arith.select %52, %53, %48 : vector<256x256xi1>, vector<256x256xf32>
    %55 = tpu.reduce_index %54 {axis = 1 : i32, kind = #tpu.reduction_kind<arg_min>} : vector<256x256xf32> -> vector<256xi32>
    %56 = vector.shape_cast %55 : vector<256xi32> to vector<256x1xi32>
    %57 = vector.broadcast %56 : vector<256x1xi32> to vector<256x256xi32>
    %58 = arith.cmpi eq, %30, %57 : vector<256x256xi32>
    %cst_15 = arith.constant 3.000000e+38 : f32
    %59 = vector.broadcast %cst_15 : f32 to vector<256x256xf32>
    %60 = arith.select %58, %59, %54 : vector<256x256xi1>, vector<256x256xf32>
    %61 = tpu.reduce_index %60 {axis = 1 : i32, kind = #tpu.reduction_kind<arg_min>} : vector<256x256xf32> -> vector<256xi32>
    %62 = vector.shape_cast %61 : vector<256xi32> to vector<256x1xi32>
    %63 = vector.broadcast %62 : vector<256x1xi32> to vector<256x256xi32>
    %64 = arith.cmpi eq, %30, %63 : vector<256x256xi32>
    %cst_16 = arith.constant 3.000000e+38 : f32
    %65 = vector.broadcast %cst_16 : f32 to vector<256x256xf32>
    %66 = arith.select %64, %65, %60 : vector<256x256xi1>, vector<256x256xf32>
    %67 = tpu.reduce_index %66 {axis = 1 : i32, kind = #tpu.reduction_kind<arg_min>} : vector<256x256xf32> -> vector<256xi32>
    %68 = vector.shape_cast %67 : vector<256xi32> to vector<256x1xi32>
    %69 = vector.broadcast %68 : vector<256x1xi32> to vector<256x256xi32>
    %70 = arith.cmpi eq, %30, %69 : vector<256x256xi32>
    %cst_17 = arith.constant 3.000000e+38 : f32
    %71 = vector.broadcast %cst_17 : f32 to vector<256x256xf32>
    %72 = arith.select %70, %71, %66 : vector<256x256xi1>, vector<256x256xf32>
    %73 = tpu.reduce_index %72 {axis = 1 : i32, kind = #tpu.reduction_kind<arg_min>} : vector<256x256xf32> -> vector<256xi32>
    %74 = vector.shape_cast %31 : vector<256xi32> to vector<1x256xi32>
    %75 = vector.shape_cast %37 : vector<256xi32> to vector<1x256xi32>
    %76 = vector.shape_cast %43 : vector<256xi32> to vector<1x256xi32>
    %77 = vector.shape_cast %49 : vector<256xi32> to vector<1x256xi32>
    %78 = vector.shape_cast %55 : vector<256xi32> to vector<1x256xi32>
    %79 = vector.shape_cast %61 : vector<256xi32> to vector<1x256xi32>
    %80 = vector.shape_cast %67 : vector<256xi32> to vector<1x256xi32>
    %81 = vector.shape_cast %73 : vector<256xi32> to vector<1x256xi32>
    %82 = tpu.concatenate %74, %75, %76, %77, %78, %79, %80, %81 in 0 : vector<1x256xi32>, vector<1x256xi32>, vector<1x256xi32>, vector<1x256xi32>, vector<1x256xi32>, vector<1x256xi32>, vector<1x256xi32>, vector<1x256xi32> -> vector<8x256xi32>
    %c0_18 = arith.constant 0 : index
    %c0_19 = arith.constant 0 : index
    %c0_20 = arith.constant 0 : index
    %83 = vector.load %arg4[%c0_18, %c0_19, %c0_20] : memref<1x8x256xi32, #tpu.memory_space<vmem>>, vector<1x8x256xi32>
    %84 = vector.shape_cast %83 : vector<1x8x256xi32> to vector<8x256xi32>
    %85 = vector.shape_cast %82 : vector<8x256xi32> to vector<1x8x256xi32>
    tpu.vector_store %arg4[%c0_18, %c0_19, %c0_20], %85 {strides = array<i32>} : memref<1x8x256xi32, #tpu.memory_space<vmem>>, vector<1x8x256xi32>,
    return
  }
  func.func @transform_0(%arg0: i32, %arg1: i32) -> (i32, i32, i32) {
    %c0_i32 = arith.constant 0 : i32
    %c0_i32_0 = arith.constant 0 : i32
    return %arg0, %arg1, %c0_i32 : i32, i32, i32
  }
  func.func @transform_1(%arg0: i32, %arg1: i32) -> (i32, i32, i32) {
    %c0_i32 = arith.constant 0 : i32
    %c0_i32_0 = arith.constant 0 : i32
    %c0_i32_1 = arith.constant 0 : i32
    return %arg0, %c0_i32, %c0_i32_0 : i32, i32, i32
  }
  func.func @transform_2(%arg0: i32, %arg1: i32) -> (i32, i32, i32) {
    %c0_i32 = arith.constant 0 : i32
    %c0_i32_0 = arith.constant 0 : i32
    return %arg0, %c0_i32, %arg1 : i32, i32, i32
  }
}

</mosaic_0001>

<llo_original>
// kernel: tpu_custom_call.1
$region0: #{tpu_custom_call.1}
  #allocation0 [shape = 'u32[]', space=smem, size = 0x4, offset = 0x4, fixed_abs, tag = 'smem constant byte address 0x4 - core index']
  #allocation1 [shape = 'u32[72,128]{1,0:T(1,128)}', space=vmem, size = 0x9000, scoped, tag = 'internal scratch']
  %s0 = inlined_call_operand.vmem [shape: f32[2,256,4], index: 0, kind: input, shape index: {}]
  %s1 = inlined_call_operand.vmem [shape: f32[2,256,4], index: 1, kind: input, shape index: {}]
  %s2 = inlined_call_operand.hbm [shape: s32[2,8,256], index: 2, kind: output, shape index: {}]
  %s3 = sld [smem:[#allocation0]]
  $region41: #{tpu_custom_call.1} parent=0
    _
  %s5 = ssub.s32 1, %s3
  %s6 = scalar_select 0, %s5, %s3
  $region1: #{tpu_custom_call.1} parent=0
    #allocation2 [shape = 'u8[16384]{0}', space=vmem, size = 0x4000, scoped, tag = 'output window, operand 0']
    #allocation3 [shape = 's32[2]{0}', space=sflag, size = 0x8, scoped, tag = 'scoped memory for tpu_custom_call.1']
    %7 = vsyncpa [#allocation3], 0
    %s8 = scalar_lea.sflag [#allocation3], 1
    %9 = vsyncpa %s8, 0
    loop: start=0, step=1, limit=4
    $region2: #{tpu_custom_call.1} parent=1 // loop_pre_header
      _
    $region3: #{tpu_custom_call.1} parent=1 // loop_header
      %s11 = sphi 0, %s15
      %p12 = scmp.ge.s32.totalorder %s11, 4
      %s18 = sphi 0, %s30
      %s19 = sphi 0, %s26
      %s20 = sphi 0, %s18
      %s21 = sphi 0, %s19
      %s22 = sphi 0, %s20
      %s23 = sphi 0, %s21
      %s35 = sphi 0, %s37
      %s38 = sphi 0, %s35
      %s39 = sphi 0, %s38
      %s55 = sphi 0, %s39
      %s61 = sphi 0, %s63
      %s64 = sphi 0, %s61
      %s65 = sphi 0, %s64
      %s81 = sphi 0, %s65
      %s89 = sphi 0, %s91
      %s92 = sphi 0, %s89
      %s93 = sphi 0, %s92
      %s109 = sphi 0, %s93
    $region4: #{tpu_custom_call.1} parent=1 // loop_header_branch
      %14 = sbr.rel (%p12) target = $region8
    $region5: #{tpu_custom_call.1} parent=1 // loop_body
      %s16 = ssub.s32 %s11, 1
      %s17 = ssub.s32 %s11, 2
      %s24 = sadd.s32 1, %s19
      %p25 = scmp.ge.s32.totalorder %s24, 1
      %s26 = scalar_select %p25, 0, %s24
      %s27 = sadd.s32 1, %s18
      %s28 = scalar_select %p25, %s27, %s18
      %p29 = scmp.ge.s32.totalorder %s28, 2
      %s30 = scalar_select %p29, 0, %s28
      %s31 = ssub.s32 %s18, %s30
      %s32 = ssub.s32 %s19, %s26
      %s33 = sor.u32 %s31, %s32
      %p34 = scmp.eq.s32.totalorder %s33, 0
      %s36 = sadd.s32 %s35, 1
      %s37 = scalar_select %p34, %s35, %s36
      %p40 = pneg %p34
      %p41 = scmp.eq.s32.totalorder %s11, 1
      %p42 = por %p40, %p41
      %p43 = scmp.ne.s32.totalorder %s35, %s38
      %p44 = scmp.eq.s32.totalorder %s11, 0
      %p45 = por %p43, %p44
      %p46 = scmp.ne.s32.totalorder %s35, %s38
      %p47 = scmp.eq.s32.totalorder %s16, 1
      %p48 = por %p46, %p47
      %p49 = scmp.ne.s32.totalorder %s38, %s39
      %p50 = scmp.eq.s32.totalorder %s16, 0
      %p51 = por %p49, %p50
      %p52 = scmp.ne.s32.totalorder %s38, %s39
      %p53 = scmp.eq.s32.totalorder %s17, 1
      %p54 = por %p52, %p53
      %p56 = scmp.ne.s32.totalorder %s39, %s55
      %p57 = scmp.eq.s32.totalorder %s17, 0
      %p58 = por %p56, %p57
      %s59 = ssub.s32 %s18, %s30
      %p60 = scmp.eq.s32.totalorder %s59, 0
      %s62 = sadd.s32 %s61, 1
      %s63 = scalar_select %p60, %s61, %s62
      %p66 = pneg %p60
      %p67 = scmp.eq.s32.totalorder %s11, 1
      %p68 = por %p66, %p67
      %p69 = scmp.ne.s32.totalorder %s61, %s64
      %p70 = scmp.eq.s32.totalorder %s11, 0
      %p71 = por %p69, %p70
      %p72 = scmp.ne.s32.totalorder %s61, %s64
      %p73 = scmp.eq.s32.totalorder %s16, 1
      %p74 = por %p72, %p73
      %p75 = scmp.ne.s32.totalorder %s64, %s65
      %p76 = scmp.eq.s32.totalorder %s16, 0
      %p77 = por %p75, %p76
      %p78 = scmp.ne.s32.totalorder %s64, %s65
      %p79 = scmp.eq.s32.totalorder %s17, 1
      %p80 = por %p78, %p79
      %p82 = scmp.ne.s32.totalorder %s65, %s81
      %p83 = scmp.eq.s32.totalorder %s17, 0
      %p84 = por %p82, %p83
      %s85 = ssub.s32 %s18, %s30
      %s86 = ssub.s32 %s19, %s26
      %s87 = sor.u32 %s85, %s86
      %p88 = scmp.eq.s32.totalorder %s87, 0
      %s90 = sadd.s32 %s89, 1
      %s91 = scalar_select %p88, %s89, %s90
      %p94 = pneg %p88
      %p95 = scmp.eq.s32.totalorder %s11, 1
      %p96 = por %p94, %p95
      %p97 = scmp.ne.s32.totalorder %s89, %s92
      %p98 = scmp.eq.s32.totalorder %s11, 0
      %p99 = por %p97, %p98
      %p100 = scmp.ne.s32.totalorder %s89, %s92
      %p101 = scmp.eq.s32.totalorder %s16, 1
      %p102 = por %p100, %p101
      %p103 = scmp.ne.s32.totalorder %s92, %s93
      %p104 = scmp.eq.s32.totalorder %s16, 0
      %p105 = por %p103, %p104
      %p106 = scmp.ne.s32.totalorder %s92, %s93
      %p107 = scmp.eq.s32.totalorder %s17, 1
      %p108 = por %p106, %p107
      %p110 = scmp.ne.s32.totalorder %s93, %s109
      %p111 = scmp.eq.s32.totalorder %s17, 0
      %p112 = por %p110, %p111
      %p113 = scmp.le.s32.totalorder 1, %s11
      %p114 = scmp.lt.s32.totalorder %s11, 3
      %p115 = pnand %p113, %p114
      %p116 = pneg %p115
      // Predicated region
      $region9: #{tpu_custom_call.1} parent=5 // pred_check
        _
      $region10: #{tpu_custom_call.1} parent=5 // pred_check_branch
        %118 = sbr.rel (%p115) target = $region12
      $region11: #{tpu_custom_call.1} parent=5 // pred_region
        %s119 = ssub.s32 %s11, 1
      $region12: #{tpu_custom_call.1} parent=5 // pred_fallthru
        _
      %p120 = scmp.lt.s32.totalorder %s11, 2
      // Predicated region
      $region13: #{tpu_custom_call.1} parent=5 // pred_check
        %p121 = pneg %p120
      $region14: #{tpu_custom_call.1} parent=5 // pred_check_branch
        %123 = sbr.rel (%p121) target = $region16
      $region15: #{tpu_custom_call.1} parent=5 // pred_region
        // Predicated region
        $region17: #{tpu_custom_call.1} parent=15 // pred_check
          %p124 = pneg %p45
        $region18: #{tpu_custom_call.1} parent=15 // pred_check_branch
          %126 = sbr.rel (%p124) target = $region20
        $region19: #{tpu_custom_call.1} parent=15 // pred_region
          %s127 = smul.u32 32, %s19
          %p128 = scmp.lt.s32.totalorder %s18, 1
          %s129 = scalar_select %p128, %s18, 1
          %p130 = scmp.lt.s32.totalorder %s127, 31
          %s131 = scalar_select %p130, %s127, 31
          %s132 = smul.addr %s129, 32
          %s133 = sadd.s32 %s131, %s132
          %s134 = smul.addr %s133, 8
          %s135 = scalar_lea.vmem %s0, %s134
          %s136 = smul.u32 32, %s19
        $region20: #{tpu_custom_call.1} parent=15 // pred_fallthru
          _
        // Predicated region
        $region21: #{tpu_custom_call.1} parent=15 // pred_check
          %p137 = pneg %p71
        $region22: #{tpu_custom_call.1} parent=15 // pred_check_branch
          %139 = sbr.rel (%p137) target = $region24
        $region23: #{tpu_custom_call.1} parent=15 // pred_region
          %p140 = scmp.lt.s32.totalorder %s18, 1
          %s141 = scalar_select %p140, %s18, 1
          %s142 = smul.addr %s141, 32
          %s143 = smul.addr %s142, 8
          %s144 = scalar_lea.vmem %s1, %s143
        $region24: #{tpu_custom_call.1} parent=15 // pred_fallthru
          _
      $region16: #{tpu_custom_call.1} parent=5 // pred_fallthru
        _
      %p145 = scmp.le.s32.totalorder 1, %s11
      %p146 = scmp.lt.s32.totalorder %s11, 3
      %p147 = pnand %p145, %p146
      %p148 = pneg %p147
      // Predicated region
      $region25: #{tpu_custom_call.1} parent=5 // pred_check
        _
      $region26: #{tpu_custom_call.1} parent=5 // pred_check_branch
        %150 = sbr.rel (%p147) target = $region28
      $region27: #{tpu_custom_call.1} parent=5 // pred_region
        %s151 = ssub.s32 %s11, 1
        %s152 = smul.u32 32, %s21
        %p153 = scmp.lt.s32.totalorder %s20, 1
        %s154 = scalar_select %p153, %s20, 1
        %p155 = scmp.lt.s32.totalorder %s152, 31
        %s156 = scalar_select %p155, %s152, 31
        %s157 = smul.addr %s154, 32
        %s158 = sadd.s32 %s156, %s157
        %s159 = smul.addr %s158, 8
        %s160 = scalar_lea.vmem %s0, %s159
        %p161 = pneg %p51
        %p162 = pneg %p48
        %p163 = scmp.lt.s32.totalorder %s20, 1
        %s164 = scalar_select %p163, %s20, 1
        %s165 = smul.addr %s164, 32
        %s166 = smul.addr %s165, 8
        %s167 = scalar_lea.vmem %s1, %s166
        %p168 = pneg %p77
        %p169 = pneg %p74
        %p170 = pneg %p105
        %p171 = pneg %p102
        %s172 = sand.u32 %s92, 1
        %s173 = scalar_lea.sflag [#allocation3], %s172
        %s174 = sand.u32 %s92, 1
        %s175 = smul.addr %s174, 16
        %s176 = scalar_lea.vmem [#allocation2], %s175
        %s177 = smul.u32 32, %s21
        %p178 = scmp.lt.s32.totalorder %s20, 1
        %s179 = scalar_select %p178, %s20, 1
        %p180 = scmp.lt.s32.totalorder %s177, 31
        %s181 = scalar_select %p180, %s177, 31
        %s182 = smul.addr %s179, 32
        %s183 = sadd.s32 %s181, %s182
        %s184 = smul.addr %s183, 8
        %s185 = scalar_lea.vmem %s0, %s184
        %s186 = smul.u32 32, %s21
        %p187 = scmp.lt.s32.totalorder %s20, 1
        %s188 = scalar_select %p187, %s20, 1
        %s189 = smul.addr %s188, 32
        %s190 = smul.addr %s189, 8
        %s191 = scalar_lea.vmem %s1, %s190
        %s192 = smul.u32 2, %s21
        %v193 = vld [vmem:[%s185] sm:$0xff]
        %v194 = vld [vmem:[%s185 + $0x8] sm:$0xff]
        %v195 = vld [vmem:[%s185 + $0x10] sm:$0xff]
        %v196 = vld [vmem:[%s185 + $0x18] sm:$0xff]
        %v197 = vld [vmem:[%s185 + $0x20] sm:$0xff]
        %v198 = vld [vmem:[%s185 + $0x28] sm:$0xff]
        %v199 = vld [vmem:[%s185 + $0x30] sm:$0xff]
        %v200 = vld [vmem:[%s185 + $0x38] sm:$0xff]
        %v201 = vld [vmem:[%s185 + $0x40] sm:$0xff]
        %v202 = vld [vmem:[%s185 + $0x48] sm:$0xff]
        %v203 = vld [vmem:[%s185 + $0x50] sm:$0xff]
        %v204 = vld [vmem:[%s185 + $0x58] sm:$0xff]
        %v205 = vld [vmem:[%s185 + $0x60] sm:$0xff]
        %v206 = vld [vmem:[%s185 + $0x68] sm:$0xff]
        %v207 = vld [vmem:[%s185 + $0x70] sm:$0xff]
        %v208 = vld [vmem:[%s185 + $0x78] sm:$0xff]
        %v209 = vld [vmem:[%s185 + $0x80] sm:$0xff]
        %v210 = vld [vmem:[%s185 + $0x88] sm:$0xff]
        %v211 = vld [vmem:[%s185 + $0x90] sm:$0xff]
        %v212 = vld [vmem:[%s185 + $0x98] sm:$0xff]
        %v213 = vld [vmem:[%s185 + $0xa0] sm:$0xff]
        %v214 = vld [vmem:[%s185 + $0xa8] sm:$0xff]
        %v215 = vld [vmem:[%s185 + $0xb0] sm:$0xff]
        %v216 = vld [vmem:[%s185 + $0xb8] sm:$0xff]
        %v217 = vld [vmem:[%s185 + $0xc0] sm:$0xff]
        %v218 = vld [vmem:[%s185 + $0xc8] sm:$0xff]
        %v219 = vld [vmem:[%s185 + $0xd0] sm:$0xff]
        %v220 = vld [vmem:[%s185 + $0xd8] sm:$0xff]
        %v221 = vld [vmem:[%s185 + $0xe0] sm:$0xff]
        %v222 = vld [vmem:[%s185 + $0xe8] sm:$0xff]
        %v223 = vld [vmem:[%s185 + $0xf0] sm:$0xff]
        %v224 = vld [vmem:[%s185 + $0xf8] sm:$0xff]
        %v225 = vld [vmem:[%s191] sm:$0xff]
        %v226 = vld [vmem:[%s191 + $0x8] sm:$0xff]
        %v227 = vld [vmem:[%s191 + $0x10] sm:$0xff]
        %v228 = vld [vmem:[%s191 + $0x18] sm:$0xff]
        %v229 = vld [vmem:[%s191 + $0x20] sm:$0xff]
        %v230 = vld [vmem:[%s191 + $0x28] sm:$0xff]
        %v231 = vld [vmem:[%s191 + $0x30] sm:$0xff]
        %v232 = vld [vmem:[%s191 + $0x38] sm:$0xff]
        %v233 = vld [vmem:[%s191 + $0x40] sm:$0xff]
        %v234 = vld [vmem:[%s191 + $0x48] sm:$0xff]
        %v235 = vld [vmem:[%s191 + $0x50] sm:$0xff]
        %v236 = vld [vmem:[%s191 + $0x58] sm:$0xff]
        %v237 = vld [vmem:[%s191 + $0x60] sm:$0xff]
        %v238 = vld [vmem:[%s191 + $0x68] sm:$0xff]
        %v239 = vld [vmem:[%s191 + $0x70] sm:$0xff]
        %v240 = vld [vmem:[%s191 + $0x78] sm:$0xff]
        %v241 = vld [vmem:[%s191 + $0x80] sm:$0xff]
        %v242 = vld [vmem:[%s191 + $0x88] sm:$0xff]
        %v243 = vld [vmem:[%s191 + $0x90] sm:$0xff]
        %v244 = vld [vmem:[%s191 + $0x98] sm:$0xff]
        %v245 = vld [vmem:[%s191 + $0xa0] sm:$0xff]
        %v246 = vld [vmem:[%s191 + $0xa8] sm:$0xff]
        %v247 = vld [vmem:[%s191 + $0xb0] sm:$0xff]
        %v248 = vld [vmem:[%s191 + $0xb8] sm:$0xff]
        %v249 = vld [vmem:[%s191 + $0xc0] sm:$0xff]
        %v250 = vld [vmem:[%s191 + $0xc8] sm:$0xff]
        %v251 = vld [vmem:[%s191 + $0xd0] sm:$0xff]
        %v252 = vld [vmem:[%s191 + $0xd8] sm:$0xff]
        %v253 = vld [vmem:[%s191 + $0xe0] sm:$0xff]
        %v254 = vld [vmem:[%s191 + $0xe8] sm:$0xff]
        %v255 = vld [vmem:[%s191 + $0xf0] sm:$0xff]
        %v256 = vld [vmem:[%s191 + $0xf8] sm:$0xff]
        %v257 = vmul.f32 %v193, %v193
        %v258 = vmul.f32 %v194, %v194
        %v259 = vmul.f32 %v195, %v195
        %v260 = vmul.f32 %v196, %v196
        %v261 = vmul.f32 %v197, %v197
        %v262 = vmul.f32 %v198, %v198
        %v263 = vmul.f32 %v199, %v199
        %v264 = vmul.f32 %v200, %v200
        %v265 = vmul.f32 %v201, %v201
        %v266 = vmul.f32 %v202, %v202
        %v267 = vmul.f32 %v203, %v203
        %v268 = vmul.f32 %v204, %v204
        %v269 = vmul.f32 %v205, %v205
        %v270 = vmul.f32 %v206, %v206
        %v271 = vmul.f32 %v207, %v207
        %v272 = vmul.f32 %v208, %v208
        %v273 = vmul.f32 %v209, %v209
        %v274 = vmul.f32 %v210, %v210
        %v275 = vmul.f32 %v211, %v211
        %v276 = vmul.f32 %v212, %v212
        %v277 = vmul.f32 %v213, %v213
        %v278 = vmul.f32 %v214, %v214
        %v279 = vmul.f32 %v215, %v215
        %v280 = vmul.f32 %v216, %v216
        %v281 = vmul.f32 %v217, %v217
        %v282 = vmul.f32 %v218, %v218
        %v283 = vmul.f32 %v219, %v219
        %v284 = vmul.f32 %v220, %v220
        %v285 = vmul.f32 %v221, %v221
        %v286 = vmul.f32 %v222, %v222
        %v287 = vmul.f32 %v223, %v223
        %v288 = vmul.f32 %v224, %v224
        %vm289 = vcmask 31744
        %v290 = vsel %vm289, %v257, 0.0
        %291 = vadd.xlane.f32.xlu0 %v290
        %v292 = vpop.xlane.xlu0 %291
        %v293 = vsel %vm289, %v258, 0.0
        %294 = vadd.xlane.f32.xlu0 %v293
        %v295 = vpop.xlane.xlu0 %294
        %v296 = vsel %vm289, %v259, 0.0
        %297 = vadd.xlane.f32.xlu0 %v296
        %v298 = vpop.xlane.xlu0 %297
        %v299 = vsel %vm289, %v260, 0.0
        %300 = vadd.xlane.f32.xlu0 %v299
        %v301 = vpop.xlane.xlu0 %300
        %v302 = vsel %vm289, %v261, 0.0
        %303 = vadd.xlane.f32.xlu0 %v302
        %v304 = vpop.xlane.xlu0 %303
        %v305 = vsel %vm289, %v262, 0.0
        %306 = vadd.xlane.f32.xlu0 %v305
        %v307 = vpop.xlane.xlu0 %306
        %v308 = vsel %vm289, %v263, 0.0
        %309 = vadd.xlane.f32.xlu0 %v308
        %v310 = vpop.xlane.xlu0 %309
        %v311 = vsel %vm289, %v264, 0.0
        %312 = vadd.xlane.f32.xlu0 %v311
        %v313 = vpop.xlane.xlu0 %312
        %v314 = vsel %vm289, %v265, 0.0
        %315 = vadd.xlane.f32.xlu0 %v314
        %v316 = vpop.xlane.xlu0 %315
        %v317 = vsel %vm289, %v266, 0.0
        %318 = vadd.xlane.f32.xlu0 %v317
        %v319 = vpop.xlane.xlu0 %318
        %v320 = vsel %vm289, %v267, 0.0
        %321 = vadd.xlane.f32.xlu0 %v320
        %v322 = vpop.xlane.xlu0 %321
        %v323 = vsel %vm289, %v268, 0.0
        %324 = vadd.xlane.f32.xlu0 %v323
        %v325 = vpop.xlane.xlu0 %324
        %v326 = vsel %vm289, %v269, 0.0
        %327 = vadd.xlane.f32.xlu0 %v326
        %v328 = vpop.xlane.xlu0 %327
        %v329 = vsel %vm289, %v270, 0.0
        %330 = vadd.xlane.f32.xlu0 %v329
        %v331 = vpop.xlane.xlu0 %330
        %v332 = vsel %vm289, %v271, 0.0
        %333 = vadd.xlane.f32.xlu0 %v332
        %v334 = vpop.xlane.xlu0 %333
        %v335 = vsel %vm289, %v272, 0.0
        %336 = vadd.xlane.f32.xlu0 %v335
        %v337 = vpop.xlane.xlu0 %336
        %v338 = vsel %vm289, %v273, 0.0
        %339 = vadd.xlane.f32.xlu0 %v338
        %v340 = vpop.xlane.xlu0 %339
        %v341 = vsel %vm289, %v274, 0.0
        %342 = vadd.xlane.f32.xlu0 %v341
        %v343 = vpop.xlane.xlu0 %342
        %v344 = vsel %vm289, %v275, 0.0
        %345 = vadd.xlane.f32.xlu0 %v344
        %v346 = vpop.xlane.xlu0 %345
        %v347 = vsel %vm289, %v276, 0.0
        %348 = vadd.xlane.f32.xlu0 %v347
        %v349 = vpop.xlane.xlu0 %348
        %v350 = vsel %vm289, %v277, 0.0
        %351 = vadd.xlane.f32.xlu0 %v350
        %v352 = vpop.xlane.xlu0 %351
        %v353 = vsel %vm289, %v278, 0.0
        %354 = vadd.xlane.f32.xlu0 %v353
        %v355 = vpop.xlane.xlu0 %354
        %v356 = vsel %vm289, %v279, 0.0
        %357 = vadd.xlane.f32.xlu0 %v356
        %v358 = vpop.xlane.xlu0 %357
        %v359 = vsel %vm289, %v280, 0.0
        %360 = vadd.xlane.f32.xlu0 %v359
        %v361 = vpop.xlane.xlu0 %360
        %v362 = vsel %vm289, %v281, 0.0
        %363 = vadd.xlane.f32.xlu0 %v362
        %v364 = vpop.xlane.xlu0 %363
        %v365 = vsel %vm289, %v282, 0.0
        %366 = vadd.xlane.f32.xlu0 %v365
        %v367 = vpop.xlane.xlu0 %366
        %v368 = vsel %vm289, %v283, 0.0
        %369 = vadd.xlane.f32.xlu0 %v368
        %v370 = vpop.xlane.xlu0 %369
        %v371 = vsel %vm289, %v284, 0.0
        %372 = vadd.xlane.f32.xlu0 %v371
        %v373 = vpop.xlane.xlu0 %372
        %v374 = vsel %vm289, %v285, 0.0
        %375 = vadd.xlane.f32.xlu0 %v374
        %v376 = vpop.xlane.xlu0 %375
        %v377 = vsel %vm289, %v286, 0.0
        %378 = vadd.xlane.f32.xlu0 %v377
        %v379 = vpop.xlane.xlu0 %378
        %v380 = vsel %vm289, %v287, 0.0
        %381 = vadd.xlane.f32.xlu0 %v380
        %v382 = vpop.xlane.xlu0 %381
        %v383 = vsel %vm289, %v288, 0.0
        %384 = vadd.xlane.f32.xlu0 %v383
        %v385 = vpop.xlane.xlu0 %384
        %v386 = vmax.f32 %v292, 1e-24
        %v387 = vmax.f32 %v295, 1e-24
        %v388 = vmax.f32 %v298, 1e-24
        %v389 = vmax.f32 %v301, 1e-24
        %v390 = vmax.f32 %v304, 1e-24
        %v391 = vmax.f32 %v307, 1e-24
        %v392 = vmax.f32 %v310, 1e-24
        %v393 = vmax.f32 %v313, 1e-24
        %v394 = vmax.f32 %v316, 1e-24
        %v395 = vmax.f32 %v319, 1e-24
        %v396 = vmax.f32 %v322, 1e-24
        %v397 = vmax.f32 %v325, 1e-24
        %v398 = vmax.f32 %v328, 1e-24
        %v399 = vmax.f32 %v331, 1e-24
        %v400 = vmax.f32 %v334, 1e-24
        %v401 = vmax.f32 %v337, 1e-24
        %v402 = vmax.f32 %v340, 1e-24
        %v403 = vmax.f32 %v343, 1e-24
        %v404 = vmax.f32 %v346, 1e-24
        %v405 = vmax.f32 %v349, 1e-24
        %v406 = vmax.f32 %v352, 1e-24
        %v407 = vmax.f32 %v355, 1e-24
        %v408 = vmax.f32 %v358, 1e-24
        %v409 = vmax.f32 %v361, 1e-24
        %v410 = vmax.f32 %v364, 1e-24
        %v411 = vmax.f32 %v367, 1e-24
        %v412 = vmax.f32 %v370, 1e-24
        %v413 = vmax.f32 %v373, 1e-24
        %v414 = vmax.f32 %v376, 1e-24
        %v415 = vmax.f32 %v379, 1e-24
        %v416 = vmax.f32 %v382, 1e-24
        %v417 = vmax.f32 %v385, 1e-24
        %v418 = vrsqrt.pop %v386
        %v419 = vmul.f32 %v418, %v386
        %v420 = vmul.f32 %v419, %v418
        %v421 = vmul.f32 0.5, %v420
        %v422 = vsub.f32 1.5, %v421
        %v423 = vmul.f32 %v418, %v422
        %vm424 = vweird.f32 %v386
        %vm425 = vweird.f32 %v418
        %vm426 = vmor %vm424, %vm425
        %v427 = vsel %vm426, %v418, %v423
        %v428 = vrsqrt.pop %v387
        %v429 = vmul.f32 %v428, %v387
        %v430 = vmul.f32 %v429, %v428
        %v431 = vmul.f32 0.5, %v430
        %v432 = vsub.f32 1.5, %v431
        %v433 = vmul.f32 %v428, %v432
        %vm434 = vweird.f32 %v387
        %vm435 = vweird.f32 %v428
        %vm436 = vmor %vm434, %vm435
        %v437 = vsel %vm436, %v428, %v433
        %v438 = vrsqrt.pop %v388
        %v439 = vmul.f32 %v438, %v388
        %v440 = vmul.f32 %v439, %v438
        %v441 = vmul.f32 0.5, %v440
        %v442 = vsub.f32 1.5, %v441
        %v443 = vmul.f32 %v438, %v442
        %vm444 = vweird.f32 %v388
        %vm445 = vweird.f32 %v438
        %vm446 = vmor %vm444, %vm445
        %v447 = vsel %vm446, %v438, %v443
        %v448 = vrsqrt.pop %v389
        %v449 = vmul.f32 %v448, %v389
        %v450 = vmul.f32 %v449, %v448
        %v451 = vmul.f32 0.5, %v450
        %v452 = vsub.f32 1.5, %v451
        %v453 = vmul.f32 %v448, %v452
        %vm454 = vweird.f32 %v389
        %vm455 = vweird.f32 %v448
        %vm456 = vmor %vm454, %vm455
        %v457 = vsel %vm456, %v448, %v453
        %v458 = vrsqrt.pop %v390
        %v459 = vmul.f32 %v458, %v390
        %v460 = vmul.f32 %v459, %v458
        %v461 = vmul.f32 0.5, %v460
        %v462 = vsub.f32 1.5, %v461
        %v463 = vmul.f32 %v458, %v462
        %vm464 = vweird.f32 %v390
        %vm465 = vweird.f32 %v458
        %vm466 = vmor %vm464, %vm465
        %v467 = vsel %vm466, %v458, %v463
        %v468 = vrsqrt.pop %v391
        %v469 = vmul.f32 %v468, %v391
        %v470 = vmul.f32 %v469, %v468
        %v471 = vmul.f32 0.5, %v470
        %v472 = vsub.f32 1.5, %v471
        %v473 = vmul.f32 %v468, %v472
        %vm474 = vweird.f32 %v391
        %vm475 = vweird.f32 %v468
        %vm476 = vmor %vm474, %vm475
        %v477 = vsel %vm476, %v468, %v473
        %v478 = vrsqrt.pop %v392
        %v479 = vmul.f32 %v478, %v392
        %v480 = vmul.f32 %v479, %v478
        %v481 = vmul.f32 0.5, %v480
        %v482 = vsub.f32 1.5, %v481
        %v483 = vmul.f32 %v478, %v482
        %vm484 = vweird.f32 %v392
        %vm485 = vweird.f32 %v478
        %vm486 = vmor %vm484, %vm485
        %v487 = vsel %vm486, %v478, %v483
        %v488 = vrsqrt.pop %v393
        %v489 = vmul.f32 %v488, %v393
        %v490 = vmul.f32 %v489, %v488
        %v491 = vmul.f32 0.5, %v490
        %v492 = vsub.f32 1.5, %v491
        %v493 = vmul.f32 %v488, %v492
        %vm494 = vweird.f32 %v393
        %vm495 = vweird.f32 %v488
        %vm496 = vmor %vm494, %vm495
        %v497 = vsel %vm496, %v488, %v493
        %v498 = vrsqrt.pop %v394
        %v499 = vmul.f32 %v498, %v394
        %v500 = vmul.f32 %v499, %v498
        %v501 = vmul.f32 0.5, %v500
        %v502 = vsub.f32 1.5, %v501
        %v503 = vmul.f32 %v498, %v502
        %vm504 = vweird.f32 %v394
        %vm505 = vweird.f32 %v498
        %vm506 = vmor %vm504, %vm505
        %v507 = vsel %vm506, %v498, %v503
        %v508 = vrsqrt.pop %v395
        %v509 = vmul.f32 %v508, %v395
        %v510 = vmul.f32 %v509, %v508
        %v511 = vmul.f32 0.5, %v510
        %v512 = vsub.f32 1.5, %v511
        %v513 = vmul.f32 %v508, %v512
        %vm514 = vweird.f32 %v395
        %vm515 = vweird.f32 %v508
        %vm516 = vmor %vm514, %vm515
        %v517 = vsel %vm516, %v508, %v513
        %v518 = vrsqrt.pop %v396
        %v519 = vmul.f32 %v518, %v396
        %v520 = vmul.f32 %v519, %v518
        %v521 = vmul.f32 0.5, %v520
        %v522 = vsub.f32 1.5, %v521
        %v523 = vmul.f32 %v518, %v522
        %vm524 = vweird.f32 %v396
        %vm525 = vweird.f32 %v518
        %vm526 = vmor %vm524, %vm525
        %v527 = vsel %vm526, %v518, %v523
        %v528 = vrsqrt.pop %v397
        %v529 = vmul.f32 %v528, %v397
        %v530 = vmul.f32 %v529, %v528
        %v531 = vmul.f32 0.5, %v530
        %v532 = vsub.f32 1.5, %v531
        %v533 = vmul.f32 %v528, %v532
        %vm534 = vweird.f32 %v397
        %vm535 = vweird.f32 %v528
        %vm536 = vmor %vm534, %vm535
        %v537 = vsel %vm536, %v528, %v533
        %v538 = vrsqrt.pop %v398
        %v539 = vmul.f32 %v538, %v398
        %v540 = vmul.f32 %v539, %v538
        %v541 = vmul.f32 0.5, %v540
        %v542 = vsub.f32 1.5, %v541
        %v543 = vmul.f32 %v538, %v542
        %vm544 = vweird.f32 %v398
        %vm545 = vweird.f32 %v538
        %vm546 = vmor %vm544, %vm545
        %v547 = vsel %vm546, %v538, %v543
        %v548 = vrsqrt.pop %v399
        %v549 = vmul.f32 %v548, %v399
        %v550 = vmul.f32 %v549, %v548
        %v551 = vmul.f32 0.5, %v550
        %v552 = vsub.f32 1.5, %v551
        %v553 = vmul.f32 %v548, %v552
        %vm554 = vweird.f32 %v399
        %vm555 = vweird.f32 %v548
        %vm556 = vmor %vm554, %vm555
        %v557 = vsel %vm556, %v548, %v553
        %v558 = vrsqrt.pop %v400
        %v559 = vmul.f32 %v558, %v400
        %v560 = vmul.f32 %v559, %v558
        %v561 = vmul.f32 0.5, %v560
        %v562 = vsub.f32 1.5, %v561
        %v563 = vmul.f32 %v558, %v562
        %vm564 = vweird.f32 %v400
        %vm565 = vweird.f32 %v558
        %vm566 = vmor %vm564, %vm565
        %v567 = vsel %vm566, %v558, %v563
        %v568 = vrsqrt.pop %v401
        %v569 = vmul.f32 %v568, %v401
        %v570 = vmul.f32 %v569, %v568
        %v571 = vmul.f32 0.5, %v570
        %v572 = vsub.f32 1.5, %v571
        %v573 = vmul.f32 %v568, %v572
        %vm574 = vweird.f32 %v401
        %vm575 = vweird.f32 %v568
        %vm576 = vmor %vm574, %vm575
        %v577 = vsel %vm576, %v568, %v573
        %v578 = vrsqrt.pop %v402
        %v579 = vmul.f32 %v578, %v402
        %v580 = vmul.f32 %v579, %v578
        %v581 = vmul.f32 0.5, %v580
        %v582 = vsub.f32 1.5, %v581
        %v583 = vmul.f32 %v578, %v582
        %vm584 = vweird.f32 %v402
        %vm585 = vweird.f32 %v578
        %vm586 = vmor %vm584, %vm585
        %v587 = vsel %vm586, %v578, %v583
        %v588 = vrsqrt.pop %v403
        %v589 = vmul.f32 %v588, %v403
        %v590 = vmul.f32 %v589, %v588
        %v591 = vmul.f32 0.5, %v590
        %v592 = vsub.f32 1.5, %v591
        %v593 = vmul.f32 %v588, %v592
        %vm594 = vweird.f32 %v403
        %vm595 = vweird.f32 %v588
        %vm596 = vmor %vm594, %vm595
        %v597 = vsel %vm596, %v588, %v593
        %v598 = vrsqrt.pop %v404
        %v599 = vmul.f32 %v598, %v404
        %v600 = vmul.f32 %v599, %v598
        %v601 = vmul.f32 0.5, %v600
        %v602 = vsub.f32 1.5, %v601
        %v603 = vmul.f32 %v598, %v602
        %vm604 = vweird.f32 %v404
        %vm605 = vweird.f32 %v598
        %vm606 = vmor %vm604, %vm605
        %v607 = vsel %vm606, %v598, %v603
        %v608 = vrsqrt.pop %v405
        %v609 = vmul.f32 %v608, %v405
        %v610 = vmul.f32 %v609, %v608
        %v611 = vmul.f32 0.5, %v610
        %v612 = vsub.f32 1.5, %v611
        %v613 = vmul.f32 %v608, %v612
        %vm614 = vweird.f32 %v405
        %vm615 = vweird.f32 %v608
        %vm616 = vmor %vm614, %vm615
        %v617 = vsel %vm616, %v608, %v613
        %v618 = vrsqrt.pop %v406
        %v619 = vmul.f32 %v618, %v406
        %v620 = vmul.f32 %v619, %v618
        %v621 = vmul.f32 0.5, %v620
        %v622 = vsub.f32 1.5, %v621
        %v623 = vmul.f32 %v618, %v622
        %vm624 = vweird.f32 %v406
        %vm625 = vweird.f32 %v618
        %vm626 = vmor %vm624, %vm625
        %v627 = vsel %vm626, %v618, %v623
        %v628 = vrsqrt.pop %v407
        %v629 = vmul.f32 %v628, %v407
        %v630 = vmul.f32 %v629, %v628
        %v631 = vmul.f32 0.5, %v630
        %v632 = vsub.f32 1.5, %v631
        %v633 = vmul.f32 %v628, %v632
        %vm634 = vweird.f32 %v407
        %vm635 = vweird.f32 %v628
        %vm636 = vmor %vm634, %vm635
        %v637 = vsel %vm636, %v628, %v633
        %v638 = vrsqrt.pop %v408
        %v639 = vmul.f32 %v638, %v408
        %v640 = vmul.f32 %v639, %v638
        %v641 = vmul.f32 0.5, %v640
        %v642 = vsub.f32 1.5, %v641
        %v643 = vmul.f32 %v638, %v642
        %vm644 = vweird.f32 %v408
        %vm645 = vweird.f32 %v638
        %vm646 = vmor %vm644, %vm645
        %v647 = vsel %vm646, %v638, %v643
        %v648 = vrsqrt.pop %v409
        %v649 = vmul.f32 %v648, %v409
        %v650 = vmul.f32 %v649, %v648
        %v651 = vmul.f32 0.5, %v650
        %v652 = vsub.f32 1.5, %v651
        %v653 = vmul.f32 %v648, %v652
        %vm654 = vweird.f32 %v409
        %vm655 = vweird.f32 %v648
        %vm656 = vmor %vm654, %vm655
        %v657 = vsel %vm656, %v648, %v653
        %v658 = vrsqrt.pop %v410
        %v659 = vmul.f32 %v658, %v410
        %v660 = vmul.f32 %v659, %v658
        %v661 = vmul.f32 0.5, %v660
        %v662 = vsub.f32 1.5, %v661
        %v663 = vmul.f32 %v658, %v662
        %vm664 = vweird.f32 %v410
        %vm665 = vweird.f32 %v658
        %vm666 = vmor %vm664, %vm665
        %v667 = vsel %vm666, %v658, %v663
        %v668 = vrsqrt.pop %v411
        %v669 = vmul.f32 %v668, %v411
        %v670 = vmul.f32 %v669, %v668
        %v671 = vmul.f32 0.5, %v670
        %v672 = vsub.f32 1.5, %v671
        %v673 = vmul.f32 %v668, %v672
        %vm674 = vweird.f32 %v411
        %vm675 = vweird.f32 %v668
        %vm676 = vmor %vm674, %vm675
        %v677 = vsel %vm676, %v668, %v673
        %v678 = vrsqrt.pop %v412
        %v679 = vmul.f32 %v678, %v412
        %v680 = vmul.f32 %v679, %v678
        %v681 = vmul.f32 0.5, %v680
        %v682 = vsub.f32 1.5, %v681
        %v683 = vmul.f32 %v678, %v682
        %vm684 = vweird.f32 %v412
        %vm685 = vweird.f32 %v678
        %vm686 = vmor %vm684, %vm685
        %v687 = vsel %vm686, %v678, %v683
        %v688 = vrsqrt.pop %v413
        %v689 = vmul.f32 %v688, %v413
        %v690 = vmul.f32 %v689, %v688
        %v691 = vmul.f32 0.5, %v690
        %v692 = vsub.f32 1.5, %v691
        %v693 = vmul.f32 %v688, %v692
        %vm694 = vweird.f32 %v413
        %vm695 = vweird.f32 %v688
        %vm696 = vmor %vm694, %vm695
        %v697 = vsel %vm696, %v688, %v693
        %v698 = vrsqrt.pop %v414
        %v699 = vmul.f32 %v698, %v414
        %v700 = vmul.f32 %v699, %v698
        %v701 = vmul.f32 0.5, %v700
        %v702 = vsub.f32 1.5, %v701
        %v703 = vmul.f32 %v698, %v702
        %vm704 = vweird.f32 %v414
        %vm705 = vweird.f32 %v698
        %vm706 = vmor %vm704, %vm705
        %v707 = vsel %vm706, %v698, %v703
        %v708 = vrsqrt.pop %v415
        %v709 = vmul.f32 %v708, %v415
        %v710 = vmul.f32 %v709, %v708
        %v711 = vmul.f32 0.5, %v710
        %v712 = vsub.f32 1.5, %v711
        %v713 = vmul.f32 %v708, %v712
        %vm714 = vweird.f32 %v415
        %vm715 = vweird.f32 %v708
        %vm716 = vmor %vm714, %vm715
        %v717 = vsel %vm716, %v708, %v713
        %v718 = vrsqrt.pop %v416
        %v719 = vmul.f32 %v718, %v416
        %v720 = vmul.f32 %v719, %v718
        %v721 = vmul.f32 0.5, %v720
        %v722 = vsub.f32 1.5, %v721
        %v723 = vmul.f32 %v718, %v722
        %vm724 = vweird.f32 %v416
        %vm725 = vweird.f32 %v718
        %vm726 = vmor %vm724, %vm725
        %v727 = vsel %vm726, %v718, %v723
        %v728 = vrsqrt.pop %v417
        %v729 = vmul.f32 %v728, %v417
        %v730 = vmul.f32 %v729, %v728
        %v731 = vmul.f32 0.5, %v730
        %v732 = vsub.f32 1.5, %v731
        %v733 = vmul.f32 %v728, %v732
        %vm734 = vweird.f32 %v417
        %vm735 = vweird.f32 %v728
        %vm736 = vmor %vm734, %vm735
        %v737 = vsel %vm736, %v728, %v733
        %v738 = vmul.f32 %v193, %v427
        %v739 = vmul.f32 %v194, %v437
        %v740 = vmul.f32 %v195, %v447
        %v741 = vmul.f32 %v196, %v457
        %v742 = vmul.f32 %v197, %v467
        %v743 = vmul.f32 %v198, %v477
        %v744 = vmul.f32 %v199, %v487
        %v745 = vmul.f32 %v200, %v497
        %v746 = vmul.f32 %v201, %v507
        %v747 = vmul.f32 %v202, %v517
        %v748 = vmul.f32 %v203, %v527
        %v749 = vmul.f32 %v204, %v537
        %v750 = vmul.f32 %v205, %v547
        %v751 = vmul.f32 %v206, %v557
        %v752 = vmul.f32 %v207, %v567
        %v753 = vmul.f32 %v208, %v577
        %v754 = vmul.f32 %v209, %v587
        %v755 = vmul.f32 %v210, %v597
        %v756 = vmul.f32 %v211, %v607
        %v757 = vmul.f32 %v212, %v617
        %v758 = vmul.f32 %v213, %v627
        %v759 = vmul.f32 %v214, %v637
        %v760 = vmul.f32 %v215, %v647
        %v761 = vmul.f32 %v216, %v657
        %v762 = vmul.f32 %v217, %v667
        %v763 = vmul.f32 %v218, %v677
        %v764 = vmul.f32 %v219, %v687
        %v765 = vmul.f32 %v220, %v697
        %v766 = vmul.f32 %v221, %v707
        %v767 = vmul.f32 %v222, %v717
        %v768 = vmul.f32 %v223, %v727
        %v769 = vmul.f32 %v224, %v737
        %v770 = vmul.f32 %v225, %v225
        %v771 = vmul.f32 %v226, %v226
        %v772 = vmul.f32 %v227, %v227
        %v773 = vmul.f32 %v228, %v228
        %v774 = vmul.f32 %v229, %v229
        %v775 = vmul.f32 %v230, %v230
        %v776 = vmul.f32 %v231, %v231
        %v777 = vmul.f32 %v232, %v232
        %v778 = vmul.f32 %v233, %v233
        %v779 = vmul.f32 %v234, %v234
        %v780 = vmul.f32 %v235, %v235
        %v781 = vmul.f32 %v236, %v236
        %v782 = vmul.f32 %v237, %v237
        %v783 = vmul.f32 %v238, %v238
        %v784 = vmul.f32 %v239, %v239
        %v785 = vmul.f32 %v240, %v240
        %v786 = vmul.f32 %v241, %v241
        %v787 = vmul.f32 %v242, %v242
        %v788 = vmul.f32 %v243, %v243
        %v789 = vmul.f32 %v244, %v244
        %v790 = vmul.f32 %v245, %v245
        %v791 = vmul.f32 %v246, %v246
        %v792 = vmul.f32 %v247, %v247
        %v793 = vmul.f32 %v248, %v248
        %v794 = vmul.f32 %v249, %v249
        %v795 = vmul.f32 %v250, %v250
        %v796 = vmul.f32 %v251, %v251
        %v797 = vmul.f32 %v252, %v252
        %v798 = vmul.f32 %v253, %v253
        %v799 = vmul.f32 %v254, %v254
        %v800 = vmul.f32 %v255, %v255
        %v801 = vmul.f32 %v256, %v256
        %v802 = vsel %vm289, %v770, 0.0
        %803 = vadd.xlane.f32.xlu0 %v802
        %v804 = vpop.xlane.xlu0 %803
        %v805 = vsel %vm289, %v771, 0.0
        %806 = vadd.xlane.f32.xlu0 %v805
        %v807 = vpop.xlane.xlu0 %806
        %v808 = vsel %vm289, %v772, 0.0
        %809 = vadd.xlane.f32.xlu0 %v808
        %v810 = vpop.xlane.xlu0 %809
        %v811 = vsel %vm289, %v773, 0.0
        %812 = vadd.xlane.f32.xlu0 %v811
        %v813 = vpop.xlane.xlu0 %812
        %v814 = vsel %vm289, %v774, 0.0
        %815 = vadd.xlane.f32.xlu0 %v814
        %v816 = vpop.xlane.xlu0 %815
        %v817 = vsel %vm289, %v775, 0.0
        %818 = vadd.xlane.f32.xlu0 %v817
        %v819 = vpop.xlane.xlu0 %818
        %v820 = vsel %vm289, %v776, 0.0
        %821 = vadd.xlane.f32.xlu0 %v820
        %v822 = vpop.xlane.xlu0 %821
        %v823 = vsel %vm289, %v777, 0.0
        %824 = vadd.xlane.f32.xlu0 %v823
        %v825 = vpop.xlane.xlu0 %824
        %v826 = vsel %vm289, %v778, 0.0
        %827 = vadd.xlane.f32.xlu0 %v826
        %v828 = vpop.xlane.xlu0 %827
        %v829 = vsel %vm289, %v779, 0.0
        %830 = vadd.xlane.f32.xlu0 %v829
        %v831 = vpop.xlane.xlu0 %830
        %v832 = vsel %vm289, %v780, 0.0
        %833 = vadd.xlane.f32.xlu0 %v832
        %v834 = vpop.xlane.xlu0 %833
        %v835 = vsel %vm289, %v781, 0.0
        %836 = vadd.xlane.f32.xlu0 %v835
        %v837 = vpop.xlane.xlu0 %836
        %v838 = vsel %vm289, %v782, 0.0
        %839 = vadd.xlane.f32.xlu0 %v838
        %v840 = vpop.xlane.xlu0 %839
        %v841 = vsel %vm289, %v783, 0.0
        %842 = vadd.xlane.f32.xlu0 %v841
        %v843 = vpop.xlane.xlu0 %842
        %v844 = vsel %vm289, %v784, 0.0
        %845 = vadd.xlane.f32.xlu0 %v844
        %v846 = vpop.xlane.xlu0 %845
        %v847 = vsel %vm289, %v785, 0.0
        %848 = vadd.xlane.f32.xlu0 %v847
        %v849 = vpop.xlane.xlu0 %848
        %v850 = vsel %vm289, %v786, 0.0
        %851 = vadd.xlane.f32.xlu0 %v850
        %v852 = vpop.xlane.xlu0 %851
        %v853 = vsel %vm289, %v787, 0.0
        %854 = vadd.xlane.f32.xlu0 %v853
        %v855 = vpop.xlane.xlu0 %854
        %v856 = vsel %vm289, %v788, 0.0
        %857 = vadd.xlane.f32.xlu0 %v856
        %v858 = vpop.xlane.xlu0 %857
        %v859 = vsel %vm289, %v789, 0.0
        %860 = vadd.xlane.f32.xlu0 %v859
        %v861 = vpop.xlane.xlu0 %860
        %v862 = vsel %vm289, %v790, 0.0
        %863 = vadd.xlane.f32.xlu0 %v862
        %v864 = vpop.xlane.xlu0 %863
        %v865 = vsel %vm289, %v791, 0.0
        %866 = vadd.xlane.f32.xlu0 %v865
        %v867 = vpop.xlane.xlu0 %866
        %v868 = vsel %vm289, %v792, 0.0
        %869 = vadd.xlane.f32.xlu0 %v868
        %v870 = vpop.xlane.xlu0 %869
        %v871 = vsel %vm289, %v793, 0.0
        %872 = vadd.xlane.f32.xlu0 %v871
        %v873 = vpop.xlane.xlu0 %872
        %v874 = vsel %vm289, %v794, 0.0
        %875 = vadd.xlane.f32.xlu0 %v874
        %v876 = vpop.xlane.xlu0 %875
        %v877 = vsel %vm289, %v795, 0.0
        %878 = vadd.xlane.f32.xlu0 %v877
        %v879 = vpop.xlane.xlu0 %878
        %v880 = vsel %vm289, %v796, 0.0
        %881 = vadd.xlane.f32.xlu0 %v880
        %v882 = vpop.xlane.xlu0 %881
        %v883 = vsel %vm289, %v797, 0.0
        %884 = vadd.xlane.f32.xlu0 %v883
        %v885 = vpop.xlane.xlu0 %884
        %v886 = vsel %vm289, %v798, 0.0
        %887 = vadd.xlane.f32.xlu0 %v886
        %v888 = vpop.xlane.xlu0 %887
        %v889 = vsel %vm289, %v799, 0.0
        %890 = vadd.xlane.f32.xlu0 %v889
        %v891 = vpop.xlane.xlu0 %890
        %v892 = vsel %vm289, %v800, 0.0
        %893 = vadd.xlane.f32.xlu0 %v892
        %v894 = vpop.xlane.xlu0 %893
        %v895 = vsel %vm289, %v801, 0.0
        %896 = vadd.xlane.f32.xlu0 %v895
        %v897 = vpop.xlane.xlu0 %896
        %v898 = vmax.f32 %v804, 1e-24
        %v899 = vmax.f32 %v807, 1e-24
        %v900 = vmax.f32 %v810, 1e-24
        %v901 = vmax.f32 %v813, 1e-24
        %v902 = vmax.f32 %v816, 1e-24
        %v903 = vmax.f32 %v819, 1e-24
        %v904 = vmax.f32 %v822, 1e-24
        %v905 = vmax.f32 %v825, 1e-24
        %v906 = vmax.f32 %v828, 1e-24
        %v907 = vmax.f32 %v831, 1e-24
        %v908 = vmax.f32 %v834, 1e-24
        %v909 = vmax.f32 %v837, 1e-24
        %v910 = vmax.f32 %v840, 1e-24
        %v911 = vmax.f32 %v843, 1e-24
        %v912 = vmax.f32 %v846, 1e-24
        %v913 = vmax.f32 %v849, 1e-24
        %v914 = vmax.f32 %v852, 1e-24
        %v915 = vmax.f32 %v855, 1e-24
        %v916 = vmax.f32 %v858, 1e-24
        %v917 = vmax.f32 %v861, 1e-24
        %v918 = vmax.f32 %v864, 1e-24
        %v919 = vmax.f32 %v867, 1e-24
        %v920 = vmax.f32 %v870, 1e-24
        %v921 = vmax.f32 %v873, 1e-24
        %v922 = vmax.f32 %v876, 1e-24
        %v923 = vmax.f32 %v879, 1e-24
        %v924 = vmax.f32 %v882, 1e-24
        %v925 = vmax.f32 %v885, 1e-24
        %v926 = vmax.f32 %v888, 1e-24
        %v927 = vmax.f32 %v891, 1e-24
        %v928 = vmax.f32 %v894, 1e-24
        %v929 = vmax.f32 %v897, 1e-24
        %v930 = vrsqrt.pop %v898
        %v931 = vmul.f32 %v930, %v898
        %v932 = vmul.f32 %v931, %v930
        %v933 = vmul.f32 0.5, %v932
        %v934 = vsub.f32 1.5, %v933
        %v935 = vmul.f32 %v930, %v934
        %vm936 = vweird.f32 %v898
        %vm937 = vweird.f32 %v930
        %vm938 = vmor %vm936, %vm937
        %v939 = vsel %vm938, %v930, %v935
        %v940 = vrsqrt.pop %v899
        %v941 = vmul.f32 %v940, %v899
        %v942 = vmul.f32 %v941, %v940
        %v943 = vmul.f32 0.5, %v942
        %v944 = vsub.f32 1.5, %v943
        %v945 = vmul.f32 %v940, %v944
        %vm946 = vweird.f32 %v899
        %vm947 = vweird.f32 %v940
        %vm948 = vmor %vm946, %vm947
        %v949 = vsel %vm948, %v940, %v945
        %v950 = vrsqrt.pop %v900
        %v951 = vmul.f32 %v950, %v900
        %v952 = vmul.f32 %v951, %v950
        %v953 = vmul.f32 0.5, %v952
        %v954 = vsub.f32 1.5, %v953
        %v955 = vmul.f32 %v950, %v954
        %vm956 = vweird.f32 %v900
        %vm957 = vweird.f32 %v950
        %vm958 = vmor %vm956, %vm957
        %v959 = vsel %vm958, %v950, %v955
        %v960 = vrsqrt.pop %v901
        %v961 = vmul.f32 %v960, %v901
        %v962 = vmul.f32 %v961, %v960
        %v963 = vmul.f32 0.5, %v962
        %v964 = vsub.f32 1.5, %v963
        %v965 = vmul.f32 %v960, %v964
        %vm966 = vweird.f32 %v901
        %vm967 = vweird.f32 %v960
        %vm968 = vmor %vm966, %vm967
        %v969 = vsel %vm968, %v960, %v965
        %v970 = vrsqrt.pop %v902
        %v971 = vmul.f32 %v970, %v902
        %v972 = vmul.f32 %v971, %v970
        %v973 = vmul.f32 0.5, %v972
        %v974 = vsub.f32 1.5, %v973
        %v975 = vmul.f32 %v970, %v974
        %vm976 = vweird.f32 %v902
        %vm977 = vweird.f32 %v970
        %vm978 = vmor %vm976, %vm977
        %v979 = vsel %vm978, %v970, %v975
        %v980 = vrsqrt.pop %v903
        %v981 = vmul.f32 %v980, %v903
        %v982 = vmul.f32 %v981, %v980
        %v983 = vmul.f32 0.5, %v982
        %v984 = vsub.f32 1.5, %v983
        %v985 = vmul.f32 %v980, %v984
        %vm986 = vweird.f32 %v903
        %vm987 = vweird.f32 %v980
        %vm988 = vmor %vm986, %vm987
        %v989 = vsel %vm988, %v980, %v985
        %v990 = vrsqrt.pop %v904
        %v991 = vmul.f32 %v990, %v904
        %v992 = vmul.f32 %v991, %v990
        %v993 = vmul.f32 0.5, %v992
        %v994 = vsub.f32 1.5, %v993
        %v995 = vmul.f32 %v990, %v994
        %vm996 = vweird.f32 %v904
        %vm997 = vweird.f32 %v990
        %vm998 = vmor %vm996, %vm997
        %v999 = vsel %vm998, %v990, %v995
        %v1000 = vrsqrt.pop %v905
        %v1001 = vmul.f32 %v1000, %v905
        %v1002 = vmul.f32 %v1001, %v1000
        %v1003 = vmul.f32 0.5, %v1002
        %v1004 = vsub.f32 1.5, %v1003
        %v1005 = vmul.f32 %v1000, %v1004
        %vm1006 = vweird.f32 %v905
        %vm1007 = vweird.f32 %v1000
        %vm1008 = vmor %vm1006, %vm1007
        %v1009 = vsel %vm1008, %v1000, %v1005
        %v1010 = vrsqrt.pop %v906
        %v1011 = vmul.f32 %v1010, %v906
        %v1012 = vmul.f32 %v1011, %v1010
        %v1013 = vmul.f32 0.5, %v1012
        %v1014 = vsub.f32 1.5, %v1013
        %v1015 = vmul.f32 %v1010, %v1014
        %vm1016 = vweird.f32 %v906
        %vm1017 = vweird.f32 %v1010
        %vm1018 = vmor %vm1016, %vm1017
        %v1019 = vsel %vm1018, %v1010, %v1015
        %v1020 = vrsqrt.pop %v907
        %v1021 = vmul.f32 %v1020, %v907
        %v1022 = vmul.f32 %v1021, %v1020
        %v1023 = vmul.f32 0.5, %v1022
        %v1024 = vsub.f32 1.5, %v1023
        %v1025 = vmul.f32 %v1020, %v1024
        %vm1026 = vweird.f32 %v907
        %vm1027 = vweird.f32 %v1020
        %vm1028 = vmor %vm1026, %vm1027
        %v1029 = vsel %vm1028, %v1020, %v1025
        %v1030 = vrsqrt.pop %v908
        %v1031 = vmul.f32 %v1030, %v908
        %v1032 = vmul.f32 %v1031, %v1030
        %v1033 = vmul.f32 0.5, %v1032
        %v1034 = vsub.f32 1.5, %v1033
        %v1035 = vmul.f32 %v1030, %v1034
        %vm1036 = vweird.f32 %v908
        %vm1037 = vweird.f32 %v1030
        %vm1038 = vmor %vm1036, %vm1037
        %v1039 = vsel %vm1038, %v1030, %v1035
        %v1040 = vrsqrt.pop %v909
        %v1041 = vmul.f32 %v1040, %v909
        %v1042 = vmul.f32 %v1041, %v1040
        %v1043 = vmul.f32 0.5, %v1042
        %v1044 = vsub.f32 1.5, %v1043
        %v1045 = vmul.f32 %v1040, %v1044
        %vm1046 = vweird.f32 %v909
        %vm1047 = vweird.f32 %v1040
        %vm1048 = vmor %vm1046, %vm1047
        %v1049 = vsel %vm1048, %v1040, %v1045
        %v1050 = vrsqrt.pop %v910
        %v1051 = vmul.f32 %v1050, %v910
        %v1052 = vmul.f32 %v1051, %v1050
        %v1053 = vmul.f32 0.5, %v1052
        %v1054 = vsub.f32 1.5, %v1053
        %v1055 = vmul.f32 %v1050, %v1054
        %vm1056 = vweird.f32 %v910
        %vm1057 = vweird.f32 %v1050
        %vm1058 = vmor %vm1056, %vm1057
        %v1059 = vsel %vm1058, %v1050, %v1055
        %v1060 = vrsqrt.pop %v911
        %v1061 = vmul.f32 %v1060, %v911
        %v1062 = vmul.f32 %v1061, %v1060
        %v1063 = vmul.f32 0.5, %v1062
        %v1064 = vsub.f32 1.5, %v1063
        %v1065 = vmul.f32 %v1060, %v1064
        %vm1066 = vweird.f32 %v911
        %vm1067 = vweird.f32 %v1060
        %vm1068 = vmor %vm1066, %vm1067
        %v1069 = vsel %vm1068, %v1060, %v1065
        %v1070 = vrsqrt.pop %v912
        %v1071 = vmul.f32 %v1070, %v912
        %v1072 = vmul.f32 %v1071, %v1070
        %v1073 = vmul.f32 0.5, %v1072
        %v1074 = vsub.f32 1.5, %v1073
        %v1075 = vmul.f32 %v1070, %v1074
        %vm1076 = vweird.f32 %v912
        %vm1077 = vweird.f32 %v1070
        %vm1078 = vmor %vm1076, %vm1077
        %v1079 = vsel %vm1078, %v1070, %v1075
        %v1080 = vrsqrt.pop %v913
        %v1081 = vmul.f32 %v1080, %v913
        %v1082 = vmul.f32 %v1081, %v1080
        %v1083 = vmul.f32 0.5, %v1082
        %v1084 = vsub.f32 1.5, %v1083
        %v1085 = vmul.f32 %v1080, %v1084
        %vm1086 = vweird.f32 %v913
        %vm1087 = vweird.f32 %v1080
        %vm1088 = vmor %vm1086, %vm1087
        %v1089 = vsel %vm1088, %v1080, %v1085
        %v1090 = vrsqrt.pop %v914
        %v1091 = vmul.f32 %v1090, %v914
        %v1092 = vmul.f32 %v1091, %v1090
        %v1093 = vmul.f32 0.5, %v1092
        %v1094 = vsub.f32 1.5, %v1093
        %v1095 = vmul.f32 %v1090, %v1094
        %vm1096 = vweird.f32 %v914
        %vm1097 = vweird.f32 %v1090
        %vm1098 = vmor %vm1096, %vm1097
        %v1099 = vsel %vm1098, %v1090, %v1095
        %v1100 = vrsqrt.pop %v915
        %v1101 = vmul.f32 %v1100, %v915
        %v1102 = vmul.f32 %v1101, %v1100
        %v1103 = vmul.f32 0.5, %v1102
        %v1104 = vsub.f32 1.5, %v1103
        %v1105 = vmul.f32 %v1100, %v1104
        %vm1106 = vweird.f32 %v915
        %vm1107 = vweird.f32 %v1100
        %vm1108 = vmor %vm1106, %vm1107
        %v1109 = vsel %vm1108, %v1100, %v1105
        %v1110 = vrsqrt.pop %v916
        %v1111 = vmul.f32 %v1110, %v916
        %v1112 = vmul.f32 %v1111, %v1110
        %v1113 = vmul.f32 0.5, %v1112
        %v1114 = vsub.f32 1.5, %v1113
        %v1115 = vmul.f32 %v1110, %v1114
        %vm1116 = vweird.f32 %v916
        %vm1117 = vweird.f32 %v1110
        %vm1118 = vmor %vm1116, %vm1117
        %v1119 = vsel %vm1118, %v1110, %v1115
        %v1120 = vrsqrt.pop %v917
        %v1121 = vmul.f32 %v1120, %v917
        %v1122 = vmul.f32 %v1121, %v1120
        %v1123 = vmul.f32 0.5, %v1122
        %v1124 = vsub.f32 1.5, %v1123
        %v1125 = vmul.f32 %v1120, %v1124
        %vm1126 = vweird.f32 %v917
        %vm1127 = vweird.f32 %v1120
        %vm1128 = vmor %vm1126, %vm1127
        %v1129 = vsel %vm1128, %v1120, %v1125
        %v1130 = vrsqrt.pop %v918
        %v1131 = vmul.f32 %v1130, %v918
        %v1132 = vmul.f32 %v1131, %v1130
        %v1133 = vmul.f32 0.5, %v1132
        %v1134 = vsub.f32 1.5, %v1133
        %v1135 = vmul.f32 %v1130, %v1134
        %vm1136 = vweird.f32 %v918
        %vm1137 = vweird.f32 %v1130
        %vm1138 = vmor %vm1136, %vm1137
        %v1139 = vsel %vm1138, %v1130, %v1135
        %v1140 = vrsqrt.pop %v919
        %v1141 = vmul.f32 %v1140, %v919
        %v1142 = vmul.f32 %v1141, %v1140
        %v1143 = vmul.f32 0.5, %v1142
        %v1144 = vsub.f32 1.5, %v1143
        %v1145 = vmul.f32 %v1140, %v1144
        %vm1146 = vweird.f32 %v919
        %vm1147 = vweird.f32 %v1140
        %vm1148 = vmor %vm1146, %vm1147
        %v1149 = vsel %vm1148, %v1140, %v1145
        %v1150 = vrsqrt.pop %v920
        %v1151 = vmul.f32 %v1150, %v920
        %v1152 = vmul.f32 %v1151, %v1150
        %v1153 = vmul.f32 0.5, %v1152
        %v1154 = vsub.f32 1.5, %v1153
        %v1155 = vmul.f32 %v1150, %v1154
        %vm1156 = vweird.f32 %v920
        %vm1157 = vweird.f32 %v1150
        %vm1158 = vmor %vm1156, %vm1157
        %v1159 = vsel %vm1158, %v1150, %v1155
        %v1160 = vrsqrt.pop %v921
        %v1161 = vmul.f32 %v1160, %v921
        %v1162 = vmul.f32 %v1161, %v1160
        %v1163 = vmul.f32 0.5, %v1162
        %v1164 = vsub.f32 1.5, %v1163
        %v1165 = vmul.f32 %v1160, %v1164
        %vm1166 = vweird.f32 %v921
        %vm1167 = vweird.f32 %v1160
        %vm1168 = vmor %vm1166, %vm1167
        %v1169 = vsel %vm1168, %v1160, %v1165
        %v1170 = vrsqrt.pop %v922
        %v1171 = vmul.f32 %v1170, %v922
        %v1172 = vmul.f32 %v1171, %v1170
        %v1173 = vmul.f32 0.5, %v1172
        %v1174 = vsub.f32 1.5, %v1173
        %v1175 = vmul.f32 %v1170, %v1174
        %vm1176 = vweird.f32 %v922
        %vm1177 = vweird.f32 %v1170
        %vm1178 = vmor %vm1176, %vm1177
        %v1179 = vsel %vm1178, %v1170, %v1175
        %v1180 = vrsqrt.pop %v923
        %v1181 = vmul.f32 %v1180, %v923
        %v1182 = vmul.f32 %v1181, %v1180
        %v1183 = vmul.f32 0.5, %v1182
        %v1184 = vsub.f32 1.5, %v1183
        %v1185 = vmul.f32 %v1180, %v1184
        %vm1186 = vweird.f32 %v923
        %vm1187 = vweird.f32 %v1180
        %vm1188 = vmor %vm1186, %vm1187
        %v1189 = vsel %vm1188, %v1180, %v1185
        %v1190 = vrsqrt.pop %v924
        %v1191 = vmul.f32 %v1190, %v924
        %v1192 = vmul.f32 %v1191, %v1190
        %v1193 = vmul.f32 0.5, %v1192
        %v1194 = vsub.f32 1.5, %v1193
        %v1195 = vmul.f32 %v1190, %v1194
        %vm1196 = vweird.f32 %v924
        %vm1197 = vweird.f32 %v1190
        %vm1198 = vmor %vm1196, %vm1197
        %v1199 = vsel %vm1198, %v1190, %v1195
        %v1200 = vrsqrt.pop %v925
        %v1201 = vmul.f32 %v1200, %v925
        %v1202 = vmul.f32 %v1201, %v1200
        %v1203 = vmul.f32 0.5, %v1202
        %v1204 = vsub.f32 1.5, %v1203
        %v1205 = vmul.f32 %v1200, %v1204
        %vm1206 = vweird.f32 %v925
        %vm1207 = vweird.f32 %v1200
        %vm1208 = vmor %vm1206, %vm1207
        %v1209 = vsel %vm1208, %v1200, %v1205
        %v1210 = vrsqrt.pop %v926
        %v1211 = vmul.f32 %v1210, %v926
        %v1212 = vmul.f32 %v1211, %v1210
        %v1213 = vmul.f32 0.5, %v1212
        %v1214 = vsub.f32 1.5, %v1213
        %v1215 = vmul.f32 %v1210, %v1214
        %vm1216 = vweird.f32 %v926
        %vm1217 = vweird.f32 %v1210
        %vm1218 = vmor %vm1216, %vm1217
        %v1219 = vsel %vm1218, %v1210, %v1215
        %v1220 = vrsqrt.pop %v927
        %v1221 = vmul.f32 %v1220, %v927
        %v1222 = vmul.f32 %v1221, %v1220
        %v1223 = vmul.f32 0.5, %v1222
        %v1224 = vsub.f32 1.5, %v1223
        %v1225 = vmul.f32 %v1220, %v1224
        %vm1226 = vweird.f32 %v927
        %vm1227 = vweird.f32 %v1220
        %vm1228 = vmor %vm1226, %vm1227
        %v1229 = vsel %vm1228, %v1220, %v1225
        %v1230 = vrsqrt.pop %v928
        %v1231 = vmul.f32 %v1230, %v928
        %v1232 = vmul.f32 %v1231, %v1230
        %v1233 = vmul.f32 0.5, %v1232
        %v1234 = vsub.f32 1.5, %v1233
        %v1235 = vmul.f32 %v1230, %v1234
        %vm1236 = vweird.f32 %v928
        %vm1237 = vweird.f32 %v1230
        %vm1238 = vmor %vm1236, %vm1237
        %v1239 = vsel %vm1238, %v1230, %v1235
        %v1240 = vrsqrt.pop %v929
        %v1241 = vmul.f32 %v1240, %v929
        %v1242 = vmul.f32 %v1241, %v1240
        %v1243 = vmul.f32 0.5, %v1242
        %v1244 = vsub.f32 1.5, %v1243
        %v1245 = vmul.f32 %v1240, %v1244
        %vm1246 = vweird.f32 %v929
        %vm1247 = vweird.f32 %v1240
        %vm1248 = vmor %vm1246, %vm1247
        %v1249 = vsel %vm1248, %v1240, %v1245
        %v1250 = vmul.f32 %v225, %v939
        %v1251 = vmul.f32 %v226, %v949
        %v1252 = vmul.f32 %v227, %v959
        %v1253 = vmul.f32 %v228, %v969
        %v1254 = vmul.f32 %v229, %v979
        %v1255 = vmul.f32 %v230, %v989
        %v1256 = vmul.f32 %v231, %v999
        %v1257 = vmul.f32 %v232, %v1009
        %v1258 = vmul.f32 %v233, %v1019
        %v1259 = vmul.f32 %v234, %v1029
        %v1260 = vmul.f32 %v235, %v1039
        %v1261 = vmul.f32 %v236, %v1049
        %v1262 = vmul.f32 %v237, %v1059
        %v1263 = vmul.f32 %v238, %v1069
        %v1264 = vmul.f32 %v239, %v1079
        %v1265 = vmul.f32 %v240, %v1089
        %v1266 = vmul.f32 %v241, %v1099
        %v1267 = vmul.f32 %v242, %v1109
        %v1268 = vmul.f32 %v243, %v1119
        %v1269 = vmul.f32 %v244, %v1129
        %v1270 = vmul.f32 %v245, %v1139
        %v1271 = vmul.f32 %v246, %v1149
        %v1272 = vmul.f32 %v247, %v1159
        %v1273 = vmul.f32 %v248, %v1169
        %v1274 = vmul.f32 %v249, %v1179
        %v1275 = vmul.f32 %v250, %v1189
        %v1276 = vmul.f32 %v251, %v1199
        %v1277 = vmul.f32 %v252, %v1209
        %v1278 = vmul.f32 %v253, %v1219
        %v1279 = vmul.f32 %v254, %v1229
        %v1280 = vmul.f32 %v255, %v1239
        %v1281 = vmul.f32 %v256, %v1249
        %v1282 = vmul.f32 %v1250, %v1250
        %v1283 = vmul.f32 %v1251, %v1251
        %v1284 = vmul.f32 %v1252, %v1252
        %v1285 = vmul.f32 %v1253, %v1253
        %v1286 = vmul.f32 %v1254, %v1254
        %v1287 = vmul.f32 %v1255, %v1255
        %v1288 = vmul.f32 %v1256, %v1256
        %v1289 = vmul.f32 %v1257, %v1257
        %v1290 = vmul.f32 %v1258, %v1258
        %v1291 = vmul.f32 %v1259, %v1259
        %v1292 = vmul.f32 %v1260, %v1260
        %v1293 = vmul.f32 %v1261, %v1261
        %v1294 = vmul.f32 %v1262, %v1262
        %v1295 = vmul.f32 %v1263, %v1263
        %v1296 = vmul.f32 %v1264, %v1264
        %v1297 = vmul.f32 %v1265, %v1265
        %v1298 = vmul.f32 %v1266, %v1266
        %v1299 = vmul.f32 %v1267, %v1267
        %v1300 = vmul.f32 %v1268, %v1268
        %v1301 = vmul.f32 %v1269, %v1269
        %v1302 = vmul.f32 %v1270, %v1270
        %v1303 = vmul.f32 %v1271, %v1271
        %v1304 = vmul.f32 %v1272, %v1272
        %v1305 = vmul.f32 %v1273, %v1273
        %v1306 = vmul.f32 %v1274, %v1274
        %v1307 = vmul.f32 %v1275, %v1275
        %v1308 = vmul.f32 %v1276, %v1276
        %v1309 = vmul.f32 %v1277, %v1277
        %v1310 = vmul.f32 %v1278, %v1278
        %v1311 = vmul.f32 %v1279, %v1279
        %v1312 = vmul.f32 %v1280, %v1280
        %v1313 = vmul.f32 %v1281, %v1281
        %v1314 = vsel %vm289, %v1282, 0.0
        %1315 = vadd.xlane.f32.xlu0 %v1314
        %v1316 = vpop.xlane.xlu0 %1315
        %v1317 = vsel %vm289, %v1283, 0.0
        %1318 = vadd.xlane.f32.xlu0 %v1317
        %v1319 = vpop.xlane.xlu0 %1318
        %v1320 = vsel %vm289, %v1284, 0.0
        %1321 = vadd.xlane.f32.xlu0 %v1320
        %v1322 = vpop.xlane.xlu0 %1321
        %v1323 = vsel %vm289, %v1285, 0.0
        %1324 = vadd.xlane.f32.xlu0 %v1323
        %v1325 = vpop.xlane.xlu0 %1324
        %v1326 = vsel %vm289, %v1286, 0.0
        %1327 = vadd.xlane.f32.xlu0 %v1326
        %v1328 = vpop.xlane.xlu0 %1327
        %v1329 = vsel %vm289, %v1287, 0.0
        %1330 = vadd.xlane.f32.xlu0 %v1329
        %v1331 = vpop.xlane.xlu0 %1330
        %v1332 = vsel %vm289, %v1288, 0.0
        %1333 = vadd.xlane.f32.xlu0 %v1332
        %v1334 = vpop.xlane.xlu0 %1333
        %v1335 = vsel %vm289, %v1289, 0.0
        %1336 = vadd.xlane.f32.xlu0 %v1335
        %v1337 = vpop.xlane.xlu0 %1336
        %v1338 = vsel %vm289, %v1290, 0.0
        %1339 = vadd.xlane.f32.xlu0 %v1338
        %v1340 = vpop.xlane.xlu0 %1339
        %v1341 = vsel %vm289, %v1291, 0.0
        %1342 = vadd.xlane.f32.xlu0 %v1341
        %v1343 = vpop.xlane.xlu0 %1342
        %v1344 = vsel %vm289, %v1292, 0.0
        %1345 = vadd.xlane.f32.xlu0 %v1344
        %v1346 = vpop.xlane.xlu0 %1345
        %v1347 = vsel %vm289, %v1293, 0.0
        %1348 = vadd.xlane.f32.xlu0 %v1347
        %v1349 = vpop.xlane.xlu0 %1348
        %v1350 = vsel %vm289, %v1294, 0.0
        %1351 = vadd.xlane.f32.xlu0 %v1350
        %v1352 = vpop.xlane.xlu0 %1351
        %v1353 = vsel %vm289, %v1295, 0.0
        %1354 = vadd.xlane.f32.xlu0 %v1353
        %v1355 = vpop.xlane.xlu0 %1354
        %v1356 = vsel %vm289, %v1296, 0.0
        %1357 = vadd.xlane.f32.xlu0 %v1356
        %v1358 = vpop.xlane.xlu0 %1357
        %v1359 = vsel %vm289, %v1297, 0.0
        %1360 = vadd.xlane.f32.xlu0 %v1359
        %v1361 = vpop.xlane.xlu0 %1360
        %v1362 = vsel %vm289, %v1298, 0.0
        %1363 = vadd.xlane.f32.xlu0 %v1362
        %v1364 = vpop.xlane.xlu0 %1363
        %v1365 = vsel %vm289, %v1299, 0.0
        %1366 = vadd.xlane.f32.xlu0 %v1365
        %v1367 = vpop.xlane.xlu0 %1366
        %v1368 = vsel %vm289, %v1300, 0.0
        %1369 = vadd.xlane.f32.xlu0 %v1368
        %v1370 = vpop.xlane.xlu0 %1369
        %v1371 = vsel %vm289, %v1301, 0.0
        %1372 = vadd.xlane.f32.xlu0 %v1371
        %v1373 = vpop.xlane.xlu0 %1372
        %v1374 = vsel %vm289, %v1302, 0.0
        %1375 = vadd.xlane.f32.xlu0 %v1374
        %v1376 = vpop.xlane.xlu0 %1375
        %v1377 = vsel %vm289, %v1303, 0.0
        %1378 = vadd.xlane.f32.xlu0 %v1377
        %v1379 = vpop.xlane.xlu0 %1378
        %v1380 = vsel %vm289, %v1304, 0.0
        %1381 = vadd.xlane.f32.xlu0 %v1380
        %v1382 = vpop.xlane.xlu0 %1381
        %v1383 = vsel %vm289, %v1305, 0.0
        %1384 = vadd.xlane.f32.xlu0 %v1383
        %v1385 = vpop.xlane.xlu0 %1384
        %v1386 = vsel %vm289, %v1306, 0.0
        %1387 = vadd.xlane.f32.xlu0 %v1386
        %v1388 = vpop.xlane.xlu0 %1387
        %v1389 = vsel %vm289, %v1307, 0.0
        %1390 = vadd.xlane.f32.xlu0 %v1389
        %v1391 = vpop.xlane.xlu0 %1390
        %v1392 = vsel %vm289, %v1308, 0.0
        %1393 = vadd.xlane.f32.xlu0 %v1392
        %v1394 = vpop.xlane.xlu0 %1393
        %v1395 = vsel %vm289, %v1309, 0.0
        %1396 = vadd.xlane.f32.xlu0 %v1395
        %v1397 = vpop.xlane.xlu0 %1396
        %v1398 = vsel %vm289, %v1310, 0.0
        %1399 = vadd.xlane.f32.xlu0 %v1398
        %v1400 = vpop.xlane.xlu0 %1399
        %v1401 = vsel %vm289, %v1311, 0.0
        %1402 = vadd.xlane.f32.xlu0 %v1401
        %v1403 = vpop.xlane.xlu0 %1402
        %v1404 = vsel %vm289, %v1312, 0.0
        %1405 = vadd.xlane.f32.xlu0 %v1404
        %v1406 = vpop.xlane.xlu0 %1405
        %v1407 = vsel %vm289, %v1313, 0.0
        %1408 = vadd.xlane.f32.xlu0 %v1407
        %v1409 = vpop.xlane.xlu0 %1408
        %v1411 = vsel %vm289, %v738, 0
        %v1414 = vsel %vm289, %v739, 0
        %v1417 = vsel %vm289, %v740, 0
        %v1420 = vsel %vm289, %v741, 0
        %v1423 = vsel %vm289, %v742, 0
        %v1426 = vsel %vm289, %v743, 0
        %v1429 = vsel %vm289, %v744, 0
        %v1432 = vsel %vm289, %v745, 0
        %v1435 = vsel %vm289, %v746, 0
        %v1438 = vsel %vm289, %v747, 0
        %v1441 = vsel %vm289, %v748, 0
        %v1444 = vsel %vm289, %v749, 0
        %v1447 = vsel %vm289, %v750, 0
        %v1450 = vsel %vm289, %v751, 0
        %v1453 = vsel %vm289, %v752, 0
        %v1456 = vsel %vm289, %v753, 0
        %v1459 = vsel %vm289, %v754, 0
        %v1462 = vsel %vm289, %v755, 0
        %v1465 = vsel %vm289, %v756, 0
        %v1468 = vsel %vm289, %v757, 0
        %v1471 = vsel %vm289, %v758, 0
        %v1474 = vsel %vm289, %v759, 0
        %v1477 = vsel %vm289, %v760, 0
        %v1480 = vsel %vm289, %v761, 0
        %v1483 = vsel %vm289, %v762, 0
        %v1486 = vsel %vm289, %v763, 0
        %v1489 = vsel %vm289, %v764, 0
        %v1492 = vsel %vm289, %v765, 0
        %v1495 = vsel %vm289, %v766, 0
        %v1498 = vsel %vm289, %v767, 0
        %v1501 = vsel %vm289, %v768, 0
        %v1504 = vsel %vm289, %v769, 0
        %v1507 = vsel %vm289, %v1250, 0
        %v1510 = vsel %vm289, %v1251, 0
        %v1513 = vsel %vm289, %v1252, 0
        %v1516 = vsel %vm289, %v1253, 0
        %v1519 = vsel %vm289, %v1254, 0
        %v1522 = vsel %vm289, %v1255, 0
        %v1525 = vsel %vm289, %v1256, 0
        %v1528 = vsel %vm289, %v1257, 0
        %v1531 = vsel %vm289, %v1258, 0
        %v1534 = vsel %vm289, %v1259, 0
        %v1537 = vsel %vm289, %v1260, 0
        %v1540 = vsel %vm289, %v1261, 0
        %v1543 = vsel %vm289, %v1262, 0
        %v1546 = vsel %vm289, %v1263, 0
        %v1549 = vsel %vm289, %v1264, 0
        %v1552 = vsel %vm289, %v1265, 0
        %v1555 = vsel %vm289, %v1266, 0
        %v1558 = vsel %vm289, %v1267, 0
        %v1561 = vsel %vm289, %v1268, 0
        %v1564 = vsel %vm289, %v1269, 0
        %v1567 = vsel %vm289, %v1270, 0
        %v1570 = vsel %vm289, %v1271, 0
        %v1573 = vsel %vm289, %v1272, 0
        %v1576 = vsel %vm289, %v1273, 0
        %v1579 = vsel %vm289, %v1274, 0
        %v1582 = vsel %vm289, %v1275, 0
        %v1585 = vsel %vm289, %v1276, 0
        %v1588 = vsel %vm289, %v1277, 0
        %v1591 = vsel %vm289, %v1278, 0
        %v1594 = vsel %vm289, %v1279, 0
        %v1597 = vsel %vm289, %v1280, 0
        %v1600 = vsel %vm289, %v1281, 0
        %1602 = vmatpush.xpose.msra.mxu0 %v1552
        %1603 = vmatpush.xpose.msra.mxu0 %v1549
        %1604 = vmatpush.xpose.msra.mxu0 %v1546
        %1605 = vmatpush.xpose.msra.mxu0 %v1543
        %1606 = vmatpush.xpose.msra.mxu0 %v1540
        %1607 = vmatpush.xpose.msra.mxu0 %v1537
        %1608 = vmatpush.xpose.msra.mxu0 %v1534
        %1609 = vmatpush.xpose.msra.mxu0 %v1531
        %1610 = vmatpush.xpose.msra.mxu0 %v1528
        %1611 = vmatpush.xpose.msra.mxu0 %v1525
        %1612 = vmatpush.xpose.msra.mxu0 %v1522
        %1613 = vmatpush.xpose.msra.mxu0 %v1519
        %1614 = vmatpush.xpose.msra.mxu0 %v1516
        %1615 = vmatpush.xpose.msra.mxu0 %v1513
        %1616 = vmatpush.xpose.msra.mxu0 %v1510
        %1617 = vmatpush.xpose.msra.mxu0 %v1507
        %1618 = vmatmul.f32.gmra.mxu0 %v1411
        %v1619 = vpop.f32.mrf.mxu0
        %v1620 = vadd.f32 0.0, %v1619
        %1621 = vmatmul.f32.gmra.mxu0 %v1414
        %v1622 = vpop.f32.mrf.mxu0
        %v1623 = vadd.f32 0.0, %v1622
        %1624 = vmatmul.f32.gmra.mxu0 %v1417
        %v1625 = vpop.f32.mrf.mxu0
        %v1626 = vadd.f32 0.0, %v1625
        %1627 = vmatmul.f32.gmra.mxu0 %v1420
        %v1628 = vpop.f32.mrf.mxu0
        %v1629 = vadd.f32 0.0, %v1628
        %1630 = vmatmul.f32.gmra.mxu0 %v1423
        %v1631 = vpop.f32.mrf.mxu0
        %v1632 = vadd.f32 0.0, %v1631
        %1633 = vmatmul.f32.gmra.mxu0 %v1426
        %v1634 = vpop.f32.mrf.mxu0
        %v1635 = vadd.f32 0.0, %v1634
        %1636 = vmatmul.f32.gmra.mxu0 %v1429
        %v1637 = vpop.f32.mrf.mxu0
        %v1638 = vadd.f32 0.0, %v1637
        %1639 = vmatmul.f32.gmra.mxu0 %v1432
        %v1640 = vpop.f32.mrf.mxu0
        %v1641 = vadd.f32 0.0, %v1640
        %1642 = vmatmul.f32.gmra.mxu0 %v1435
        %v1643 = vpop.f32.mrf.mxu0
        %v1644 = vadd.f32 0.0, %v1643
        %1645 = vmatmul.f32.gmra.mxu0 %v1438
        %v1646 = vpop.f32.mrf.mxu0
        %v1647 = vadd.f32 0.0, %v1646
        %1648 = vmatmul.f32.gmra.mxu0 %v1441
        %v1649 = vpop.f32.mrf.mxu0
        %v1650 = vadd.f32 0.0, %v1649
        %1651 = vmatmul.f32.gmra.mxu0 %v1444
        %v1652 = vpop.f32.mrf.mxu0
        %v1653 = vadd.f32 0.0, %v1652
        %1654 = vmatmul.f32.gmra.mxu0 %v1447
        %v1655 = vpop.f32.mrf.mxu0
        %v1656 = vadd.f32 0.0, %v1655
        %1657 = vmatmul.f32.gmra.mxu0 %v1450
        %v1658 = vpop.f32.mrf.mxu0
        %v1659 = vadd.f32 0.0, %v1658
        %1660 = vmatmul.f32.gmra.mxu0 %v1453
        %v1661 = vpop.f32.mrf.mxu0
        %v1662 = vadd.f32 0.0, %v1661
        %1663 = vmatmul.f32.gmra.mxu0 %v1456
        %v1664 = vpop.f32.mrf.mxu0
        %v1665 = vadd.f32 0.0, %v1664
        %1666 = vmatmul.f32.gmra.mxu0 %v1459
        %v1667 = vpop.f32.mrf.mxu0
        %v1668 = vadd.f32 0.0, %v1667
        %1669 = vmatmul.f32.gmra.mxu0 %v1462
        %v1670 = vpop.f32.mrf.mxu0
        %v1671 = vadd.f32 0.0, %v1670
        %1672 = vmatmul.f32.gmra.mxu0 %v1465
        %v1673 = vpop.f32.mrf.mxu0
        %v1674 = vadd.f32 0.0, %v1673
        %1675 = vmatmul.f32.gmra.mxu0 %v1468
        %v1676 = vpop.f32.mrf.mxu0
        %v1677 = vadd.f32 0.0, %v1676
        %1678 = vmatmul.f32.gmra.mxu0 %v1471
        %v1679 = vpop.f32.mrf.mxu0
        %v1680 = vadd.f32 0.0, %v1679
        %1681 = vmatmul.f32.gmra.mxu0 %v1474
        %v1682 = vpop.f32.mrf.mxu0
        %v1683 = vadd.f32 0.0, %v1682
        %1684 = vmatmul.f32.gmra.mxu0 %v1477
        %v1685 = vpop.f32.mrf.mxu0
        %v1686 = vadd.f32 0.0, %v1685
        %1687 = vmatmul.f32.gmra.mxu0 %v1480
        %v1688 = vpop.f32.mrf.mxu0
        %v1689 = vadd.f32 0.0, %v1688
        %1690 = vmatmul.f32.gmra.mxu0 %v1483
        %v1691 = vpop.f32.mrf.mxu0
        %v1692 = vadd.f32 0.0, %v1691
        %1693 = vmatmul.f32.gmra.mxu0 %v1486
        %v1694 = vpop.f32.mrf.mxu0
        %v1695 = vadd.f32 0.0, %v1694
        %1696 = vmatmul.f32.gmra.mxu0 %v1489
        %v1697 = vpop.f32.mrf.mxu0
        %v1698 = vadd.f32 0.0, %v1697
        %1699 = vmatmul.f32.gmra.mxu0 %v1492
        %v1700 = vpop.f32.mrf.mxu0
        %v1701 = vadd.f32 0.0, %v1700
        %1702 = vmatmul.f32.gmra.mxu0 %v1495
        %v1703 = vpop.f32.mrf.mxu0
        %v1704 = vadd.f32 0.0, %v1703
        %1705 = vmatmul.f32.gmra.mxu0 %v1498
        %v1706 = vpop.f32.mrf.mxu0
        %v1707 = vadd.f32 0.0, %v1706
        %1708 = vmatmul.f32.gmra.mxu0 %v1501
        %v1709 = vpop.f32.mrf.mxu0
        %v1710 = vadd.f32 0.0, %v1709
        %1711 = vmatmul.f32.gmra.mxu0 %v1504
        %v1712 = vpop.f32.mrf.mxu0
        %v1713 = vadd.f32 0.0, %v1712
        %1714 = vdwg.mxu0
        %1715 = vmatpush.xpose.msra.mxu0 %v1600
        %1716 = vmatpush.xpose.msra.mxu0 %v1597
        %1717 = vmatpush.xpose.msra.mxu0 %v1594
        %1718 = vmatpush.xpose.msra.mxu0 %v1591
        %1719 = vmatpush.xpose.msra.mxu0 %v1588
        %1720 = vmatpush.xpose.msra.mxu0 %v1585
        %1721 = vmatpush.xpose.msra.mxu0 %v1582
        %1722 = vmatpush.xpose.msra.mxu0 %v1579
        %1723 = vmatpush.xpose.msra.mxu0 %v1576
        %1724 = vmatpush.xpose.msra.mxu0 %v1573
        %1725 = vmatpush.xpose.msra.mxu0 %v1570
        %1726 = vmatpush.xpose.msra.mxu0 %v1567
        %1727 = vmatpush.xpose.msra.mxu0 %v1564
        %1728 = vmatpush.xpose.msra.mxu0 %v1561
        %1729 = vmatpush.xpose.msra.mxu0 %v1558
        %1730 = vmatpush.xpose.msra.mxu0 %v1555
        %1731 = vmatmul.f32.gmra.mxu0 %v1411
        %v1732 = vpop.f32.mrf.mxu0
        %v1733 = vadd.f32 0.0, %v1732
        %1734 = vmatmul.f32.gmra.mxu0 %v1414
        %v1735 = vpop.f32.mrf.mxu0
        %v1736 = vadd.f32 0.0, %v1735
        %1737 = vmatmul.f32.gmra.mxu0 %v1417
        %v1738 = vpop.f32.mrf.mxu0
        %v1739 = vadd.f32 0.0, %v1738
        %1740 = vmatmul.f32.gmra.mxu0 %v1420
        %v1741 = vpop.f32.mrf.mxu0
        %v1742 = vadd.f32 0.0, %v1741
        %1743 = vmatmul.f32.gmra.mxu0 %v1423
        %v1744 = vpop.f32.mrf.mxu0
        %v1745 = vadd.f32 0.0, %v1744
        %1746 = vmatmul.f32.gmra.mxu0 %v1426
        %v1747 = vpop.f32.mrf.mxu0
        %v1748 = vadd.f32 0.0, %v1747
        %1749 = vmatmul.f32.gmra.mxu0 %v1429
        %v1750 = vpop.f32.mrf.mxu0
        %v1751 = vadd.f32 0.0, %v1750
        %1752 = vmatmul.f32.gmra.mxu0 %v1432
        %v1753 = vpop.f32.mrf.mxu0
        %v1754 = vadd.f32 0.0, %v1753
        %1755 = vmatmul.f32.gmra.mxu0 %v1435
        %v1756 = vpop.f32.mrf.mxu0
        %v1757 = vadd.f32 0.0, %v1756
        %1758 = vmatmul.f32.gmra.mxu0 %v1438
        %v1759 = vpop.f32.mrf.mxu0
        %v1760 = vadd.f32 0.0, %v1759
        %1761 = vmatmul.f32.gmra.mxu0 %v1441
        %v1762 = vpop.f32.mrf.mxu0
        %v1763 = vadd.f32 0.0, %v1762
        %1764 = vmatmul.f32.gmra.mxu0 %v1444
        %v1765 = vpop.f32.mrf.mxu0
        %v1766 = vadd.f32 0.0, %v1765
        %1767 = vmatmul.f32.gmra.mxu0 %v1447
        %v1768 = vpop.f32.mrf.mxu0
        %v1769 = vadd.f32 0.0, %v1768
        %1770 = vmatmul.f32.gmra.mxu0 %v1450
        %v1771 = vpop.f32.mrf.mxu0
        %v1772 = vadd.f32 0.0, %v1771
        %1773 = vmatmul.f32.gmra.mxu0 %v1453
        %v1774 = vpop.f32.mrf.mxu0
        %v1775 = vadd.f32 0.0, %v1774
        %1776 = vmatmul.f32.gmra.mxu0 %v1456
        %v1777 = vpop.f32.mrf.mxu0
        %v1778 = vadd.f32 0.0, %v1777
        %1779 = vmatmul.f32.gmra.mxu0 %v1459
        %v1780 = vpop.f32.mrf.mxu0
        %v1781 = vadd.f32 0.0, %v1780
        %1782 = vmatmul.f32.gmra.mxu0 %v1462
        %v1783 = vpop.f32.mrf.mxu0
        %v1784 = vadd.f32 0.0, %v1783
        %1785 = vmatmul.f32.gmra.mxu0 %v1465
        %v1786 = vpop.f32.mrf.mxu0
        %v1787 = vadd.f32 0.0, %v1786
        %1788 = vmatmul.f32.gmra.mxu0 %v1468
        %v1789 = vpop.f32.mrf.mxu0
        %v1790 = vadd.f32 0.0, %v1789
        %1791 = vmatmul.f32.gmra.mxu0 %v1471
        %v1792 = vpop.f32.mrf.mxu0
        %v1793 = vadd.f32 0.0, %v1792
        %1794 = vmatmul.f32.gmra.mxu0 %v1474
        %v1795 = vpop.f32.mrf.mxu0
        %v1796 = vadd.f32 0.0, %v1795
        %1797 = vmatmul.f32.gmra.mxu0 %v1477
        %v1798 = vpop.f32.mrf.mxu0
        %v1799 = vadd.f32 0.0, %v1798
        %1800 = vmatmul.f32.gmra.mxu0 %v1480
        %v1801 = vpop.f32.mrf.mxu0
        %v1802 = vadd.f32 0.0, %v1801
        %1803 = vmatmul.f32.gmra.mxu0 %v1483
        %v1804 = vpop.f32.mrf.mxu0
        %v1805 = vadd.f32 0.0, %v1804
        %1806 = vmatmul.f32.gmra.mxu0 %v1486
        %v1807 = vpop.f32.mrf.mxu0
        %v1808 = vadd.f32 0.0, %v1807
        %1809 = vmatmul.f32.gmra.mxu0 %v1489
        %v1810 = vpop.f32.mrf.mxu0
        %v1811 = vadd.f32 0.0, %v1810
        %1812 = vmatmul.f32.gmra.mxu0 %v1492
        %v1813 = vpop.f32.mrf.mxu0
        %v1814 = vadd.f32 0.0, %v1813
        %1815 = vmatmul.f32.gmra.mxu0 %v1495
        %v1816 = vpop.f32.mrf.mxu0
        %v1817 = vadd.f32 0.0, %v1816
        %1818 = vmatmul.f32.gmra.mxu0 %v1498
        %v1819 = vpop.f32.mrf.mxu0
        %v1820 = vadd.f32 0.0, %v1819
        %1821 = vmatmul.f32.gmra.mxu0 %v1501
        %v1822 = vpop.f32.mrf.mxu0
        %v1823 = vadd.f32 0.0, %v1822
        %1824 = vmatmul.f32.gmra.mxu0 %v1504
        %v1825 = vpop.f32.mrf.mxu0
        %v1826 = vadd.f32 0.0, %v1825
        %1827 = vdwg.mxu0
        %1828 = vxpose.xlu0.b32.start [1/16] %v1316, 128
        %1829 = vxpose.xlu0.b32.cont [2/16] %v1319, 128
        %1830 = vxpose.xlu0.b32.cont [3/16] %v1322, 128
        %1831 = vxpose.xlu0.b32.cont [4/16] %v1325, 128
        %1832 = vxpose.xlu0.b32.cont [5/16] %v1328, 128
        %1833 = vxpose.xlu0.b32.cont [6/16] %v1331, 128
        %1834 = vxpose.xlu0.b32.cont [7/16] %v1334, 128
        %1835 = vxpose.xlu0.b32.cont [8/16] %v1337, 128
        %1836 = vxpose.xlu0.b32.cont [9/16] %v1340, 128
        %1837 = vxpose.xlu0.b32.cont [10/16] %v1343, 128
        %1838 = vxpose.xlu0.b32.cont [11/16] %v1346, 128
        %1839 = vxpose.xlu0.b32.cont [12/16] %v1349, 128
        %1840 = vxpose.xlu0.b32.cont [13/16] %v1352, 128
        %1841 = vxpose.xlu0.b32.cont [14/16] %v1355, 128
        %1842 = vxpose.xlu0.b32.cont [15/16] %v1358, 128
        %1843 = vxpose.xlu0.b32.end [16/16] %v1361, 128
        %v1844 = vpop.trf.xlu0
        %v1845 = vpop.trf.xlu0
        %v1846 = vpop.trf.xlu0
        %v1847 = vpop.trf.xlu0
        %v1848 = vpop.trf.xlu0
        %v1849 = vpop.trf.xlu0
        %v1850 = vpop.trf.xlu0
        %v1851 = vpop.trf.xlu0
        %v1852 = vpop.trf.xlu0
        %v1853 = vpop.trf.xlu0
        %v1854 = vpop.trf.xlu0
        %v1855 = vpop.trf.xlu0
        %v1856 = vpop.trf.xlu0
        %v1857 = vpop.trf.xlu0
        %v1858 = vpop.trf.xlu0
        %v1859 = vpop.trf.xlu0
        %1860 = vxpose.xlu0.b32.start [1/16] %v1364, 128
        %1861 = vxpose.xlu0.b32.cont [2/16] %v1367, 128
        %1862 = vxpose.xlu0.b32.cont [3/16] %v1370, 128
        %1863 = vxpose.xlu0.b32.cont [4/16] %v1373, 128
        %1864 = vxpose.xlu0.b32.cont [5/16] %v1376, 128
        %1865 = vxpose.xlu0.b32.cont [6/16] %v1379, 128
        %1866 = vxpose.xlu0.b32.cont [7/16] %v1382, 128
        %1867 = vxpose.xlu0.b32.cont [8/16] %v1385, 128
        %1868 = vxpose.xlu0.b32.cont [9/16] %v1388, 128
        %1869 = vxpose.xlu0.b32.cont [10/16] %v1391, 128
        %1870 = vxpose.xlu0.b32.cont [11/16] %v1394, 128
        %1871 = vxpose.xlu0.b32.cont [12/16] %v1397, 128
        %1872 = vxpose.xlu0.b32.cont [13/16] %v1400, 128
        %1873 = vxpose.xlu0.b32.cont [14/16] %v1403, 128
        %1874 = vxpose.xlu0.b32.cont [15/16] %v1406, 128
        %1875 = vxpose.xlu0.b32.end [16/16] %v1409, 128
        %v1876 = vpop.trf.xlu0
        %v1877 = vpop.trf.xlu0
        %v1878 = vpop.trf.xlu0
        %v1879 = vpop.trf.xlu0
        %v1880 = vpop.trf.xlu0
        %v1881 = vpop.trf.xlu0
        %v1882 = vpop.trf.xlu0
        %v1883 = vpop.trf.xlu0
        %v1884 = vpop.trf.xlu0
        %v1885 = vpop.trf.xlu0
        %v1886 = vpop.trf.xlu0
        %v1887 = vpop.trf.xlu0
        %v1888 = vpop.trf.xlu0
        %v1889 = vpop.trf.xlu0
        %v1890 = vpop.trf.xlu0
        %v1891 = vpop.trf.xlu0
        %v1892 = vmul.f32 %v1620, 2.0
        %v1893 = vmul.f32 %v1733, 2.0
        %v1894 = vmul.f32 %v1623, 2.0
        %v1895 = vmul.f32 %v1736, 2.0
        %v1896 = vmul.f32 %v1626, 2.0
        %v1897 = vmul.f32 %v1739, 2.0
        %v1898 = vmul.f32 %v1629, 2.0
        %v1899 = vmul.f32 %v1742, 2.0
        %v1900 = vmul.f32 %v1632, 2.0
        %v1901 = vmul.f32 %v1745, 2.0
        %v1902 = vmul.f32 %v1635, 2.0
        %v1903 = vmul.f32 %v1748, 2.0
        %v1904 = vmul.f32 %v1638, 2.0
        %v1905 = vmul.f32 %v1751, 2.0
        %v1906 = vmul.f32 %v1641, 2.0
        %v1907 = vmul.f32 %v1754, 2.0
        %v1908 = vmul.f32 %v1644, 2.0
        %v1909 = vmul.f32 %v1757, 2.0
        %v1910 = vmul.f32 %v1647, 2.0
        %v1911 = vmul.f32 %v1760, 2.0
        %v1912 = vmul.f32 %v1650, 2.0
        %v1913 = vmul.f32 %v1763, 2.0
        %v1914 = vmul.f32 %v1653, 2.0
        %v1915 = vmul.f32 %v1766, 2.0
        %v1916 = vmul.f32 %v1656, 2.0
        %v1917 = vmul.f32 %v1769, 2.0
        %v1918 = vmul.f32 %v1659, 2.0
        %v1919 = vmul.f32 %v1772, 2.0
        %v1920 = vmul.f32 %v1662, 2.0
        %v1921 = vmul.f32 %v1775, 2.0
        %v1922 = vmul.f32 %v1665, 2.0
        %v1923 = vmul.f32 %v1778, 2.0
        %v1924 = vmul.f32 %v1668, 2.0
        %v1925 = vmul.f32 %v1781, 2.0
        %v1926 = vmul.f32 %v1671, 2.0
        %v1927 = vmul.f32 %v1784, 2.0
        %v1928 = vmul.f32 %v1674, 2.0
        %v1929 = vmul.f32 %v1787, 2.0
        %v1930 = vmul.f32 %v1677, 2.0
        %v1931 = vmul.f32 %v1790, 2.0
        %v1932 = vmul.f32 %v1680, 2.0
        %v1933 = vmul.f32 %v1793, 2.0
        %v1934 = vmul.f32 %v1683, 2.0
        %v1935 = vmul.f32 %v1796, 2.0
        %v1936 = vmul.f32 %v1686, 2.0
        %v1937 = vmul.f32 %v1799, 2.0
        %v1938 = vmul.f32 %v1689, 2.0
        %v1939 = vmul.f32 %v1802, 2.0
        %v1940 = vmul.f32 %v1692, 2.0
        %v1941 = vmul.f32 %v1805, 2.0
        %v1942 = vmul.f32 %v1695, 2.0
        %v1943 = vmul.f32 %v1808, 2.0
        %v1944 = vmul.f32 %v1698, 2.0
        %v1945 = vmul.f32 %v1811, 2.0
        %v1946 = vmul.f32 %v1701, 2.0
        %v1947 = vmul.f32 %v1814, 2.0
        %v1948 = vmul.f32 %v1704, 2.0
        %v1949 = vmul.f32 %v1817, 2.0
        %v1950 = vmul.f32 %v1707, 2.0
        %v1951 = vmul.f32 %v1820, 2.0
        %v1952 = vmul.f32 %v1710, 2.0
        %v1953 = vmul.f32 %v1823, 2.0
        %v1954 = vmul.f32 %v1713, 2.0
        %v1955 = vmul.f32 %v1826, 2.0
        %v1956 = vperm.slane %v1844, 0
        %v1957 = vperm.slane %v1876, 0
        %v1958 = vsub.f32 %v1956, %v1892
        %v1959 = vsub.f32 %v1957, %v1893
        %v1960 = vsub.f32 %v1956, %v1894
        %v1961 = vsub.f32 %v1957, %v1895
        %v1962 = vsub.f32 %v1956, %v1896
        %v1963 = vsub.f32 %v1957, %v1897
        %v1964 = vsub.f32 %v1956, %v1898
        %v1965 = vsub.f32 %v1957, %v1899
        %v1966 = vsub.f32 %v1956, %v1900
        %v1967 = vsub.f32 %v1957, %v1901
        %v1968 = vsub.f32 %v1956, %v1902
        %v1969 = vsub.f32 %v1957, %v1903
        %v1970 = vsub.f32 %v1956, %v1904
        %v1971 = vsub.f32 %v1957, %v1905
        %v1972 = vsub.f32 %v1956, %v1906
        %v1973 = vsub.f32 %v1957, %v1907
        %v1974 = vsub.f32 %v1956, %v1908
        %v1975 = vsub.f32 %v1957, %v1909
        %v1976 = vsub.f32 %v1956, %v1910
        %v1977 = vsub.f32 %v1957, %v1911
        %v1978 = vsub.f32 %v1956, %v1912
        %v1979 = vsub.f32 %v1957, %v1913
        %v1980 = vsub.f32 %v1956, %v1914
        %v1981 = vsub.f32 %v1957, %v1915
        %v1982 = vsub.f32 %v1956, %v1916
        %v1983 = vsub.f32 %v1957, %v1917
        %v1984 = vsub.f32 %v1956, %v1918
        %v1985 = vsub.f32 %v1957, %v1919
        %v1986 = vsub.f32 %v1956, %v1920
        %v1987 = vsub.f32 %v1957, %v1921
        %v1988 = vsub.f32 %v1956, %v1922
        %v1989 = vsub.f32 %v1957, %v1923
        %v1990 = vsub.f32 %v1956, %v1924
        %v1991 = vsub.f32 %v1957, %v1925
        %v1992 = vsub.f32 %v1956, %v1926
        %v1993 = vsub.f32 %v1957, %v1927
        %v1994 = vsub.f32 %v1956, %v1928
        %v1995 = vsub.f32 %v1957, %v1929
        %v1996 = vsub.f32 %v1956, %v1930
        %v1997 = vsub.f32 %v1957, %v1931
        %v1998 = vsub.f32 %v1956, %v1932
        %v1999 = vsub.f32 %v1957, %v1933
        %v2000 = vsub.f32 %v1956, %v1934
        %v2001 = vsub.f32 %v1957, %v1935
        %v2002 = vsub.f32 %v1956, %v1936
        %v2003 = vsub.f32 %v1957, %v1937
        %v2004 = vsub.f32 %v1956, %v1938
        %v2005 = vsub.f32 %v1957, %v1939
        %v2006 = vsub.f32 %v1956, %v1940
        %v2007 = vsub.f32 %v1957, %v1941
        %v2008 = vsub.f32 %v1956, %v1942
        %v2009 = vsub.f32 %v1957, %v1943
        %v2010 = vsub.f32 %v1956, %v1944
        %v2011 = vsub.f32 %v1957, %v1945
        %v2012 = vsub.f32 %v1956, %v1946
        %v2013 = vsub.f32 %v1957, %v1947
        %v2014 = vsub.f32 %v1956, %v1948
        %v2015 = vsub.f32 %v1957, %v1949
        %v2016 = vsub.f32 %v1956, %v1950
        %v2017 = vsub.f32 %v1957, %v1951
        %v2018 = vsub.f32 %v1956, %v1952
        %v2019 = vsub.f32 %v1957, %v1953
        %v2020 = vsub.f32 %v1956, %v1954
        %v2021 = vsub.f32 %v1957, %v1955
        %v2022 = vlaneseq
        %v2023 = vand.u32 %v2022, 127
        %v2024 = vadd.s32 %v2023, 128
        %vm2025 = vcmp.le.f32.partialorder %v1958, %v1959
        %v2026 = vsel %vm2025, %v1958, %v1959
        %v2027 = vsel %vm2025, %v2023, %v2024
        %2028 = vmin.index.xlane.f32.xlu0 %v2026
        %v2029 = vpop.xlane.xlu0 %2028
        %2030 = vset.pattern.permute.xlu0 %v2029
        %2031 = vperm.xlu0 %2030, %v2027
        %v2032 = vpop.permute.xlu0 %2031
        %vm2033 = vcmp.le.f32.partialorder %v1960, %v1961
        %v2034 = vsel %vm2033, %v1960, %v1961
        %v2035 = vsel %vm2033, %v2023, %v2024
        %2036 = vmin.index.xlane.f32.xlu0 %v2034
        %v2037 = vpop.xlane.xlu0 %2036
        %2038 = vset.pattern.permute.xlu0 %v2037
        %2039 = vperm.xlu0 %2038, %v2035
        %v2040 = vpop.permute.xlu0 %2039
        %vm2041 = vcmp.le.f32.partialorder %v1962, %v1963
        %v2042 = vsel %vm2041, %v1962, %v1963
        %v2043 = vsel %vm2041, %v2023, %v2024
        %2044 = vmin.index.xlane.f32.xlu0 %v2042
        %v2045 = vpop.xlane.xlu0 %2044
        %2046 = vset.pattern.permute.xlu0 %v2045
        %2047 = vperm.xlu0 %2046, %v2043
        %v2048 = vpop.permute.xlu0 %2047
        %vm2049 = vcmp.le.f32.partialorder %v1964, %v1965
        %v2050 = vsel %vm2049, %v1964, %v1965
        %v2051 = vsel %vm2049, %v2023, %v2024
        %2052 = vmin.index.xlane.f32.xlu0 %v2050
        %v2053 = vpop.xlane.xlu0 %2052
        %2054 = vset.pattern.permute.xlu0 %v2053
        %2055 = vperm.xlu0 %2054, %v2051
        %v2056 = vpop.permute.xlu0 %2055
        %vm2057 = vcmp.le.f32.partialorder %v1966, %v1967
        %v2058 = vsel %vm2057, %v1966, %v1967
        %v2059 = vsel %vm2057, %v2023, %v2024
        %2060 = vmin.index.xlane.f32.xlu0 %v2058
        %v2061 = vpop.xlane.xlu0 %2060
        %2062 = vset.pattern.permute.xlu0 %v2061
        %2063 = vperm.xlu0 %2062, %v2059
        %v2064 = vpop.permute.xlu0 %2063
        %vm2065 = vcmp.le.f32.partialorder %v1968, %v1969
        %v2066 = vsel %vm2065, %v1968, %v1969
        %v2067 = vsel %vm2065, %v2023, %v2024
        %2068 = vmin.index.xlane.f32.xlu0 %v2066
        %v2069 = vpop.xlane.xlu0 %2068
        %2070 = vset.pattern.permute.xlu0 %v2069
        %2071 = vperm.xlu0 %2070, %v2067
        %v2072 = vpop.permute.xlu0 %2071
        %vm2073 = vcmp.le.f32.partialorder %v1970, %v1971
        %v2074 = vsel %vm2073, %v1970, %v1971
        %v2075 = vsel %vm2073, %v2023, %v2024
        %2076 = vmin.index.xlane.f32.xlu0 %v2074
        %v2077 = vpop.xlane.xlu0 %2076
        %2078 = vset.pattern.permute.xlu0 %v2077
        %2079 = vperm.xlu0 %2078, %v2075
        %v2080 = vpop.permute.xlu0 %2079
        %vm2081 = vcmp.le.f32.partialorder %v1972, %v1973
        %v2082 = vsel %vm2081, %v1972, %v1973
        %v2083 = vsel %vm2081, %v2023, %v2024
        %2084 = vmin.index.xlane.f32.xlu0 %v2082
        %v2085 = vpop.xlane.xlu0 %2084
        %2086 = vset.pattern.permute.xlu0 %v2085
        %2087 = vperm.xlu0 %2086, %v2083
        %v2088 = vpop.permute.xlu0 %2087
        %vm2089 = vcmp.le.f32.partialorder %v1974, %v1975
        %v2090 = vsel %vm2089, %v1974, %v1975
        %v2091 = vsel %vm2089, %v2023, %v2024
        %2092 = vmin.index.xlane.f32.xlu0 %v2090
        %v2093 = vpop.xlane.xlu0 %2092
        %2094 = vset.pattern.permute.xlu0 %v2093
        %2095 = vperm.xlu0 %2094, %v2091
        %v2096 = vpop.permute.xlu0 %2095
        %vm2097 = vcmp.le.f32.partialorder %v1976, %v1977
        %v2098 = vsel %vm2097, %v1976, %v1977
        %v2099 = vsel %vm2097, %v2023, %v2024
        %2100 = vmin.index.xlane.f32.xlu0 %v2098
        %v2101 = vpop.xlane.xlu0 %2100
        %2102 = vset.pattern.permute.xlu0 %v2101
        %2103 = vperm.xlu0 %2102, %v2099
        %v2104 = vpop.permute.xlu0 %2103
        %vm2105 = vcmp.le.f32.partialorder %v1978, %v1979
        %v2106 = vsel %vm2105, %v1978, %v1979
        %v2107 = vsel %vm2105, %v2023, %v2024
        %2108 = vmin.index.xlane.f32.xlu0 %v2106
        %v2109 = vpop.xlane.xlu0 %2108
        %2110 = vset.pattern.permute.xlu0 %v2109
        %2111 = vperm.xlu0 %2110, %v2107
        %v2112 = vpop.permute.xlu0 %2111
        %vm2113 = vcmp.le.f32.partialorder %v1980, %v1981
        %v2114 = vsel %vm2113, %v1980, %v1981
        %v2115 = vsel %vm2113, %v2023, %v2024
        %2116 = vmin.index.xlane.f32.xlu0 %v2114
        %v2117 = vpop.xlane.xlu0 %2116
        %2118 = vset.pattern.permute.xlu0 %v2117
        %2119 = vperm.xlu0 %2118, %v2115
        %v2120 = vpop.permute.xlu0 %2119
        %vm2121 = vcmp.le.f32.partialorder %v1982, %v1983
        %v2122 = vsel %vm2121, %v1982, %v1983
        %v2123 = vsel %vm2121, %v2023, %v2024
        %2124 = vmin.index.xlane.f32.xlu0 %v2122
        %v2125 = vpop.xlane.xlu0 %2124
        %2126 = vset.pattern.permute.xlu0 %v2125
        %2127 = vperm.xlu0 %2126, %v2123
        %v2128 = vpop.permute.xlu0 %2127
        %vm2129 = vcmp.le.f32.partialorder %v1984, %v1985
        %v2130 = vsel %vm2129, %v1984, %v1985
        %v2131 = vsel %vm2129, %v2023, %v2024
        %2132 = vmin.index.xlane.f32.xlu0 %v2130
        %v2133 = vpop.xlane.xlu0 %2132
        %2134 = vset.pattern.permute.xlu0 %v2133
        %2135 = vperm.xlu0 %2134, %v2131
        %v2136 = vpop.permute.xlu0 %2135
        %vm2137 = vcmp.le.f32.partialorder %v1986, %v1987
        %v2138 = vsel %vm2137, %v1986, %v1987
        %v2139 = vsel %vm2137, %v2023, %v2024
        %2140 = vmin.index.xlane.f32.xlu0 %v2138
        %v2141 = vpop.xlane.xlu0 %2140
        %2142 = vset.pattern.permute.xlu0 %v2141
        %2143 = vperm.xlu0 %2142, %v2139
        %v2144 = vpop.permute.xlu0 %2143
        %vm2145 = vcmp.le.f32.partialorder %v1988, %v1989
        %v2146 = vsel %vm2145, %v1988, %v1989
        %v2147 = vsel %vm2145, %v2023, %v2024
        %2148 = vmin.index.xlane.f32.xlu0 %v2146
        %v2149 = vpop.xlane.xlu0 %2148
        %2150 = vset.pattern.permute.xlu0 %v2149
        %2151 = vperm.xlu0 %2150, %v2147
        %v2152 = vpop.permute.xlu0 %2151
        %vm2153 = vcmp.le.f32.partialorder %v1990, %v1991
        %v2154 = vsel %vm2153, %v1990, %v1991
        %v2155 = vsel %vm2153, %v2023, %v2024
        %2156 = vmin.index.xlane.f32.xlu0 %v2154
        %v2157 = vpop.xlane.xlu0 %2156
        %2158 = vset.pattern.permute.xlu0 %v2157
        %2159 = vperm.xlu0 %2158, %v2155
        %v2160 = vpop.permute.xlu0 %2159
        %vm2161 = vcmp.le.f32.partialorder %v1992, %v1993
        %v2162 = vsel %vm2161, %v1992, %v1993
        %v2163 = vsel %vm2161, %v2023, %v2024
        %2164 = vmin.index.xlane.f32.xlu0 %v2162
        %v2165 = vpop.xlane.xlu0 %2164
        %2166 = vset.pattern.permute.xlu0 %v2165
        %2167 = vperm.xlu0 %2166, %v2163
        %v2168 = vpop.permute.xlu0 %2167
        %vm2169 = vcmp.le.f32.partialorder %v1994, %v1995
        %v2170 = vsel %vm2169, %v1994, %v1995
        %v2171 = vsel %vm2169, %v2023, %v2024
        %2172 = vmin.index.xlane.f32.xlu0 %v2170
        %v2173 = vpop.xlane.xlu0 %2172
        %2174 = vset.pattern.permute.xlu0 %v2173
        %2175 = vperm.xlu0 %2174, %v2171
        %v2176 = vpop.permute.xlu0 %2175
        %vm2177 = vcmp.le.f32.partialorder %v1996, %v1997
        %v2178 = vsel %vm2177, %v1996, %v1997
        %v2179 = vsel %vm2177, %v2023, %v2024
        %2180 = vmin.index.xlane.f32.xlu0 %v2178
        %v2181 = vpop.xlane.xlu0 %2180
        %2182 = vset.pattern.permute.xlu0 %v2181
        %2183 = vperm.xlu0 %2182, %v2179
        %v2184 = vpop.permute.xlu0 %2183
        %vm2185 = vcmp.le.f32.partialorder %v1998, %v1999
        %v2186 = vsel %vm2185, %v1998, %v1999
        %v2187 = vsel %vm2185, %v2023, %v2024
        %2188 = vmin.index.xlane.f32.xlu0 %v2186
        %v2189 = vpop.xlane.xlu0 %2188
        %2190 = vset.pattern.permute.xlu0 %v2189
        %2191 = vperm.xlu0 %2190, %v2187
        %v2192 = vpop.permute.xlu0 %2191
        %vm2193 = vcmp.le.f32.partialorder %v2000, %v2001
        %v2194 = vsel %vm2193, %v2000, %v2001
        %v2195 = vsel %vm2193, %v2023, %v2024
        %2196 = vmin.index.xlane.f32.xlu0 %v2194
        %v2197 = vpop.xlane.xlu0 %2196
        %2198 = vset.pattern.permute.xlu0 %v2197
        %2199 = vperm.xlu0 %2198, %v2195
        %v2200 = vpop.permute.xlu0 %2199
        %vm2201 = vcmp.le.f32.partialorder %v2002, %v2003
        %v2202 = vsel %vm2201, %v2002, %v2003
        %v2203 = vsel %vm2201, %v2023, %v2024
        %2204 = vmin.index.xlane.f32.xlu0 %v2202
        %v2205 = vpop.xlane.xlu0 %2204
        %2206 = vset.pattern.permute.xlu0 %v2205
        %2207 = vperm.xlu0 %2206, %v2203
        %v2208 = vpop.permute.xlu0 %2207
        %vm2209 = vcmp.le.f32.partialorder %v2004, %v2005
        %v2210 = vsel %vm2209, %v2004, %v2005
        %v2211 = vsel %vm2209, %v2023, %v2024
        %2212 = vmin.index.xlane.f32.xlu0 %v2210
        %v2213 = vpop.xlane.xlu0 %2212
        %2214 = vset.pattern.permute.xlu0 %v2213
        %2215 = vperm.xlu0 %2214, %v2211
        %v2216 = vpop.permute.xlu0 %2215
        %vm2217 = vcmp.le.f32.partialorder %v2006, %v2007
        %v2218 = vsel %vm2217, %v2006, %v2007
        %v2219 = vsel %vm2217, %v2023, %v2024
        %2220 = vmin.index.xlane.f32.xlu0 %v2218
        %v2221 = vpop.xlane.xlu0 %2220
        %2222 = vset.pattern.permute.xlu0 %v2221
        %2223 = vperm.xlu0 %2222, %v2219
        %v2224 = vpop.permute.xlu0 %2223
        %vm2225 = vcmp.le.f32.partialorder %v2008, %v2009
        %v2226 = vsel %vm2225, %v2008, %v2009
        %v2227 = vsel %vm2225, %v2023, %v2024
        %2228 = vmin.index.xlane.f32.xlu0 %v2226
        %v2229 = vpop.xlane.xlu0 %2228
        %2230 = vset.pattern.permute.xlu0 %v2229
        %2231 = vperm.xlu0 %2230, %v2227
        %v2232 = vpop.permute.xlu0 %2231
        %vm2233 = vcmp.le.f32.partialorder %v2010, %v2011
        %v2234 = vsel %vm2233, %v2010, %v2011
        %v2235 = vsel %vm2233, %v2023, %v2024
        %2236 = vmin.index.xlane.f32.xlu0 %v2234
        %v2237 = vpop.xlane.xlu0 %2236
        %2238 = vset.pattern.permute.xlu0 %v2237
        %2239 = vperm.xlu0 %2238, %v2235
        %v2240 = vpop.permute.xlu0 %2239
        %vm2241 = vcmp.le.f32.partialorder %v2012, %v2013
        %v2242 = vsel %vm2241, %v2012, %v2013
        %v2243 = vsel %vm2241, %v2023, %v2024
        %2244 = vmin.index.xlane.f32.xlu0 %v2242
        %v2245 = vpop.xlane.xlu0 %2244
        %2246 = vset.pattern.permute.xlu0 %v2245
        %2247 = vperm.xlu0 %2246, %v2243
        %v2248 = vpop.permute.xlu0 %2247
        %vm2249 = vcmp.le.f32.partialorder %v2014, %v2015
        %v2250 = vsel %vm2249, %v2014, %v2015
        %v2251 = vsel %vm2249, %v2023, %v2024
        %2252 = vmin.index.xlane.f32.xlu0 %v2250
        %v2253 = vpop.xlane.xlu0 %2252
        %2254 = vset.pattern.permute.xlu0 %v2253
        %2255 = vperm.xlu0 %2254, %v2251
        %v2256 = vpop.permute.xlu0 %2255
        %vm2257 = vcmp.le.f32.partialorder %v2016, %v2017
        %v2258 = vsel %vm2257, %v2016, %v2017
        %v2259 = vsel %vm2257, %v2023, %v2024
        %2260 = vmin.index.xlane.f32.xlu0 %v2258
        %v2261 = vpop.xlane.xlu0 %2260
        %2262 = vset.pattern.permute.xlu0 %v2261
        %2263 = vperm.xlu0 %2262, %v2259
        %v2264 = vpop.permute.xlu0 %2263
        %vm2265 = vcmp.le.f32.partialorder %v2018, %v2019
        %v2266 = vsel %vm2265, %v2018, %v2019
        %v2267 = vsel %vm2265, %v2023, %v2024
        %2268 = vmin.index.xlane.f32.xlu0 %v2266
        %v2269 = vpop.xlane.xlu0 %2268
        %2270 = vset.pattern.permute.xlu0 %v2269
        %2271 = vperm.xlu0 %2270, %v2267
        %v2272 = vpop.permute.xlu0 %2271
        %vm2273 = vcmp.le.f32.partialorder %v2020, %v2021
        %v2274 = vsel %vm2273, %v2020, %v2021
        %v2275 = vsel %vm2273, %v2023, %v2024
        %2276 = vmin.index.xlane.f32.xlu0 %v2274
        %v2277 = vpop.xlane.xlu0 %2276
        %2278 = vset.pattern.permute.xlu0 %v2277
        %2279 = vperm.xlu0 %2278, %v2275
        %v2280 = vpop.permute.xlu0 %2279
        %vm2281 = vcmp.eq.s32.totalorder %v2023, %v2032
        %vm2282 = vcmp.eq.s32.totalorder %v2024, %v2032
        %vm2283 = vcmp.eq.s32.totalorder %v2023, %v2040
        %vm2284 = vcmp.eq.s32.totalorder %v2024, %v2040
        %vm2285 = vcmp.eq.s32.totalorder %v2023, %v2048
        %vm2286 = vcmp.eq.s32.totalorder %v2024, %v2048
        %vm2287 = vcmp.eq.s32.totalorder %v2023, %v2056
        %vm2288 = vcmp.eq.s32.totalorder %v2024, %v2056
        %vm2289 = vcmp.eq.s32.totalorder %v2023, %v2064
        %vm2290 = vcmp.eq.s32.totalorder %v2024, %v2064
        %vm2291 = vcmp.eq.s32.totalorder %v2023, %v2072
        %vm2292 = vcmp.eq.s32.totalorder %v2024, %v2072
        %vm2293 = vcmp.eq.s32.totalorder %v2023, %v2080
        %vm2294 = vcmp.eq.s32.totalorder %v2024, %v2080
        %vm2295 = vcmp.eq.s32.totalorder %v2023, %v2088
        %vm2296 = vcmp.eq.s32.totalorder %v2024, %v2088
        %vm2297 = vcmp.eq.s32.totalorder %v2023, %v2096
        %vm2298 = vcmp.eq.s32.totalorder %v2024, %v2096
        %vm2299 = vcmp.eq.s32.totalorder %v2023, %v2104
        %vm2300 = vcmp.eq.s32.totalorder %v2024, %v2104
        %vm2301 = vcmp.eq.s32.totalorder %v2023, %v2112
        %vm2302 = vcmp.eq.s32.totalorder %v2024, %v2112
        %vm2303 = vcmp.eq.s32.totalorder %v2023, %v2120
        %vm2304 = vcmp.eq.s32.totalorder %v2024, %v2120
        %vm2305 = vcmp.eq.s32.totalorder %v2023, %v2128
        %vm2306 = vcmp.eq.s32.totalorder %v2024, %v2128
        %vm2307 = vcmp.eq.s32.totalorder %v2023, %v2136
        %vm2308 = vcmp.eq.s32.totalorder %v2024, %v2136
        %vm2309 = vcmp.eq.s32.totalorder %v2023, %v2144
        %vm2310 = vcmp.eq.s32.totalorder %v2024, %v2144
        %vm2311 = vcmp.eq.s32.totalorder %v2023, %v2152
        %vm2312 = vcmp.eq.s32.totalorder %v2024, %v2152
        %vm2313 = vcmp.eq.s32.totalorder %v2023, %v2160
        %vm2314 = vcmp.eq.s32.totalorder %v2024, %v2160
        %vm2315 = vcmp.eq.s32.totalorder %v2023, %v2168
        %vm2316 = vcmp.eq.s32.totalorder %v2024, %v2168
        %vm2317 = vcmp.eq.s32.totalorder %v2023, %v2176
        %vm2318 = vcmp.eq.s32.totalorder %v2024, %v2176
        %vm2319 = vcmp.eq.s32.totalorder %v2023, %v2184
        %vm2320 = vcmp.eq.s32.totalorder %v2024, %v2184
        %vm2321 = vcmp.eq.s32.totalorder %v2023, %v2192
        %vm2322 = vcmp.eq.s32.totalorder %v2024, %v2192
        %vm2323 = vcmp.eq.s32.totalorder %v2023, %v2200
        %vm2324 = vcmp.eq.s32.totalorder %v2024, %v2200
        %vm2325 = vcmp.eq.s32.totalorder %v2023, %v2208
        %vm2326 = vcmp.eq.s32.totalorder %v2024, %v2208
        %vm2327 = vcmp.eq.s32.totalorder %v2023, %v2216
        %vm2328 = vcmp.eq.s32.totalorder %v2024, %v2216
        %vm2329 = vcmp.eq.s32.totalorder %v2023, %v2224
        %vm2330 = vcmp.eq.s32.totalorder %v2024, %v2224
        %vm2331 = vcmp.eq.s32.totalorder %v2023, %v2232
        %vm2332 = vcmp.eq.s32.totalorder %v2024, %v2232
        %vm2333 = vcmp.eq.s32.totalorder %v2023, %v2240
        %vm2334 = vcmp.eq.s32.totalorder %v2024, %v2240
        %vm2335 = vcmp.eq.s32.totalorder %v2023, %v2248
        %vm2336 = vcmp.eq.s32.totalorder %v2024, %v2248
        %vm2337 = vcmp.eq.s32.totalorder %v2023, %v2256
        %vm2338 = vcmp.eq.s32.totalorder %v2024, %v2256
        %vm2339 = vcmp.eq.s32.totalorder %v2023, %v2264
        %vm2340 = vcmp.eq.s32.totalorder %v2024, %v2264
        %vm2341 = vcmp.eq.s32.totalorder %v2023, %v2272
        %vm2342 = vcmp.eq.s32.totalorder %v2024, %v2272
        %vm2343 = vcmp.eq.s32.totalorder %v2023, %v2280
        %vm2344 = vcmp.eq.s32.totalorder %v2024, %v2280
        %v2345 = vsel %vm2281, 3e+38, %v1958
        %v2346 = vsel %vm2282, 3e+38, %v1959
        %v2347 = vsel %vm2283, 3e+38, %v1960
        %v2348 = vsel %vm2284, 3e+38, %v1961
        %v2349 = vsel %vm2285, 3e+38, %v1962
        %v2350 = vsel %vm2286, 3e+38, %v1963
        %v2351 = vsel %vm2287, 3e+38, %v1964
        %v2352 = vsel %vm2288, 3e+38, %v1965
        %v2353 = vsel %vm2289, 3e+38, %v1966
        %v2354 = vsel %vm2290, 3e+38, %v1967
        %v2355 = vsel %vm2291, 3e+38, %v1968
        %v2356 = vsel %vm2292, 3e+38, %v1969
        %v2357 = vsel %vm2293, 3e+38, %v1970
        %v2358 = vsel %vm2294, 3e+38, %v1971
        %v2359 = vsel %vm2295, 3e+38, %v1972
        %v2360 = vsel %vm2296, 3e+38, %v1973
        %v2361 = vsel %vm2297, 3e+38, %v1974
        %v2362 = vsel %vm2298, 3e+38, %v1975
        %v2363 = vsel %vm2299, 3e+38, %v1976
        %v2364 = vsel %vm2300, 3e+38, %v1977
        %v2365 = vsel %vm2301, 3e+38, %v1978
        %v2366 = vsel %vm2302, 3e+38, %v1979
        %v2367 = vsel %vm2303, 3e+38, %v1980
        %v2368 = vsel %vm2304, 3e+38, %v1981
        %v2369 = vsel %vm2305, 3e+38, %v1982
        %v2370 = vsel %vm2306, 3e+38, %v1983
        %v2371 = vsel %vm2307, 3e+38, %v1984
        %v2372 = vsel %vm2308, 3e+38, %v1985
        %v2373 = vsel %vm2309, 3e+38, %v1986
        %v2374 = vsel %vm2310, 3e+38, %v1987
        %v2375 = vsel %vm2311, 3e+38, %v1988
        %v2376 = vsel %vm2312, 3e+38, %v1989
        %v2377 = vsel %vm2313, 3e+38, %v1990
        %v2378 = vsel %vm2314, 3e+38, %v1991
        %v2379 = vsel %vm2315, 3e+38, %v1992
        %v2380 = vsel %vm2316, 3e+38, %v1993
        %v2381 = vsel %vm2317, 3e+38, %v1994
        %v2382 = vsel %vm2318, 3e+38, %v1995
        %v2383 = vsel %vm2319, 3e+38, %v1996
        %v2384 = vsel %vm2320, 3e+38, %v1997
        %v2385 = vsel %vm2321, 3e+38, %v1998
        %v2386 = vsel %vm2322, 3e+38, %v1999
        %v2387 = vsel %vm2323, 3e+38, %v2000
        %v2388 = vsel %vm2324, 3e+38, %v2001
        %v2389 = vsel %vm2325, 3e+38, %v2002
        %v2390 = vsel %vm2326, 3e+38, %v2003
        %v2391 = vsel %vm2327, 3e+38, %v2004
        %v2392 = vsel %vm2328, 3e+38, %v2005
        %v2393 = vsel %vm2329, 3e+38, %v2006
        %v2394 = vsel %vm2330, 3e+38, %v2007
        %v2395 = vsel %vm2331, 3e+38, %v2008
        %v2396 = vsel %vm2332, 3e+38, %v2009
        %v2397 = vsel %vm2333, 3e+38, %v2010
        %v2398 = vsel %vm2334, 3e+38, %v2011
        %v2399 = vsel %vm2335, 3e+38, %v2012
        %v2400 = vsel %vm2336, 3e+38, %v2013
        %v2401 = vsel %vm2337, 3e+38, %v2014
        %v2402 = vsel %vm2338, 3e+38, %v2015
        %v2403 = vsel %vm2339, 3e+38, %v2016
        %v2404 = vsel %vm2340, 3e+38, %v2017
        %v2405 = vsel %vm2341, 3e+38, %v2018
        %v2406 = vsel %vm2342, 3e+38, %v2019
        %v2407 = vsel %vm2343, 3e+38, %v2020
        %v2408 = vsel %vm2344, 3e+38, %v2021
        %vm2409 = vcmp.le.f32.partialorder %v2345, %v2346
        %v2410 = vsel %vm2409, %v2345, %v2346
        %v2411 = vsel %vm2409, %v2023, %v2024
        %2412 = vmin.index.xlane.f32.xlu0 %v2410
        %v2413 = vpop.xlane.xlu0 %2412
        %2414 = vset.pattern.permute.xlu0 %v2413
        %2415 = vperm.xlu0 %2414, %v2411
        %v2416 = vpop.permute.xlu0 %2415
        %vm2417 = vcmp.le.f32.partialorder %v2347, %v2348
        %v2418 = vsel %vm2417, %v2347, %v2348
        %v2419 = vsel %vm2417, %v2023, %v2024
        %2420 = vmin.index.xlane.f32.xlu0 %v2418
        %v2421 = vpop.xlane.xlu0 %2420
        %2422 = vset.pattern.permute.xlu0 %v2421
        %2423 = vperm.xlu0 %2422, %v2419
        %v2424 = vpop.permute.xlu0 %2423
        %vm2425 = vcmp.le.f32.partialorder %v2349, %v2350
        %v2426 = vsel %vm2425, %v2349, %v2350
        %v2427 = vsel %vm2425, %v2023, %v2024
        %2428 = vmin.index.xlane.f32.xlu0 %v2426
        %v2429 = vpop.xlane.xlu0 %2428
        %2430 = vset.pattern.permute.xlu0 %v2429
        %2431 = vperm.xlu0 %2430, %v2427
        %v2432 = vpop.permute.xlu0 %2431
        %vm2433 = vcmp.le.f32.partialorder %v2351, %v2352
        %v2434 = vsel %vm2433, %v2351, %v2352
        %v2435 = vsel %vm2433, %v2023, %v2024
        %2436 = vmin.index.xlane.f32.xlu0 %v2434
        %v2437 = vpop.xlane.xlu0 %2436
        %2438 = vset.pattern.permute.xlu0 %v2437
        %2439 = vperm.xlu0 %2438, %v2435
        %v2440 = vpop.permute.xlu0 %2439
        %vm2441 = vcmp.le.f32.partialorder %v2353, %v2354
        %v2442 = vsel %vm2441, %v2353, %v2354
        %v2443 = vsel %vm2441, %v2023, %v2024
        %2444 = vmin.index.xlane.f32.xlu0 %v2442
        %v2445 = vpop.xlane.xlu0 %2444
        %2446 = vset.pattern.permute.xlu0 %v2445
        %2447 = vperm.xlu0 %2446, %v2443
        %v2448 = vpop.permute.xlu0 %2447
        %vm2449 = vcmp.le.f32.partialorder %v2355, %v2356
        %v2450 = vsel %vm2449, %v2355, %v2356
        %v2451 = vsel %vm2449, %v2023, %v2024
        %2452 = vmin.index.xlane.f32.xlu0 %v2450
        %v2453 = vpop.xlane.xlu0 %2452
        %2454 = vset.pattern.permute.xlu0 %v2453
        %2455 = vperm.xlu0 %2454, %v2451
        %v2456 = vpop.permute.xlu0 %2455
        %vm2457 = vcmp.le.f32.partialorder %v2357, %v2358
        %v2458 = vsel %vm2457, %v2357, %v2358
        %v2459 = vsel %vm2457, %v2023, %v2024
        %2460 = vmin.index.xlane.f32.xlu0 %v2458
        %v2461 = vpop.xlane.xlu0 %2460
        %2462 = vset.pattern.permute.xlu0 %v2461
        %2463 = vperm.xlu0 %2462, %v2459
        %v2464 = vpop.permute.xlu0 %2463
        %vm2465 = vcmp.le.f32.partialorder %v2359, %v2360
        %v2466 = vsel %vm2465, %v2359, %v2360
        %v2467 = vsel %vm2465, %v2023, %v2024
        %2468 = vmin.index.xlane.f32.xlu0 %v2466
        %v2469 = vpop.xlane.xlu0 %2468
        %2470 = vset.pattern.permute.xlu0 %v2469
        %2471 = vperm.xlu0 %2470, %v2467
        %v2472 = vpop.permute.xlu0 %2471
        %vm2473 = vcmp.le.f32.partialorder %v2361, %v2362
        %v2474 = vsel %vm2473, %v2361, %v2362
        %v2475 = vsel %vm2473, %v2023, %v2024
        %2476 = vmin.index.xlane.f32.xlu0 %v2474
        %v2477 = vpop.xlane.xlu0 %2476
        %2478 = vset.pattern.permute.xlu0 %v2477
        %2479 = vperm.xlu0 %2478, %v2475
        %v2480 = vpop.permute.xlu0 %2479
        %vm2481 = vcmp.le.f32.partialorder %v2363, %v2364
        %v2482 = vsel %vm2481, %v2363, %v2364
        %v2483 = vsel %vm2481, %v2023, %v2024
        %2484 = vmin.index.xlane.f32.xlu0 %v2482
        %v2485 = vpop.xlane.xlu0 %2484
        %2486 = vset.pattern.permute.xlu0 %v2485
        %2487 = vperm.xlu0 %2486, %v2483
        %v2488 = vpop.permute.xlu0 %2487
        %vm2489 = vcmp.le.f32.partialorder %v2365, %v2366
        %v2490 = vsel %vm2489, %v2365, %v2366
        %v2491 = vsel %vm2489, %v2023, %v2024
        %2492 = vmin.index.xlane.f32.xlu0 %v2490
        %v2493 = vpop.xlane.xlu0 %2492
        %2494 = vset.pattern.permute.xlu0 %v2493
        %2495 = vperm.xlu0 %2494, %v2491
        %v2496 = vpop.permute.xlu0 %2495
        %vm2497 = vcmp.le.f32.partialorder %v2367, %v2368
        %v2498 = vsel %vm2497, %v2367, %v2368
        %v2499 = vsel %vm2497, %v2023, %v2024
        %2500 = vmin.index.xlane.f32.xlu0 %v2498
        %v2501 = vpop.xlane.xlu0 %2500
        %2502 = vset.pattern.permute.xlu0 %v2501
        %2503 = vperm.xlu0 %2502, %v2499
        %v2504 = vpop.permute.xlu0 %2503
        %vm2505 = vcmp.le.f32.partialorder %v2369, %v2370
        %v2506 = vsel %vm2505, %v2369, %v2370
        %v2507 = vsel %vm2505, %v2023, %v2024
        %2508 = vmin.index.xlane.f32.xlu0 %v2506
        %v2509 = vpop.xlane.xlu0 %2508
        %2510 = vset.pattern.permute.xlu0 %v2509
        %2511 = vperm.xlu0 %2510, %v2507
        %v2512 = vpop.permute.xlu0 %2511
        %vm2513 = vcmp.le.f32.partialorder %v2371, %v2372
        %v2514 = vsel %vm2513, %v2371, %v2372
        %v2515 = vsel %vm2513, %v2023, %v2024
        %2516 = vmin.index.xlane.f32.xlu0 %v2514
        %v2517 = vpop.xlane.xlu0 %2516
        %2518 = vset.pattern.permute.xlu0 %v2517
        %2519 = vperm.xlu0 %2518, %v2515
        %v2520 = vpop.permute.xlu0 %2519
        %vm2521 = vcmp.le.f32.partialorder %v2373, %v2374
        %v2522 = vsel %vm2521, %v2373, %v2374
        %v2523 = vsel %vm2521, %v2023, %v2024
        %2524 = vmin.index.xlane.f32.xlu0 %v2522
        %v2525 = vpop.xlane.xlu0 %2524
        %2526 = vset.pattern.permute.xlu0 %v2525
        %2527 = vperm.xlu0 %2526, %v2523
        %v2528 = vpop.permute.xlu0 %2527
        %vm2529 = vcmp.le.f32.partialorder %v2375, %v2376
        %v2530 = vsel %vm2529, %v2375, %v2376
        %v2531 = vsel %vm2529, %v2023, %v2024
        %2532 = vmin.index.xlane.f32.xlu0 %v2530
        %v2533 = vpop.xlane.xlu0 %2532
        %2534 = vset.pattern.permute.xlu0 %v2533
        %2535 = vperm.xlu0 %2534, %v2531
        %v2536 = vpop.permute.xlu0 %2535
        %vm2537 = vcmp.le.f32.partialorder %v2377, %v2378
        %v2538 = vsel %vm2537, %v2377, %v2378
        %v2539 = vsel %vm2537, %v2023, %v2024
        %2540 = vmin.index.xlane.f32.xlu0 %v2538
        %v2541 = vpop.xlane.xlu0 %2540
        %2542 = vset.pattern.permute.xlu0 %v2541
        %2543 = vperm.xlu0 %2542, %v2539
        %v2544 = vpop.permute.xlu0 %2543
        %vm2545 = vcmp.le.f32.partialorder %v2379, %v2380
        %v2546 = vsel %vm2545, %v2379, %v2380
        %v2547 = vsel %vm2545, %v2023, %v2024
        %2548 = vmin.index.xlane.f32.xlu0 %v2546
        %v2549 = vpop.xlane.xlu0 %2548
        %2550 = vset.pattern.permute.xlu0 %v2549
        %2551 = vperm.xlu0 %2550, %v2547
        %v2552 = vpop.permute.xlu0 %2551
        %vm2553 = vcmp.le.f32.partialorder %v2381, %v2382
        %v2554 = vsel %vm2553, %v2381, %v2382
        %v2555 = vsel %vm2553, %v2023, %v2024
        %2556 = vmin.index.xlane.f32.xlu0 %v2554
        %v2557 = vpop.xlane.xlu0 %2556
        %2558 = vset.pattern.permute.xlu0 %v2557
        %2559 = vperm.xlu0 %2558, %v2555
        %v2560 = vpop.permute.xlu0 %2559
        %vm2561 = vcmp.le.f32.partialorder %v2383, %v2384
        %v2562 = vsel %vm2561, %v2383, %v2384
        %v2563 = vsel %vm2561, %v2023, %v2024
        %2564 = vmin.index.xlane.f32.xlu0 %v2562
        %v2565 = vpop.xlane.xlu0 %2564
        %2566 = vset.pattern.permute.xlu0 %v2565
        %2567 = vperm.xlu0 %2566, %v2563
        %v2568 = vpop.permute.xlu0 %2567
        %vm2569 = vcmp.le.f32.partialorder %v2385, %v2386
        %v2570 = vsel %vm2569, %v2385, %v2386
        %v2571 = vsel %vm2569, %v2023, %v2024
        %2572 = vmin.index.xlane.f32.xlu0 %v2570
        %v2573 = vpop.xlane.xlu0 %2572
        %2574 = vset.pattern.permute.xlu0 %v2573
        %2575 = vperm.xlu0 %2574, %v2571
        %v2576 = vpop.permute.xlu0 %2575
        %vm2577 = vcmp.le.f32.partialorder %v2387, %v2388
        %v2578 = vsel %vm2577, %v2387, %v2388
        %v2579 = vsel %vm2577, %v2023, %v2024
        %2580 = vmin.index.xlane.f32.xlu0 %v2578
        %v2581 = vpop.xlane.xlu0 %2580
        %2582 = vset.pattern.permute.xlu0 %v2581
        %2583 = vperm.xlu0 %2582, %v2579
        %v2584 = vpop.permute.xlu0 %2583
        %vm2585 = vcmp.le.f32.partialorder %v2389, %v2390
        %v2586 = vsel %vm2585, %v2389, %v2390
        %v2587 = vsel %vm2585, %v2023, %v2024
        %2588 = vmin.index.xlane.f32.xlu0 %v2586
        %v2589 = vpop.xlane.xlu0 %2588
        %2590 = vset.pattern.permute.xlu0 %v2589
        %2591 = vperm.xlu0 %2590, %v2587
        %v2592 = vpop.permute.xlu0 %2591
        %vm2593 = vcmp.le.f32.partialorder %v2391, %v2392
        %v2594 = vsel %vm2593, %v2391, %v2392
        %v2595 = vsel %vm2593, %v2023, %v2024
        %2596 = vmin.index.xlane.f32.xlu0 %v2594
        %v2597 = vpop.xlane.xlu0 %2596
        %2598 = vset.pattern.permute.xlu0 %v2597
        %2599 = vperm.xlu0 %2598, %v2595
        %v2600 = vpop.permute.xlu0 %2599
        %vm2601 = vcmp.le.f32.partialorder %v2393, %v2394
        %v2602 = vsel %vm2601, %v2393, %v2394
        %v2603 = vsel %vm2601, %v2023, %v2024
        %2604 = vmin.index.xlane.f32.xlu0 %v2602
        %v2605 = vpop.xlane.xlu0 %2604
        %2606 = vset.pattern.permute.xlu0 %v2605
        %2607 = vperm.xlu0 %2606, %v2603
        %v2608 = vpop.permute.xlu0 %2607
        %vm2609 = vcmp.le.f32.partialorder %v2395, %v2396
        %v2610 = vsel %vm2609, %v2395, %v2396
        %v2611 = vsel %vm2609, %v2023, %v2024
        %2612 = vmin.index.xlane.f32.xlu0 %v2610
        %v2613 = vpop.xlane.xlu0 %2612
        %2614 = vset.pattern.permute.xlu0 %v2613
        %2615 = vperm.xlu0 %2614, %v2611
        %v2616 = vpop.permute.xlu0 %2615
        %vm2617 = vcmp.le.f32.partialorder %v2397, %v2398
        %v2618 = vsel %vm2617, %v2397, %v2398
        %v2619 = vsel %vm2617, %v2023, %v2024
        %2620 = vmin.index.xlane.f32.xlu0 %v2618
        %v2621 = vpop.xlane.xlu0 %2620
        %2622 = vset.pattern.permute.xlu0 %v2621
        %2623 = vperm.xlu0 %2622, %v2619
        %v2624 = vpop.permute.xlu0 %2623
        %vm2625 = vcmp.le.f32.partialorder %v2399, %v2400
        %v2626 = vsel %vm2625, %v2399, %v2400
        %v2627 = vsel %vm2625, %v2023, %v2024
        %2628 = vmin.index.xlane.f32.xlu0 %v2626
        %v2629 = vpop.xlane.xlu0 %2628
        %2630 = vset.pattern.permute.xlu0 %v2629
        %2631 = vperm.xlu0 %2630, %v2627
        %v2632 = vpop.permute.xlu0 %2631
        %vm2633 = vcmp.le.f32.partialorder %v2401, %v2402
        %v2634 = vsel %vm2633, %v2401, %v2402
        %v2635 = vsel %vm2633, %v2023, %v2024
        %2636 = vmin.index.xlane.f32.xlu0 %v2634
        %v2637 = vpop.xlane.xlu0 %2636
        %2638 = vset.pattern.permute.xlu0 %v2637
        %2639 = vperm.xlu0 %2638, %v2635
        %v2640 = vpop.permute.xlu0 %2639
        %vm2641 = vcmp.le.f32.partialorder %v2403, %v2404
        %v2642 = vsel %vm2641, %v2403, %v2404
        %v2643 = vsel %vm2641, %v2023, %v2024
        %2644 = vmin.index.xlane.f32.xlu0 %v2642
        %v2645 = vpop.xlane.xlu0 %2644
        %2646 = vset.pattern.permute.xlu0 %v2645
        %2647 = vperm.xlu0 %2646, %v2643
        %v2648 = vpop.permute.xlu0 %2647
        %vm2649 = vcmp.le.f32.partialorder %v2405, %v2406
        %v2650 = vsel %vm2649, %v2405, %v2406
        %v2651 = vsel %vm2649, %v2023, %v2024
        %2652 = vmin.index.xlane.f32.xlu0 %v2650
        %v2653 = vpop.xlane.xlu0 %2652
        %2654 = vset.pattern.permute.xlu0 %v2653
        %2655 = vperm.xlu0 %2654, %v2651
        %v2656 = vpop.permute.xlu0 %2655
        %vm2657 = vcmp.le.f32.partialorder %v2407, %v2408
        %v2658 = vsel %vm2657, %v2407, %v2408
        %v2659 = vsel %vm2657, %v2023, %v2024
        %2660 = vmin.index.xlane.f32.xlu0 %v2658
        %v2661 = vpop.xlane.xlu0 %2660
        %2662 = vset.pattern.permute.xlu0 %v2661
        %2663 = vperm.xlu0 %2662, %v2659
        %v2664 = vpop.permute.xlu0 %2663
        %vm2665 = vcmp.eq.s32.totalorder %v2023, %v2416
        %vm2666 = vcmp.eq.s32.totalorder %v2024, %v2416
        %vm2667 = vcmp.eq.s32.totalorder %v2023, %v2424
        %vm2668 = vcmp.eq.s32.totalorder %v2024, %v2424
        %vm2669 = vcmp.eq.s32.totalorder %v2023, %v2432
        %vm2670 = vcmp.eq.s32.totalorder %v2024, %v2432
        %vm2671 = vcmp.eq.s32.totalorder %v2023, %v2440
        %vm2672 = vcmp.eq.s32.totalorder %v2024, %v2440
        %vm2673 = vcmp.eq.s32.totalorder %v2023, %v2448
        %vm2674 = vcmp.eq.s32.totalorder %v2024, %v2448
        %vm2675 = vcmp.eq.s32.totalorder %v2023, %v2456
        %vm2676 = vcmp.eq.s32.totalorder %v2024, %v2456
        %vm2677 = vcmp.eq.s32.totalorder %v2023, %v2464
        %vm2678 = vcmp.eq.s32.totalorder %v2024, %v2464
        %vm2679 = vcmp.eq.s32.totalorder %v2023, %v2472
        %vm2680 = vcmp.eq.s32.totalorder %v2024, %v2472
        %vm2681 = vcmp.eq.s32.totalorder %v2023, %v2480
        %vm2682 = vcmp.eq.s32.totalorder %v2024, %v2480
        %vm2683 = vcmp.eq.s32.totalorder %v2023, %v2488
        %vm2684 = vcmp.eq.s32.totalorder %v2024, %v2488
        %vm2685 = vcmp.eq.s32.totalorder %v2023, %v2496
        %vm2686 = vcmp.eq.s32.totalorder %v2024, %v2496
        %vm2687 = vcmp.eq.s32.totalorder %v2023, %v2504
        %vm2688 = vcmp.eq.s32.totalorder %v2024, %v2504
        %vm2689 = vcmp.eq.s32.totalorder %v2023, %v2512
        %vm2690 = vcmp.eq.s32.totalorder %v2024, %v2512
        %vm2691 = vcmp.eq.s32.totalorder %v2023, %v2520
        %vm2692 = vcmp.eq.s32.totalorder %v2024, %v2520
        %vm2693 = vcmp.eq.s32.totalorder %v2023, %v2528
        %vm2694 = vcmp.eq.s32.totalorder %v2024, %v2528
        %vm2695 = vcmp.eq.s32.totalorder %v2023, %v2536
        %vm2696 = vcmp.eq.s32.totalorder %v2024, %v2536
        %vm2697 = vcmp.eq.s32.totalorder %v2023, %v2544
        %vm2698 = vcmp.eq.s32.totalorder %v2024, %v2544
        %vm2699 = vcmp.eq.s32.totalorder %v2023, %v2552
        %vm2700 = vcmp.eq.s32.totalorder %v2024, %v2552
        %vm2701 = vcmp.eq.s32.totalorder %v2023, %v2560
        %vm2702 = vcmp.eq.s32.totalorder %v2024, %v2560
        %vm2703 = vcmp.eq.s32.totalorder %v2023, %v2568
        %vm2704 = vcmp.eq.s32.totalorder %v2024, %v2568
        %vm2705 = vcmp.eq.s32.totalorder %v2023, %v2576
        %vm2706 = vcmp.eq.s32.totalorder %v2024, %v2576
        %vm2707 = vcmp.eq.s32.totalorder %v2023, %v2584
        %vm2708 = vcmp.eq.s32.totalorder %v2024, %v2584
        %vm2709 = vcmp.eq.s32.totalorder %v2023, %v2592
        %vm2710 = vcmp.eq.s32.totalorder %v2024, %v2592
        %vm2711 = vcmp.eq.s32.totalorder %v2023, %v2600
        %vm2712 = vcmp.eq.s32.totalorder %v2024, %v2600
        %vm2713 = vcmp.eq.s32.totalorder %v2023, %v2608
        %vm2714 = vcmp.eq.s32.totalorder %v2024, %v2608
        %vm2715 = vcmp.eq.s32.totalorder %v2023, %v2616
        %vm2716 = vcmp.eq.s32.totalorder %v2024, %v2616
        %vm2717 = vcmp.eq.s32.totalorder %v2023, %v2624
        %vm2718 = vcmp.eq.s32.totalorder %v2024, %v2624
        %vm2719 = vcmp.eq.s32.totalorder %v2023, %v2632
        %vm2720 = vcmp.eq.s32.totalorder %v2024, %v2632
        %vm2721 = vcmp.eq.s32.totalorder %v2023, %v2640
        %vm2722 = vcmp.eq.s32.totalorder %v2024, %v2640
        %vm2723 = vcmp.eq.s32.totalorder %v2023, %v2648
        %vm2724 = vcmp.eq.s32.totalorder %v2024, %v2648
        %vm2725 = vcmp.eq.s32.totalorder %v2023, %v2656
        %vm2726 = vcmp.eq.s32.totalorder %v2024, %v2656
        %vm2727 = vcmp.eq.s32.totalorder %v2023, %v2664
        %vm2728 = vcmp.eq.s32.totalorder %v2024, %v2664
        %v2729 = vsel %vm2665, 3e+38, %v2345
        %v2730 = vsel %vm2666, 3e+38, %v2346
        %v2731 = vsel %vm2667, 3e+38, %v2347
        %v2732 = vsel %vm2668, 3e+38, %v2348
        %v2733 = vsel %vm2669, 3e+38, %v2349
        %v2734 = vsel %vm2670, 3e+38, %v2350
        %v2735 = vsel %vm2671, 3e+38, %v2351
        %v2736 = vsel %vm2672, 3e+38, %v2352
        %v2737 = vsel %vm2673, 3e+38, %v2353
        %v2738 = vsel %vm2674, 3e+38, %v2354
        %v2739 = vsel %vm2675, 3e+38, %v2355
        %v2740 = vsel %vm2676, 3e+38, %v2356
        %v2741 = vsel %vm2677, 3e+38, %v2357
        %v2742 = vsel %vm2678, 3e+38, %v2358
        %v2743 = vsel %vm2679, 3e+38, %v2359
        %v2744 = vsel %vm2680, 3e+38, %v2360
        %v2745 = vsel %vm2681, 3e+38, %v2361
        %v2746 = vsel %vm2682, 3e+38, %v2362
        %v2747 = vsel %vm2683, 3e+38, %v2363
        %v2748 = vsel %vm2684, 3e+38, %v2364
        %v2749 = vsel %vm2685, 3e+38, %v2365
        %v2750 = vsel %vm2686, 3e+38, %v2366
        %v2751 = vsel %vm2687, 3e+38, %v2367
        %v2752 = vsel %vm2688, 3e+38, %v2368
        %v2753 = vsel %vm2689, 3e+38, %v2369
        %v2754 = vsel %vm2690, 3e+38, %v2370
        %v2755 = vsel %vm2691, 3e+38, %v2371
        %v2756 = vsel %vm2692, 3e+38, %v2372
        %v2757 = vsel %vm2693, 3e+38, %v2373
        %v2758 = vsel %vm2694, 3e+38, %v2374
        %v2759 = vsel %vm2695, 3e+38, %v2375
        %v2760 = vsel %vm2696, 3e+38, %v2376
        %v2761 = vsel %vm2697, 3e+38, %v2377
        %v2762 = vsel %vm2698, 3e+38, %v2378
        %v2763 = vsel %vm2699, 3e+38, %v2379
        %v2764 = vsel %vm2700, 3e+38, %v2380
        %v2765 = vsel %vm2701, 3e+38, %v2381
        %v2766 = vsel %vm2702, 3e+38, %v2382
        %v2767 = vsel %vm2703, 3e+38, %v2383
        %v2768 = vsel %vm2704, 3e+38, %v2384
        %v2769 = vsel %vm2705, 3e+38, %v2385
        %v2770 = vsel %vm2706, 3e+38, %v2386
        %v2771 = vsel %vm2707, 3e+38, %v2387
        %v2772 = vsel %vm2708, 3e+38, %v2388
        %v2773 = vsel %vm2709, 3e+38, %v2389
        %v2774 = vsel %vm2710, 3e+38, %v2390
        %v2775 = vsel %vm2711, 3e+38, %v2391
        %v2776 = vsel %vm2712, 3e+38, %v2392
        %v2777 = vsel %vm2713, 3e+38, %v2393
        %v2778 = vsel %vm2714, 3e+38, %v2394
        %v2779 = vsel %vm2715, 3e+38, %v2395
        %v2780 = vsel %vm2716, 3e+38, %v2396
        %v2781 = vsel %vm2717, 3e+38, %v2397
        %v2782 = vsel %vm2718, 3e+38, %v2398
        %v2783 = vsel %vm2719, 3e+38, %v2399
        %v2784 = vsel %vm2720, 3e+38, %v2400
        %v2785 = vsel %vm2721, 3e+38, %v2401
        %v2786 = vsel %vm2722, 3e+38, %v2402
        %v2787 = vsel %vm2723, 3e+38, %v2403
        %v2788 = vsel %vm2724, 3e+38, %v2404
        %v2789 = vsel %vm2725, 3e+38, %v2405
        %v2790 = vsel %vm2726, 3e+38, %v2406
        %v2791 = vsel %vm2727, 3e+38, %v2407
        %v2792 = vsel %vm2728, 3e+38, %v2408
        %vm2793 = vcmp.le.f32.partialorder %v2729, %v2730
        %v2794 = vsel %vm2793, %v2729, %v2730
        %v2795 = vsel %vm2793, %v2023, %v2024
        %2796 = vmin.index.xlane.f32.xlu0 %v2794
        %v2797 = vpop.xlane.xlu0 %2796
        %2798 = vset.pattern.permute.xlu0 %v2797
        %2799 = vperm.xlu0 %2798, %v2795
        %v2800 = vpop.permute.xlu0 %2799
        %vm2801 = vcmp.le.f32.partialorder %v2731, %v2732
        %v2802 = vsel %vm2801, %v2731, %v2732
        %v2803 = vsel %vm2801, %v2023, %v2024
        %2804 = vmin.index.xlane.f32.xlu0 %v2802
        %v2805 = vpop.xlane.xlu0 %2804
        %2806 = vset.pattern.permute.xlu0 %v2805
        %2807 = vperm.xlu0 %2806, %v2803
        %v2808 = vpop.permute.xlu0 %2807
        %vm2809 = vcmp.le.f32.partialorder %v2733, %v2734
        %v2810 = vsel %vm2809, %v2733, %v2734
        %v2811 = vsel %vm2809, %v2023, %v2024
        %2812 = vmin.index.xlane.f32.xlu0 %v2810
        %v2813 = vpop.xlane.xlu0 %2812
        %2814 = vset.pattern.permute.xlu0 %v2813
        %2815 = vperm.xlu0 %2814, %v2811
        %v2816 = vpop.permute.xlu0 %2815
        %vm2817 = vcmp.le.f32.partialorder %v2735, %v2736
        %v2818 = vsel %vm2817, %v2735, %v2736
        %v2819 = vsel %vm2817, %v2023, %v2024
        %2820 = vmin.index.xlane.f32.xlu0 %v2818
        %v2821 = vpop.xlane.xlu0 %2820
        %2822 = vset.pattern.permute.xlu0 %v2821
        %2823 = vperm.xlu0 %2822, %v2819
        %v2824 = vpop.permute.xlu0 %2823
        %vm2825 = vcmp.le.f32.partialorder %v2737, %v2738
        %v2826 = vsel %vm2825, %v2737, %v2738
        %v2827 = vsel %vm2825, %v2023, %v2024
        %2828 = vmin.index.xlane.f32.xlu0 %v2826
        %v2829 = vpop.xlane.xlu0 %2828
        %2830 = vset.pattern.permute.xlu0 %v2829
        %2831 = vperm.xlu0 %2830, %v2827
        %v2832 = vpop.permute.xlu0 %2831
        %vm2833 = vcmp.le.f32.partialorder %v2739, %v2740
        %v2834 = vsel %vm2833, %v2739, %v2740
        %v2835 = vsel %vm2833, %v2023, %v2024
        %2836 = vmin.index.xlane.f32.xlu0 %v2834
        %v2837 = vpop.xlane.xlu0 %2836
        %2838 = vset.pattern.permute.xlu0 %v2837
        %2839 = vperm.xlu0 %2838, %v2835
        %v2840 = vpop.permute.xlu0 %2839
        %vm2841 = vcmp.le.f32.partialorder %v2741, %v2742
        %v2842 = vsel %vm2841, %v2741, %v2742
        %v2843 = vsel %vm2841, %v2023, %v2024
        %2844 = vmin.index.xlane.f32.xlu0 %v2842
        %v2845 = vpop.xlane.xlu0 %2844
        %2846 = vset.pattern.permute.xlu0 %v2845
        %2847 = vperm.xlu0 %2846, %v2843
        %v2848 = vpop.permute.xlu0 %2847
        %vm2849 = vcmp.le.f32.partialorder %v2743, %v2744
        %v2850 = vsel %vm2849, %v2743, %v2744
        %v2851 = vsel %vm2849, %v2023, %v2024
        %2852 = vmin.index.xlane.f32.xlu0 %v2850
        %v2853 = vpop.xlane.xlu0 %2852
        %2854 = vset.pattern.permute.xlu0 %v2853
        %2855 = vperm.xlu0 %2854, %v2851
        %v2856 = vpop.permute.xlu0 %2855
        %vm2857 = vcmp.le.f32.partialorder %v2745, %v2746
        %v2858 = vsel %vm2857, %v2745, %v2746
        %v2859 = vsel %vm2857, %v2023, %v2024
        %2860 = vmin.index.xlane.f32.xlu0 %v2858
        %v2861 = vpop.xlane.xlu0 %2860
        %2862 = vset.pattern.permute.xlu0 %v2861
        %2863 = vperm.xlu0 %2862, %v2859
        %v2864 = vpop.permute.xlu0 %2863
        %vm2865 = vcmp.le.f32.partialorder %v2747, %v2748
        %v2866 = vsel %vm2865, %v2747, %v2748
        %v2867 = vsel %vm2865, %v2023, %v2024
        %2868 = vmin.index.xlane.f32.xlu0 %v2866
        %v2869 = vpop.xlane.xlu0 %2868
        %2870 = vset.pattern.permute.xlu0 %v2869
        %2871 = vperm.xlu0 %2870, %v2867
        %v2872 = vpop.permute.xlu0 %2871
        %vm2873 = vcmp.le.f32.partialorder %v2749, %v2750
        %v2874 = vsel %vm2873, %v2749, %v2750
        %v2875 = vsel %vm2873, %v2023, %v2024
        %2876 = vmin.index.xlane.f32.xlu0 %v2874
        %v2877 = vpop.xlane.xlu0 %2876
        %2878 = vset.pattern.permute.xlu0 %v2877
        %2879 = vperm.xlu0 %2878, %v2875
        %v2880 = vpop.permute.xlu0 %2879
        %vm2881 = vcmp.le.f32.partialorder %v2751, %v2752
        %v2882 = vsel %vm2881, %v2751, %v2752
        %v2883 = vsel %vm2881, %v2023, %v2024
        %2884 = vmin.index.xlane.f32.xlu0 %v2882
        %v2885 = vpop.xlane.xlu0 %2884
        %2886 = vset.pattern.permute.xlu0 %v2885
        %2887 = vperm.xlu0 %2886, %v2883
        %v2888 = vpop.permute.xlu0 %2887
        %vm2889 = vcmp.le.f32.partialorder %v2753, %v2754
        %v2890 = vsel %vm2889, %v2753, %v2754
        %v2891 = vsel %vm2889, %v2023, %v2024
        %2892 = vmin.index.xlane.f32.xlu0 %v2890
        %v2893 = vpop.xlane.xlu0 %2892
        %2894 = vset.pattern.permute.xlu0 %v2893
        %2895 = vperm.xlu0 %2894, %v2891
        %v2896 = vpop.permute.xlu0 %2895
        %vm2897 = vcmp.le.f32.partialorder %v2755, %v2756
        %v2898 = vsel %vm2897, %v2755, %v2756
        %v2899 = vsel %vm2897, %v2023, %v2024
        %2900 = vmin.index.xlane.f32.xlu0 %v2898
        %v2901 = vpop.xlane.xlu0 %2900
        %2902 = vset.pattern.permute.xlu0 %v2901
        %2903 = vperm.xlu0 %2902, %v2899
        %v2904 = vpop.permute.xlu0 %2903
        %vm2905 = vcmp.le.f32.partialorder %v2757, %v2758
        %v2906 = vsel %vm2905, %v2757, %v2758
        %v2907 = vsel %vm2905, %v2023, %v2024
        %2908 = vmin.index.xlane.f32.xlu0 %v2906
        %v2909 = vpop.xlane.xlu0 %2908
        %2910 = vset.pattern.permute.xlu0 %v2909
        %2911 = vperm.xlu0 %2910, %v2907
        %v2912 = vpop.permute.xlu0 %2911
        %vm2913 = vcmp.le.f32.partialorder %v2759, %v2760
        %v2914 = vsel %vm2913, %v2759, %v2760
        %v2915 = vsel %vm2913, %v2023, %v2024
        %2916 = vmin.index.xlane.f32.xlu0 %v2914
        %v2917 = vpop.xlane.xlu0 %2916
        %2918 = vset.pattern.permute.xlu0 %v2917
        %2919 = vperm.xlu0 %2918, %v2915
        %v2920 = vpop.permute.xlu0 %2919
        %vm2921 = vcmp.le.f32.partialorder %v2761, %v2762
        %v2922 = vsel %vm2921, %v2761, %v2762
        %v2923 = vsel %vm2921, %v2023, %v2024
        %2924 = vmin.index.xlane.f32.xlu0 %v2922
        %v2925 = vpop.xlane.xlu0 %2924
        %2926 = vset.pattern.permute.xlu0 %v2925
        %2927 = vperm.xlu0 %2926, %v2923
        %v2928 = vpop.permute.xlu0 %2927
        %vm2929 = vcmp.le.f32.partialorder %v2763, %v2764
        %v2930 = vsel %vm2929, %v2763, %v2764
        %v2931 = vsel %vm2929, %v2023, %v2024
        %2932 = vmin.index.xlane.f32.xlu0 %v2930
        %v2933 = vpop.xlane.xlu0 %2932
        %2934 = vset.pattern.permute.xlu0 %v2933
        %2935 = vperm.xlu0 %2934, %v2931
        %v2936 = vpop.permute.xlu0 %2935
        %vm2937 = vcmp.le.f32.partialorder %v2765, %v2766
        %v2938 = vsel %vm2937, %v2765, %v2766
        %v2939 = vsel %vm2937, %v2023, %v2024
        %2940 = vmin.index.xlane.f32.xlu0 %v2938
        %v2941 = vpop.xlane.xlu0 %2940
        %2942 = vset.pattern.permute.xlu0 %v2941
        %2943 = vperm.xlu0 %2942, %v2939
        %v2944 = vpop.permute.xlu0 %2943
        %vm2945 = vcmp.le.f32.partialorder %v2767, %v2768
        %v2946 = vsel %vm2945, %v2767, %v2768
        %v2947 = vsel %vm2945, %v2023, %v2024
        %2948 = vmin.index.xlane.f32.xlu0 %v2946
        %v2949 = vpop.xlane.xlu0 %2948
        %2950 = vset.pattern.permute.xlu0 %v2949
        %2951 = vperm.xlu0 %2950, %v2947
        %v2952 = vpop.permute.xlu0 %2951
        %vm2953 = vcmp.le.f32.partialorder %v2769, %v2770
        %v2954 = vsel %vm2953, %v2769, %v2770
        %v2955 = vsel %vm2953, %v2023, %v2024
        %2956 = vmin.index.xlane.f32.xlu0 %v2954
        %v2957 = vpop.xlane.xlu0 %2956
        %2958 = vset.pattern.permute.xlu0 %v2957
        %2959 = vperm.xlu0 %2958, %v2955
        %v2960 = vpop.permute.xlu0 %2959
        %vm2961 = vcmp.le.f32.partialorder %v2771, %v2772
        %v2962 = vsel %vm2961, %v2771, %v2772
        %v2963 = vsel %vm2961, %v2023, %v2024
        %2964 = vmin.index.xlane.f32.xlu0 %v2962
        %v2965 = vpop.xlane.xlu0 %2964
        %2966 = vset.pattern.permute.xlu0 %v2965
        %2967 = vperm.xlu0 %2966, %v2963
        %v2968 = vpop.permute.xlu0 %2967
        %vm2969 = vcmp.le.f32.partialorder %v2773, %v2774
        %v2970 = vsel %vm2969, %v2773, %v2774
        %v2971 = vsel %vm2969, %v2023, %v2024
        %2972 = vmin.index.xlane.f32.xlu0 %v2970
        %v2973 = vpop.xlane.xlu0 %2972
        %2974 = vset.pattern.permute.xlu0 %v2973
        %2975 = vperm.xlu0 %2974, %v2971
        %v2976 = vpop.permute.xlu0 %2975
        %vm2977 = vcmp.le.f32.partialorder %v2775, %v2776
        %v2978 = vsel %vm2977, %v2775, %v2776
        %v2979 = vsel %vm2977, %v2023, %v2024
        %2980 = vmin.index.xlane.f32.xlu0 %v2978
        %v2981 = vpop.xlane.xlu0 %2980
        %2982 = vset.pattern.permute.xlu0 %v2981
        %2983 = vperm.xlu0 %2982, %v2979
        %v2984 = vpop.permute.xlu0 %2983
        %vm2985 = vcmp.le.f32.partialorder %v2777, %v2778
        %v2986 = vsel %vm2985, %v2777, %v2778
        %v2987 = vsel %vm2985, %v2023, %v2024
        %2988 = vmin.index.xlane.f32.xlu0 %v2986
        %v2989 = vpop.xlane.xlu0 %2988
        %2990 = vset.pattern.permute.xlu0 %v2989
        %2991 = vperm.xlu0 %2990, %v2987
        %v2992 = vpop.permute.xlu0 %2991
        %vm2993 = vcmp.le.f32.partialorder %v2779, %v2780
        %v2994 = vsel %vm2993, %v2779, %v2780
        %v2995 = vsel %vm2993, %v2023, %v2024
        %2996 = vmin.index.xlane.f32.xlu0 %v2994
        %v2997 = vpop.xlane.xlu0 %2996
        %2998 = vset.pattern.permute.xlu0 %v2997
        %2999 = vperm.xlu0 %2998, %v2995
        %v3000 = vpop.permute.xlu0 %2999
        %vm3001 = vcmp.le.f32.partialorder %v2781, %v2782
        %v3002 = vsel %vm3001, %v2781, %v2782
        %v3003 = vsel %vm3001, %v2023, %v2024
        %3004 = vmin.index.xlane.f32.xlu0 %v3002
        %v3005 = vpop.xlane.xlu0 %3004
        %3006 = vset.pattern.permute.xlu0 %v3005
        %3007 = vperm.xlu0 %3006, %v3003
        %v3008 = vpop.permute.xlu0 %3007
        %vm3009 = vcmp.le.f32.partialorder %v2783, %v2784
        %v3010 = vsel %vm3009, %v2783, %v2784
        %v3011 = vsel %vm3009, %v2023, %v2024
        %3012 = vmin.index.xlane.f32.xlu0 %v3010
        %v3013 = vpop.xlane.xlu0 %3012
        %3014 = vset.pattern.permute.xlu0 %v3013
        %3015 = vperm.xlu0 %3014, %v3011
        %v3016 = vpop.permute.xlu0 %3015
        %vm3017 = vcmp.le.f32.partialorder %v2785, %v2786
        %v3018 = vsel %vm3017, %v2785, %v2786
        %v3019 = vsel %vm3017, %v2023, %v2024
        %3020 = vmin.index.xlane.f32.xlu0 %v3018
        %v3021 = vpop.xlane.xlu0 %3020
        %3022 = vset.pattern.permute.xlu0 %v3021
        %3023 = vperm.xlu0 %3022, %v3019
        %v3024 = vpop.permute.xlu0 %3023
        %vm3025 = vcmp.le.f32.partialorder %v2787, %v2788
        %v3026 = vsel %vm3025, %v2787, %v2788
        %v3027 = vsel %vm3025, %v2023, %v2024
        %3028 = vmin.index.xlane.f32.xlu0 %v3026
        %v3029 = vpop.xlane.xlu0 %3028
        %3030 = vset.pattern.permute.xlu0 %v3029
        %3031 = vperm.xlu0 %3030, %v3027
        %v3032 = vpop.permute.xlu0 %3031
        %vm3033 = vcmp.le.f32.partialorder %v2789, %v2790
        %v3034 = vsel %vm3033, %v2789, %v2790
        %v3035 = vsel %vm3033, %v2023, %v2024
        %3036 = vmin.index.xlane.f32.xlu0 %v3034
        %v3037 = vpop.xlane.xlu0 %3036
        %3038 = vset.pattern.permute.xlu0 %v3037
        %3039 = vperm.xlu0 %3038, %v3035
        %v3040 = vpop.permute.xlu0 %3039
        %vm3041 = vcmp.le.f32.partialorder %v2791, %v2792
        %v3042 = vsel %vm3041, %v2791, %v2792
        %v3043 = vsel %vm3041, %v2023, %v2024
        %3044 = vmin.index.xlane.f32.xlu0 %v3042
        %v3045 = vpop.xlane.xlu0 %3044
        %3046 = vset.pattern.permute.xlu0 %v3045
        %3047 = vperm.xlu0 %3046, %v3043
        %v3048 = vpop.permute.xlu0 %3047
        %vm3049 = vcmp.eq.s32.totalorder %v2023, %v2800
        %vm3050 = vcmp.eq.s32.totalorder %v2024, %v2800
        %vm3051 = vcmp.eq.s32.totalorder %v2023, %v2808
        %vm3052 = vcmp.eq.s32.totalorder %v2024, %v2808
        %vm3053 = vcmp.eq.s32.totalorder %v2023, %v2816
        %vm3054 = vcmp.eq.s32.totalorder %v2024, %v2816
        %vm3055 = vcmp.eq.s32.totalorder %v2023, %v2824
        %vm3056 = vcmp.eq.s32.totalorder %v2024, %v2824
        %vm3057 = vcmp.eq.s32.totalorder %v2023, %v2832
        %vm3058 = vcmp.eq.s32.totalorder %v2024, %v2832
        %vm3059 = vcmp.eq.s32.totalorder %v2023, %v2840
        %vm3060 = vcmp.eq.s32.totalorder %v2024, %v2840
        %vm3061 = vcmp.eq.s32.totalorder %v2023, %v2848
        %vm3062 = vcmp.eq.s32.totalorder %v2024, %v2848
        %vm3063 = vcmp.eq.s32.totalorder %v2023, %v2856
        %vm3064 = vcmp.eq.s32.totalorder %v2024, %v2856
        %vm3065 = vcmp.eq.s32.totalorder %v2023, %v2864
        %vm3066 = vcmp.eq.s32.totalorder %v2024, %v2864
        %vm3067 = vcmp.eq.s32.totalorder %v2023, %v2872
        %vm3068 = vcmp.eq.s32.totalorder %v2024, %v2872
        %vm3069 = vcmp.eq.s32.totalorder %v2023, %v2880
        %vm3070 = vcmp.eq.s32.totalorder %v2024, %v2880
        %vm3071 = vcmp.eq.s32.totalorder %v2023, %v2888
        %vm3072 = vcmp.eq.s32.totalorder %v2024, %v2888
        %vm3073 = vcmp.eq.s32.totalorder %v2023, %v2896
        %vm3074 = vcmp.eq.s32.totalorder %v2024, %v2896
        %vm3075 = vcmp.eq.s32.totalorder %v2023, %v2904
        %vm3076 = vcmp.eq.s32.totalorder %v2024, %v2904
        %vm3077 = vcmp.eq.s32.totalorder %v2023, %v2912
        %vm3078 = vcmp.eq.s32.totalorder %v2024, %v2912
        %vm3079 = vcmp.eq.s32.totalorder %v2023, %v2920
        %vm3080 = vcmp.eq.s32.totalorder %v2024, %v2920
        %vm3081 = vcmp.eq.s32.totalorder %v2023, %v2928
        %vm3082 = vcmp.eq.s32.totalorder %v2024, %v2928
        %vm3083 = vcmp.eq.s32.totalorder %v2023, %v2936
        %vm3084 = vcmp.eq.s32.totalorder %v2024, %v2936
        %vm3085 = vcmp.eq.s32.totalorder %v2023, %v2944
        %vm3086 = vcmp.eq.s32.totalorder %v2024, %v2944
        %vm3087 = vcmp.eq.s32.totalorder %v2023, %v2952
        %vm3088 = vcmp.eq.s32.totalorder %v2024, %v2952
        %vm3089 = vcmp.eq.s32.totalorder %v2023, %v2960
        %vm3090 = vcmp.eq.s32.totalorder %v2024, %v2960
        %vm3091 = vcmp.eq.s32.totalorder %v2023, %v2968
        %vm3092 = vcmp.eq.s32.totalorder %v2024, %v2968
        %vm3093 = vcmp.eq.s32.totalorder %v2023, %v2976
        %vm3094 = vcmp.eq.s32.totalorder %v2024, %v2976
        %vm3095 = vcmp.eq.s32.totalorder %v2023, %v2984
        %vm3096 = vcmp.eq.s32.totalorder %v2024, %v2984
        %vm3097 = vcmp.eq.s32.totalorder %v2023, %v2992
        %vm3098 = vcmp.eq.s32.totalorder %v2024, %v2992
        %vm3099 = vcmp.eq.s32.totalorder %v2023, %v3000
        %vm3100 = vcmp.eq.s32.totalorder %v2024, %v3000
        %vm3101 = vcmp.eq.s32.totalorder %v2023, %v3008
        %vm3102 = vcmp.eq.s32.totalorder %v2024, %v3008
        %vm3103 = vcmp.eq.s32.totalorder %v2023, %v3016
        %vm3104 = vcmp.eq.s32.totalorder %v2024, %v3016
        %vm3105 = vcmp.eq.s32.totalorder %v2023, %v3024
        %vm3106 = vcmp.eq.s32.totalorder %v2024, %v3024
        %vm3107 = vcmp.eq.s32.totalorder %v2023, %v3032
        %vm3108 = vcmp.eq.s32.totalorder %v2024, %v3032
        %vm3109 = vcmp.eq.s32.totalorder %v2023, %v3040
        %vm3110 = vcmp.eq.s32.totalorder %v2024, %v3040
        %vm3111 = vcmp.eq.s32.totalorder %v2023, %v3048
        %vm3112 = vcmp.eq.s32.totalorder %v2024, %v3048
        %v3113 = vsel %vm3049, 3e+38, %v2729
        %v3114 = vsel %vm3050, 3e+38, %v2730
        %v3115 = vsel %vm3051, 3e+38, %v2731
        %v3116 = vsel %vm3052, 3e+38, %v2732
        %v3117 = vsel %vm3053, 3e+38, %v2733
        %v3118 = vsel %vm3054, 3e+38, %v2734
        %v3119 = vsel %vm3055, 3e+38, %v2735
        %v3120 = vsel %vm3056, 3e+38, %v2736
        %v3121 = vsel %vm3057, 3e+38, %v2737
        %v3122 = vsel %vm3058, 3e+38, %v2738
        %v3123 = vsel %vm3059, 3e+38, %v2739
        %v3124 = vsel %vm3060, 3e+38, %v2740
        %v3125 = vsel %vm3061, 3e+38, %v2741
        %v3126 = vsel %vm3062, 3e+38, %v2742
        %v3127 = vsel %vm3063, 3e+38, %v2743
        %v3128 = vsel %vm3064, 3e+38, %v2744
        %v3129 = vsel %vm3065, 3e+38, %v2745
        %v3130 = vsel %vm3066, 3e+38, %v2746
        %v3131 = vsel %vm3067, 3e+38, %v2747
        %v3132 = vsel %vm3068, 3e+38, %v2748
        %v3133 = vsel %vm3069, 3e+38, %v2749
        %v3134 = vsel %vm3070, 3e+38, %v2750
        %v3135 = vsel %vm3071, 3e+38, %v2751
        %v3136 = vsel %vm3072, 3e+38, %v2752
        %v3137 = vsel %vm3073, 3e+38, %v2753
        %v3138 = vsel %vm3074, 3e+38, %v2754
        %v3139 = vsel %vm3075, 3e+38, %v2755
        %v3140 = vsel %vm3076, 3e+38, %v2756
        %v3141 = vsel %vm3077, 3e+38, %v2757
        %v3142 = vsel %vm3078, 3e+38, %v2758
        %v3143 = vsel %vm3079, 3e+38, %v2759
        %v3144 = vsel %vm3080, 3e+38, %v2760
        %v3145 = vsel %vm3081, 3e+38, %v2761
        %v3146 = vsel %vm3082, 3e+38, %v2762
        %v3147 = vsel %vm3083, 3e+38, %v2763
        %v3148 = vsel %vm3084, 3e+38, %v2764
        %v3149 = vsel %vm3085, 3e+38, %v2765
        %v3150 = vsel %vm3086, 3e+38, %v2766
        %v3151 = vsel %vm3087, 3e+38, %v2767
        %v3152 = vsel %vm3088, 3e+38, %v2768
        %v3153 = vsel %vm3089, 3e+38, %v2769
        %v3154 = vsel %vm3090, 3e+38, %v2770
        %v3155 = vsel %vm3091, 3e+38, %v2771
        %v3156 = vsel %vm3092, 3e+38, %v2772
        %v3157 = vsel %vm3093, 3e+38, %v2773
        %v3158 = vsel %vm3094, 3e+38, %v2774
        %v3159 = vsel %vm3095, 3e+38, %v2775
        %v3160 = vsel %vm3096, 3e+38, %v2776
        %v3161 = vsel %vm3097, 3e+38, %v2777
        %v3162 = vsel %vm3098, 3e+38, %v2778
        %v3163 = vsel %vm3099, 3e+38, %v2779
        %v3164 = vsel %vm3100, 3e+38, %v2780
        %v3165 = vsel %vm3101, 3e+38, %v2781
        %v3166 = vsel %vm3102, 3e+38, %v2782
        %v3167 = vsel %vm3103, 3e+38, %v2783
        %v3168 = vsel %vm3104, 3e+38, %v2784
        %v3169 = vsel %vm3105, 3e+38, %v2785
        %v3170 = vsel %vm3106, 3e+38, %v2786
        %v3171 = vsel %vm3107, 3e+38, %v2787
        %v3172 = vsel %vm3108, 3e+38, %v2788
        %v3173 = vsel %vm3109, 3e+38, %v2789
        %v3174 = vsel %vm3110, 3e+38, %v2790
        %v3175 = vsel %vm3111, 3e+38, %v2791
        %v3176 = vsel %vm3112, 3e+38, %v2792
        %vm3177 = vcmp.le.f32.partialorder %v3113, %v3114
        %v3178 = vsel %vm3177, %v3113, %v3114
        %v3179 = vsel %vm3177, %v2023, %v2024
        %3180 = vmin.index.xlane.f32.xlu0 %v3178
        %v3181 = vpop.xlane.xlu0 %3180
        %3182 = vset.pattern.permute.xlu0 %v3181
        %3183 = vperm.xlu0 %3182, %v3179
        %v3184 = vpop.permute.xlu0 %3183
        %vm3185 = vcmp.le.f32.partialorder %v3115, %v3116
        %v3186 = vsel %vm3185, %v3115, %v3116
        %v3187 = vsel %vm3185, %v2023, %v2024
        %3188 = vmin.index.xlane.f32.xlu0 %v3186
        %v3189 = vpop.xlane.xlu0 %3188
        %3190 = vset.pattern.permute.xlu0 %v3189
        %3191 = vperm.xlu0 %3190, %v3187
        %v3192 = vpop.permute.xlu0 %3191
        %vm3193 = vcmp.le.f32.partialorder %v3117, %v3118
        %v3194 = vsel %vm3193, %v3117, %v3118
        %v3195 = vsel %vm3193, %v2023, %v2024
        %3196 = vmin.index.xlane.f32.xlu0 %v3194
        %v3197 = vpop.xlane.xlu0 %3196
        %3198 = vset.pattern.permute.xlu0 %v3197
        %3199 = vperm.xlu0 %3198, %v3195
        %v3200 = vpop.permute.xlu0 %3199
        %vm3201 = vcmp.le.f32.partialorder %v3119, %v3120
        %v3202 = vsel %vm3201, %v3119, %v3120
        %v3203 = vsel %vm3201, %v2023, %v2024
        %3204 = vmin.index.xlane.f32.xlu0 %v3202
        %v3205 = vpop.xlane.xlu0 %3204
        %3206 = vset.pattern.permute.xlu0 %v3205
        %3207 = vperm.xlu0 %3206, %v3203
        %v3208 = vpop.permute.xlu0 %3207
        %vm3209 = vcmp.le.f32.partialorder %v3121, %v3122
        %v3210 = vsel %vm3209, %v3121, %v3122
        %v3211 = vsel %vm3209, %v2023, %v2024
        %3212 = vmin.index.xlane.f32.xlu0 %v3210
        %v3213 = vpop.xlane.xlu0 %3212
        %3214 = vset.pattern.permute.xlu0 %v3213
        %3215 = vperm.xlu0 %3214, %v3211
        %v3216 = vpop.permute.xlu0 %3215
        %vm3217 = vcmp.le.f32.partialorder %v3123, %v3124
        %v3218 = vsel %vm3217, %v3123, %v3124
        %v3219 = vsel %vm3217, %v2023, %v2024
        %3220 = vmin.index.xlane.f32.xlu0 %v3218
        %v3221 = vpop.xlane.xlu0 %3220
        %3222 = vset.pattern.permute.xlu0 %v3221
        %3223 = vperm.xlu0 %3222, %v3219
        %v3224 = vpop.permute.xlu0 %3223
        %vm3225 = vcmp.le.f32.partialorder %v3125, %v3126
        %v3226 = vsel %vm3225, %v3125, %v3126
        %v3227 = vsel %vm3225, %v2023, %v2024
        %3228 = vmin.index.xlane.f32.xlu0 %v3226
        %v3229 = vpop.xlane.xlu0 %3228
        %3230 = vset.pattern.permute.xlu0 %v3229
        %3231 = vperm.xlu0 %3230, %v3227
        %v3232 = vpop.permute.xlu0 %3231
        %vm3233 = vcmp.le.f32.partialorder %v3127, %v3128
        %v3234 = vsel %vm3233, %v3127, %v3128
        %v3235 = vsel %vm3233, %v2023, %v2024
        %3236 = vmin.index.xlane.f32.xlu0 %v3234
        %v3237 = vpop.xlane.xlu0 %3236
        %3238 = vset.pattern.permute.xlu0 %v3237
        %3239 = vperm.xlu0 %3238, %v3235
        %v3240 = vpop.permute.xlu0 %3239
        %vm3241 = vcmp.le.f32.partialorder %v3129, %v3130
        %v3242 = vsel %vm3241, %v3129, %v3130
        %v3243 = vsel %vm3241, %v2023, %v2024
        %3244 = vmin.index.xlane.f32.xlu0 %v3242
        %v3245 = vpop.xlane.xlu0 %3244
        %3246 = vset.pattern.permute.xlu0 %v3245
        %3247 = vperm.xlu0 %3246, %v3243
        %v3248 = vpop.permute.xlu0 %3247
        %vm3249 = vcmp.le.f32.partialorder %v3131, %v3132
        %v3250 = vsel %vm3249, %v3131, %v3132
        %v3251 = vsel %vm3249, %v2023, %v2024
        %3252 = vmin.index.xlane.f32.xlu0 %v3250
        %v3253 = vpop.xlane.xlu0 %3252
        %3254 = vset.pattern.permute.xlu0 %v3253
        %3255 = vperm.xlu0 %3254, %v3251
        %v3256 = vpop.permute.xlu0 %3255
        %vm3257 = vcmp.le.f32.partialorder %v3133, %v3134
        %v3258 = vsel %vm3257, %v3133, %v3134
        %v3259 = vsel %vm3257, %v2023, %v2024
        %3260 = vmin.index.xlane.f32.xlu0 %v3258
        %v3261 = vpop.xlane.xlu0 %3260
        %3262 = vset.pattern.permute.xlu0 %v3261
        %3263 = vperm.xlu0 %3262, %v3259
        %v3264 = vpop.permute.xlu0 %3263
        %vm3265 = vcmp.le.f32.partialorder %v3135, %v3136
        %v3266 = vsel %vm3265, %v3135, %v3136
        %v3267 = vsel %vm3265, %v2023, %v2024
        %3268 = vmin.index.xlane.f32.xlu0 %v3266
        %v3269 = vpop.xlane.xlu0 %3268
        %3270 = vset.pattern.permute.xlu0 %v3269
        %3271 = vperm.xlu0 %3270, %v3267
        %v3272 = vpop.permute.xlu0 %3271
        %vm3273 = vcmp.le.f32.partialorder %v3137, %v3138
        %v3274 = vsel %vm3273, %v3137, %v3138
        %v3275 = vsel %vm3273, %v2023, %v2024
        %3276 = vmin.index.xlane.f32.xlu0 %v3274
        %v3277 = vpop.xlane.xlu0 %3276
        %3278 = vset.pattern.permute.xlu0 %v3277
        %3279 = vperm.xlu0 %3278, %v3275
        %v3280 = vpop.permute.xlu0 %3279
        %vm3281 = vcmp.le.f32.partialorder %v3139, %v3140
        %v3282 = vsel %vm3281, %v3139, %v3140
        %v3283 = vsel %vm3281, %v2023, %v2024
        %3284 = vmin.index.xlane.f32.xlu0 %v3282
        %v3285 = vpop.xlane.xlu0 %3284
        %3286 = vset.pattern.permute.xlu0 %v3285
        %3287 = vperm.xlu0 %3286, %v3283
        %v3288 = vpop.permute.xlu0 %3287
        %vm3289 = vcmp.le.f32.partialorder %v3141, %v3142
        %v3290 = vsel %vm3289, %v3141, %v3142
        %v3291 = vsel %vm3289, %v2023, %v2024
        %3292 = vmin.index.xlane.f32.xlu0 %v3290
        %v3293 = vpop.xlane.xlu0 %3292
        %3294 = vset.pattern.permute.xlu0 %v3293
        %3295 = vperm.xlu0 %3294, %v3291
        %v3296 = vpop.permute.xlu0 %3295
        %vm3297 = vcmp.le.f32.partialorder %v3143, %v3144
        %v3298 = vsel %vm3297, %v3143, %v3144
        %v3299 = vsel %vm3297, %v2023, %v2024
        %3300 = vmin.index.xlane.f32.xlu0 %v3298
        %v3301 = vpop.xlane.xlu0 %3300
        %3302 = vset.pattern.permute.xlu0 %v3301
        %3303 = vperm.xlu0 %3302, %v3299
        %v3304 = vpop.permute.xlu0 %3303
        %vm3305 = vcmp.le.f32.partialorder %v3145, %v3146
        %v3306 = vsel %vm3305, %v3145, %v3146
        %v3307 = vsel %vm3305, %v2023, %v2024
        %3308 = vmin.index.xlane.f32.xlu0 %v3306
        %v3309 = vpop.xlane.xlu0 %3308
        %3310 = vset.pattern.permute.xlu0 %v3309
        %3311 = vperm.xlu0 %3310, %v3307
        %v3312 = vpop.permute.xlu0 %3311
        %vm3313 = vcmp.le.f32.partialorder %v3147, %v3148
        %v3314 = vsel %vm3313, %v3147, %v3148
        %v3315 = vsel %vm3313, %v2023, %v2024
        %3316 = vmin.index.xlane.f32.xlu0 %v3314
        %v3317 = vpop.xlane.xlu0 %3316
        %3318 = vset.pattern.permute.xlu0 %v3317
        %3319 = vperm.xlu0 %3318, %v3315
        %v3320 = vpop.permute.xlu0 %3319
        %vm3321 = vcmp.le.f32.partialorder %v3149, %v3150
        %v3322 = vsel %vm3321, %v3149, %v3150
        %v3323 = vsel %vm3321, %v2023, %v2024
        %3324 = vmin.index.xlane.f32.xlu0 %v3322
        %v3325 = vpop.xlane.xlu0 %3324
        %3326 = vset.pattern.permute.xlu0 %v3325
        %3327 = vperm.xlu0 %3326, %v3323
        %v3328 = vpop.permute.xlu0 %3327
        %vm3329 = vcmp.le.f32.partialorder %v3151, %v3152
        %v3330 = vsel %vm3329, %v3151, %v3152
        %v3331 = vsel %vm3329, %v2023, %v2024
        %3332 = vmin.index.xlane.f32.xlu0 %v3330
        %v3333 = vpop.xlane.xlu0 %3332
        %3334 = vset.pattern.permute.xlu0 %v3333
        %3335 = vperm.xlu0 %3334, %v3331
        %v3336 = vpop.permute.xlu0 %3335
        %vm3337 = vcmp.le.f32.partialorder %v3153, %v3154
        %v3338 = vsel %vm3337, %v3153, %v3154
        %v3339 = vsel %vm3337, %v2023, %v2024
        %3340 = vmin.index.xlane.f32.xlu0 %v3338
        %v3341 = vpop.xlane.xlu0 %3340
        %3342 = vset.pattern.permute.xlu0 %v3341
        %3343 = vperm.xlu0 %3342, %v3339
        %v3344 = vpop.permute.xlu0 %3343
        %vm3345 = vcmp.le.f32.partialorder %v3155, %v3156
        %v3346 = vsel %vm3345, %v3155, %v3156
        %v3347 = vsel %vm3345, %v2023, %v2024
        %3348 = vmin.index.xlane.f32.xlu0 %v3346
        %v3349 = vpop.xlane.xlu0 %3348
        %3350 = vset.pattern.permute.xlu0 %v3349
        %3351 = vperm.xlu0 %3350, %v3347
        %v3352 = vpop.permute.xlu0 %3351
        %vm3353 = vcmp.le.f32.partialorder %v3157, %v3158
        %v3354 = vsel %vm3353, %v3157, %v3158
        %v3355 = vsel %vm3353, %v2023, %v2024
        %3356 = vmin.index.xlane.f32.xlu0 %v3354
        %v3357 = vpop.xlane.xlu0 %3356
        %3358 = vset.pattern.permute.xlu0 %v3357
        %3359 = vperm.xlu0 %3358, %v3355
        %v3360 = vpop.permute.xlu0 %3359
        %vm3361 = vcmp.le.f32.partialorder %v3159, %v3160
        %v3362 = vsel %vm3361, %v3159, %v3160
        %v3363 = vsel %vm3361, %v2023, %v2024
        %3364 = vmin.index.xlane.f32.xlu0 %v3362
        %v3365 = vpop.xlane.xlu0 %3364
        %3366 = vset.pattern.permute.xlu0 %v3365
        %3367 = vperm.xlu0 %3366, %v3363
        %v3368 = vpop.permute.xlu0 %3367
        %vm3369 = vcmp.le.f32.partialorder %v3161, %v3162
        %v3370 = vsel %vm3369, %v3161, %v3162
        %v3371 = vsel %vm3369, %v2023, %v2024
        %3372 = vmin.index.xlane.f32.xlu0 %v3370
        %v3373 = vpop.xlane.xlu0 %3372
        %3374 = vset.pattern.permute.xlu0 %v3373
        %3375 = vperm.xlu0 %3374, %v3371
        %v3376 = vpop.permute.xlu0 %3375
        %vm3377 = vcmp.le.f32.partialorder %v3163, %v3164
        %v3378 = vsel %vm3377, %v3163, %v3164
        %v3379 = vsel %vm3377, %v2023, %v2024
        %3380 = vmin.index.xlane.f32.xlu0 %v3378
        %v3381 = vpop.xlane.xlu0 %3380
        %3382 = vset.pattern.permute.xlu0 %v3381
        %3383 = vperm.xlu0 %3382, %v3379
        %v3384 = vpop.permute.xlu0 %3383
        %vm3385 = vcmp.le.f32.partialorder %v3165, %v3166
        %v3386 = vsel %vm3385, %v3165, %v3166
        %v3387 = vsel %vm3385, %v2023, %v2024
        %3388 = vmin.index.xlane.f32.xlu0 %v3386
        %v3389 = vpop.xlane.xlu0 %3388
        %3390 = vset.pattern.permute.xlu0 %v3389
        %3391 = vperm.xlu0 %3390, %v3387
        %v3392 = vpop.permute.xlu0 %3391
        %vm3393 = vcmp.le.f32.partialorder %v3167, %v3168
        %v3394 = vsel %vm3393, %v3167, %v3168
        %v3395 = vsel %vm3393, %v2023, %v2024
        %3396 = vmin.index.xlane.f32.xlu0 %v3394
        %v3397 = vpop.xlane.xlu0 %3396
        %3398 = vset.pattern.permute.xlu0 %v3397
        %3399 = vperm.xlu0 %3398, %v3395
        %v3400 = vpop.permute.xlu0 %3399
        %vm3401 = vcmp.le.f32.partialorder %v3169, %v3170
        %v3402 = vsel %vm3401, %v3169, %v3170
        %v3403 = vsel %vm3401, %v2023, %v2024
        %3404 = vmin.index.xlane.f32.xlu0 %v3402
        %v3405 = vpop.xlane.xlu0 %3404
        %3406 = vset.pattern.permute.xlu0 %v3405
        %3407 = vperm.xlu0 %3406, %v3403
        %v3408 = vpop.permute.xlu0 %3407
        %vm3409 = vcmp.le.f32.partialorder %v3171, %v3172
        %v3410 = vsel %vm3409, %v3171, %v3172
        %v3411 = vsel %vm3409, %v2023, %v2024
        %3412 = vmin.index.xlane.f32.xlu0 %v3410
        %v3413 = vpop.xlane.xlu0 %3412
        %3414 = vset.pattern.permute.xlu0 %v3413
        %3415 = vperm.xlu0 %3414, %v3411
        %v3416 = vpop.permute.xlu0 %3415
        %vm3417 = vcmp.le.f32.partialorder %v3173, %v3174
        %v3418 = vsel %vm3417, %v3173, %v3174
        %v3419 = vsel %vm3417, %v2023, %v2024
        %3420 = vmin.index.xlane.f32.xlu0 %v3418
        %v3421 = vpop.xlane.xlu0 %3420
        %3422 = vset.pattern.permute.xlu0 %v3421
        %3423 = vperm.xlu0 %3422, %v3419
        %v3424 = vpop.permute.xlu0 %3423
        %vm3425 = vcmp.le.f32.partialorder %v3175, %v3176
        %v3426 = vsel %vm3425, %v3175, %v3176
        %v3427 = vsel %vm3425, %v2023, %v2024
        %3428 = vmin.index.xlane.f32.xlu0 %v3426
        %v3429 = vpop.xlane.xlu0 %3428
        %3430 = vset.pattern.permute.xlu0 %v3429
        %3431 = vperm.xlu0 %3430, %v3427
        %v3432 = vpop.permute.xlu0 %3431
        %vm3433 = vcmp.eq.s32.totalorder %v2023, %v3184
        %vm3434 = vcmp.eq.s32.totalorder %v2024, %v3184
        %vm3435 = vcmp.eq.s32.totalorder %v2023, %v3192
        %vm3436 = vcmp.eq.s32.totalorder %v2024, %v3192
        %vm3437 = vcmp.eq.s32.totalorder %v2023, %v3200
        %vm3438 = vcmp.eq.s32.totalorder %v2024, %v3200
        %vm3439 = vcmp.eq.s32.totalorder %v2023, %v3208
        %vm3440 = vcmp.eq.s32.totalorder %v2024, %v3208
        %vm3441 = vcmp.eq.s32.totalorder %v2023, %v3216
        %vm3442 = vcmp.eq.s32.totalorder %v2024, %v3216
        %vm3443 = vcmp.eq.s32.totalorder %v2023, %v3224
        %vm3444 = vcmp.eq.s32.totalorder %v2024, %v3224
        %vm3445 = vcmp.eq.s32.totalorder %v2023, %v3232
        %vm3446 = vcmp.eq.s32.totalorder %v2024, %v3232
        %vm3447 = vcmp.eq.s32.totalorder %v2023, %v3240
        %vm3448 = vcmp.eq.s32.totalorder %v2024, %v3240
        %vm3449 = vcmp.eq.s32.totalorder %v2023, %v3248
        %vm3450 = vcmp.eq.s32.totalorder %v2024, %v3248
        %vm3451 = vcmp.eq.s32.totalorder %v2023, %v3256
        %vm3452 = vcmp.eq.s32.totalorder %v2024, %v3256
        %vm3453 = vcmp.eq.s32.totalorder %v2023, %v3264
        %vm3454 = vcmp.eq.s32.totalorder %v2024, %v3264
        %vm3455 = vcmp.eq.s32.totalorder %v2023, %v3272
        %vm3456 = vcmp.eq.s32.totalorder %v2024, %v3272
        %vm3457 = vcmp.eq.s32.totalorder %v2023, %v3280
        %vm3458 = vcmp.eq.s32.totalorder %v2024, %v3280
        %vm3459 = vcmp.eq.s32.totalorder %v2023, %v3288
        %vm3460 = vcmp.eq.s32.totalorder %v2024, %v3288
        %vm3461 = vcmp.eq.s32.totalorder %v2023, %v3296
        %vm3462 = vcmp.eq.s32.totalorder %v2024, %v3296
        %vm3463 = vcmp.eq.s32.totalorder %v2023, %v3304
        %vm3464 = vcmp.eq.s32.totalorder %v2024, %v3304
        %vm3465 = vcmp.eq.s32.totalorder %v2023, %v3312
        %vm3466 = vcmp.eq.s32.totalorder %v2024, %v3312
        %vm3467 = vcmp.eq.s32.totalorder %v2023, %v3320
        %vm3468 = vcmp.eq.s32.totalorder %v2024, %v3320
        %vm3469 = vcmp.eq.s32.totalorder %v2023, %v3328
        %vm3470 = vcmp.eq.s32.totalorder %v2024, %v3328
        %vm3471 = vcmp.eq.s32.totalorder %v2023, %v3336
        %vm3472 = vcmp.eq.s32.totalorder %v2024, %v3336
        %vm3473 = vcmp.eq.s32.totalorder %v2023, %v3344
        %vm3474 = vcmp.eq.s32.totalorder %v2024, %v3344
        %vm3475 = vcmp.eq.s32.totalorder %v2023, %v3352
        %vm3476 = vcmp.eq.s32.totalorder %v2024, %v3352
        %vm3477 = vcmp.eq.s32.totalorder %v2023, %v3360
        %vm3478 = vcmp.eq.s32.totalorder %v2024, %v3360
        %vm3479 = vcmp.eq.s32.totalorder %v2023, %v3368
        %vm3480 = vcmp.eq.s32.totalorder %v2024, %v3368
        %vm3481 = vcmp.eq.s32.totalorder %v2023, %v3376
        %vm3482 = vcmp.eq.s32.totalorder %v2024, %v3376
        %vm3483 = vcmp.eq.s32.totalorder %v2023, %v3384
        %vm3484 = vcmp.eq.s32.totalorder %v2024, %v3384
        %vm3485 = vcmp.eq.s32.totalorder %v2023, %v3392
        %vm3486 = vcmp.eq.s32.totalorder %v2024, %v3392
        %vm3487 = vcmp.eq.s32.totalorder %v2023, %v3400
        %vm3488 = vcmp.eq.s32.totalorder %v2024, %v3400
        %vm3489 = vcmp.eq.s32.totalorder %v2023, %v3408
        %vm3490 = vcmp.eq.s32.totalorder %v2024, %v3408
        %vm3491 = vcmp.eq.s32.totalorder %v2023, %v3416
        %vm3492 = vcmp.eq.s32.totalorder %v2024, %v3416
        %vm3493 = vcmp.eq.s32.totalorder %v2023, %v3424
        %vm3494 = vcmp.eq.s32.totalorder %v2024, %v3424
        %vm3495 = vcmp.eq.s32.totalorder %v2023, %v3432
        %vm3496 = vcmp.eq.s32.totalorder %v2024, %v3432
        %v3497 = vsel %vm3433, 3e+38, %v3113
        %v3498 = vsel %vm3434, 3e+38, %v3114
        %v3499 = vsel %vm3435, 3e+38, %v3115
        %v3500 = vsel %vm3436, 3e+38, %v3116
        %v3501 = vsel %vm3437, 3e+38, %v3117
        %v3502 = vsel %vm3438, 3e+38, %v3118
        %v3503 = vsel %vm3439, 3e+38, %v3119
        %v3504 = vsel %vm3440, 3e+38, %v3120
        %v3505 = vsel %vm3441, 3e+38, %v3121
        %v3506 = vsel %vm3442, 3e+38, %v3122
        %v3507 = vsel %vm3443, 3e+38, %v3123
        %v3508 = vsel %vm3444, 3e+38, %v3124
        %v3509 = vsel %vm3445, 3e+38, %v3125
        %v3510 = vsel %vm3446, 3e+38, %v3126
        %v3511 = vsel %vm3447, 3e+38, %v3127
        %v3512 = vsel %vm3448, 3e+38, %v3128
        %v3513 = vsel %vm3449, 3e+38, %v3129
        %v3514 = vsel %vm3450, 3e+38, %v3130
        %v3515 = vsel %vm3451, 3e+38, %v3131
        %v3516 = vsel %vm3452, 3e+38, %v3132
        %v3517 = vsel %vm3453, 3e+38, %v3133
        %v3518 = vsel %vm3454, 3e+38, %v3134
        %v3519 = vsel %vm3455, 3e+38, %v3135
        %v3520 = vsel %vm3456, 3e+38, %v3136
        %v3521 = vsel %vm3457, 3e+38, %v3137
        %v3522 = vsel %vm3458, 3e+38, %v3138
        %v3523 = vsel %vm3459, 3e+38, %v3139
        %v3524 = vsel %vm3460, 3e+38, %v3140
        %v3525 = vsel %vm3461, 3e+38, %v3141
        %v3526 = vsel %vm3462, 3e+38, %v3142
        %v3527 = vsel %vm3463, 3e+38, %v3143
        %v3528 = vsel %vm3464, 3e+38, %v3144
        %v3529 = vsel %vm3465, 3e+38, %v3145
        %v3530 = vsel %vm3466, 3e+38, %v3146
        %v3531 = vsel %vm3467, 3e+38, %v3147
        %v3532 = vsel %vm3468, 3e+38, %v3148
        %v3533 = vsel %vm3469, 3e+38, %v3149
        %v3534 = vsel %vm3470, 3e+38, %v3150
        %v3535 = vsel %vm3471, 3e+38, %v3151
        %v3536 = vsel %vm3472, 3e+38, %v3152
        %v3537 = vsel %vm3473, 3e+38, %v3153
        %v3538 = vsel %vm3474, 3e+38, %v3154
        %v3539 = vsel %vm3475, 3e+38, %v3155
        %v3540 = vsel %vm3476, 3e+38, %v3156
        %v3541 = vsel %vm3477, 3e+38, %v3157
        %v3542 = vsel %vm3478, 3e+38, %v3158
        %v3543 = vsel %vm3479, 3e+38, %v3159
        %v3544 = vsel %vm3480, 3e+38, %v3160
        %v3545 = vsel %vm3481, 3e+38, %v3161
        %v3546 = vsel %vm3482, 3e+38, %v3162
        %v3547 = vsel %vm3483, 3e+38, %v3163
        %v3548 = vsel %vm3484, 3e+38, %v3164
        %v3549 = vsel %vm3485, 3e+38, %v3165
        %v3550 = vsel %vm3486, 3e+38, %v3166
        %v3551 = vsel %vm3487, 3e+38, %v3167
        %v3552 = vsel %vm3488, 3e+38, %v3168
        %v3553 = vsel %vm3489, 3e+38, %v3169
        %v3554 = vsel %vm3490, 3e+38, %v3170
        %v3555 = vsel %vm3491, 3e+38, %v3171
        %v3556 = vsel %vm3492, 3e+38, %v3172
        %v3557 = vsel %vm3493, 3e+38, %v3173
        %v3558 = vsel %vm3494, 3e+38, %v3174
        %v3559 = vsel %vm3495, 3e+38, %v3175
        %v3560 = vsel %vm3496, 3e+38, %v3176
        %vm3561 = vcmp.le.f32.partialorder %v3497, %v3498
        %v3562 = vsel %vm3561, %v3497, %v3498
        %v3563 = vsel %vm3561, %v2023, %v2024
        %3564 = vmin.index.xlane.f32.xlu0 %v3562
        %v3565 = vpop.xlane.xlu0 %3564
        %3566 = vset.pattern.permute.xlu0 %v3565
        %3567 = vperm.xlu0 %3566, %v3563
        %v3568 = vpop.permute.xlu0 %3567
        %vm3569 = vcmp.le.f32.partialorder %v3499, %v3500
        %v3570 = vsel %vm3569, %v3499, %v3500
        %v3571 = vsel %vm3569, %v2023, %v2024
        %3572 = vmin.index.xlane.f32.xlu0 %v3570
        %v3573 = vpop.xlane.xlu0 %3572
        %3574 = vset.pattern.permute.xlu0 %v3573
        %3575 = vperm.xlu0 %3574, %v3571
        %v3576 = vpop.permute.xlu0 %3575
        %vm3577 = vcmp.le.f32.partialorder %v3501, %v3502
        %v3578 = vsel %vm3577, %v3501, %v3502
        %v3579 = vsel %vm3577, %v2023, %v2024
        %3580 = vmin.index.xlane.f32.xlu0 %v3578
        %v3581 = vpop.xlane.xlu0 %3580
        %3582 = vset.pattern.permute.xlu0 %v3581
        %3583 = vperm.xlu0 %3582, %v3579
        %v3584 = vpop.permute.xlu0 %3583
        %vm3585 = vcmp.le.f32.partialorder %v3503, %v3504
        %v3586 = vsel %vm3585, %v3503, %v3504
        %v3587 = vsel %vm3585, %v2023, %v2024
        %3588 = vmin.index.xlane.f32.xlu0 %v3586
        %v3589 = vpop.xlane.xlu0 %3588
        %3590 = vset.pattern.permute.xlu0 %v3589
        %3591 = vperm.xlu0 %3590, %v3587
        %v3592 = vpop.permute.xlu0 %3591
        %vm3593 = vcmp.le.f32.partialorder %v3505, %v3506
        %v3594 = vsel %vm3593, %v3505, %v3506
        %v3595 = vsel %vm3593, %v2023, %v2024
        %3596 = vmin.index.xlane.f32.xlu0 %v3594
        %v3597 = vpop.xlane.xlu0 %3596
        %3598 = vset.pattern.permute.xlu0 %v3597
        %3599 = vperm.xlu0 %3598, %v3595
        %v3600 = vpop.permute.xlu0 %3599
        %vm3601 = vcmp.le.f32.partialorder %v3507, %v3508
        %v3602 = vsel %vm3601, %v3507, %v3508
        %v3603 = vsel %vm3601, %v2023, %v2024
        %3604 = vmin.index.xlane.f32.xlu0 %v3602
        %v3605 = vpop.xlane.xlu0 %3604
        %3606 = vset.pattern.permute.xlu0 %v3605
        %3607 = vperm.xlu0 %3606, %v3603
        %v3608 = vpop.permute.xlu0 %3607
        %vm3609 = vcmp.le.f32.partialorder %v3509, %v3510
        %v3610 = vsel %vm3609, %v3509, %v3510
        %v3611 = vsel %vm3609, %v2023, %v2024
        %3612 = vmin.index.xlane.f32.xlu0 %v3610
        %v3613 = vpop.xlane.xlu0 %3612
        %3614 = vset.pattern.permute.xlu0 %v3613
        %3615 = vperm.xlu0 %3614, %v3611
        %v3616 = vpop.permute.xlu0 %3615
        %vm3617 = vcmp.le.f32.partialorder %v3511, %v3512
        %v3618 = vsel %vm3617, %v3511, %v3512
        %v3619 = vsel %vm3617, %v2023, %v2024
        %3620 = vmin.index.xlane.f32.xlu0 %v3618
        %v3621 = vpop.xlane.xlu0 %3620
        %3622 = vset.pattern.permute.xlu0 %v3621
        %3623 = vperm.xlu0 %3622, %v3619
        %v3624 = vpop.permute.xlu0 %3623
        %vm3625 = vcmp.le.f32.partialorder %v3513, %v3514
        %v3626 = vsel %vm3625, %v3513, %v3514
        %v3627 = vsel %vm3625, %v2023, %v2024
        %3628 = vmin.index.xlane.f32.xlu0 %v3626
        %v3629 = vpop.xlane.xlu0 %3628
        %3630 = vset.pattern.permute.xlu0 %v3629
        %3631 = vperm.xlu0 %3630, %v3627
        %v3632 = vpop.permute.xlu0 %3631
        %vm3633 = vcmp.le.f32.partialorder %v3515, %v3516
        %v3634 = vsel %vm3633, %v3515, %v3516
        %v3635 = vsel %vm3633, %v2023, %v2024
        %3636 = vmin.index.xlane.f32.xlu0 %v3634
        %v3637 = vpop.xlane.xlu0 %3636
        %3638 = vset.pattern.permute.xlu0 %v3637
        %3639 = vperm.xlu0 %3638, %v3635
        %v3640 = vpop.permute.xlu0 %3639
        %vm3641 = vcmp.le.f32.partialorder %v3517, %v3518
        %v3642 = vsel %vm3641, %v3517, %v3518
        %v3643 = vsel %vm3641, %v2023, %v2024
        %3644 = vmin.index.xlane.f32.xlu0 %v3642
        %v3645 = vpop.xlane.xlu0 %3644
        %3646 = vset.pattern.permute.xlu0 %v3645
        %3647 = vperm.xlu0 %3646, %v3643
        %v3648 = vpop.permute.xlu0 %3647
        %vm3649 = vcmp.le.f32.partialorder %v3519, %v3520
        %v3650 = vsel %vm3649, %v3519, %v3520
        %v3651 = vsel %vm3649, %v2023, %v2024
        %3652 = vmin.index.xlane.f32.xlu0 %v3650
        %v3653 = vpop.xlane.xlu0 %3652
        %3654 = vset.pattern.permute.xlu0 %v3653
        %3655 = vperm.xlu0 %3654, %v3651
        %v3656 = vpop.permute.xlu0 %3655
        %vm3657 = vcmp.le.f32.partialorder %v3521, %v3522
        %v3658 = vsel %vm3657, %v3521, %v3522
        %v3659 = vsel %vm3657, %v2023, %v2024
        %3660 = vmin.index.xlane.f32.xlu0 %v3658
        %v3661 = vpop.xlane.xlu0 %3660
        %3662 = vset.pattern.permute.xlu0 %v3661
        %3663 = vperm.xlu0 %3662, %v3659
        %v3664 = vpop.permute.xlu0 %3663
        %vm3665 = vcmp.le.f32.partialorder %v3523, %v3524
        %v3666 = vsel %vm3665, %v3523, %v3524
        %v3667 = vsel %vm3665, %v2023, %v2024
        %3668 = vmin.index.xlane.f32.xlu0 %v3666
        %v3669 = vpop.xlane.xlu0 %3668
        %3670 = vset.pattern.permute.xlu0 %v3669
        %3671 = vperm.xlu0 %3670, %v3667
        %v3672 = vpop.permute.xlu0 %3671
        %vm3673 = vcmp.le.f32.partialorder %v3525, %v3526
        %v3674 = vsel %vm3673, %v3525, %v3526
        %v3675 = vsel %vm3673, %v2023, %v2024
        %3676 = vmin.index.xlane.f32.xlu0 %v3674
        %v3677 = vpop.xlane.xlu0 %3676
        %3678 = vset.pattern.permute.xlu0 %v3677
        %3679 = vperm.xlu0 %3678, %v3675
        %v3680 = vpop.permute.xlu0 %3679
        %vm3681 = vcmp.le.f32.partialorder %v3527, %v3528
        %v3682 = vsel %vm3681, %v3527, %v3528
        %v3683 = vsel %vm3681, %v2023, %v2024
        %3684 = vmin.index.xlane.f32.xlu0 %v3682
        %v3685 = vpop.xlane.xlu0 %3684
        %3686 = vset.pattern.permute.xlu0 %v3685
        %3687 = vperm.xlu0 %3686, %v3683
        %v3688 = vpop.permute.xlu0 %3687
        %vm3689 = vcmp.le.f32.partialorder %v3529, %v3530
        %v3690 = vsel %vm3689, %v3529, %v3530
        %v3691 = vsel %vm3689, %v2023, %v2024
        %3692 = vmin.index.xlane.f32.xlu0 %v3690
        %v3693 = vpop.xlane.xlu0 %3692
        %3694 = vset.pattern.permute.xlu0 %v3693
        %3695 = vperm.xlu0 %3694, %v3691
        %v3696 = vpop.permute.xlu0 %3695
        %vm3697 = vcmp.le.f32.partialorder %v3531, %v3532
        %v3698 = vsel %vm3697, %v3531, %v3532
        %v3699 = vsel %vm3697, %v2023, %v2024
        %3700 = vmin.index.xlane.f32.xlu0 %v3698
        %v3701 = vpop.xlane.xlu0 %3700
        %3702 = vset.pattern.permute.xlu0 %v3701
        %3703 = vperm.xlu0 %3702, %v3699
        %v3704 = vpop.permute.xlu0 %3703
        %vm3705 = vcmp.le.f32.partialorder %v3533, %v3534
        %v3706 = vsel %vm3705, %v3533, %v3534
        %v3707 = vsel %vm3705, %v2023, %v2024
        %3708 = vmin.index.xlane.f32.xlu0 %v3706
        %v3709 = vpop.xlane.xlu0 %3708
        %3710 = vset.pattern.permute.xlu0 %v3709
        %3711 = vperm.xlu0 %3710, %v3707
        %v3712 = vpop.permute.xlu0 %3711
        %vm3713 = vcmp.le.f32.partialorder %v3535, %v3536
        %v3714 = vsel %vm3713, %v3535, %v3536
        %v3715 = vsel %vm3713, %v2023, %v2024
        %3716 = vmin.index.xlane.f32.xlu0 %v3714
        %v3717 = vpop.xlane.xlu0 %3716
        %3718 = vset.pattern.permute.xlu0 %v3717
        %3719 = vperm.xlu0 %3718, %v3715
        %v3720 = vpop.permute.xlu0 %3719
        %vm3721 = vcmp.le.f32.partialorder %v3537, %v3538
        %v3722 = vsel %vm3721, %v3537, %v3538
        %v3723 = vsel %vm3721, %v2023, %v2024
        %3724 = vmin.index.xlane.f32.xlu0 %v3722
        %v3725 = vpop.xlane.xlu0 %3724
        %3726 = vset.pattern.permute.xlu0 %v3725
        %3727 = vperm.xlu0 %3726, %v3723
        %v3728 = vpop.permute.xlu0 %3727
        %vm3729 = vcmp.le.f32.partialorder %v3539, %v3540
        %v3730 = vsel %vm3729, %v3539, %v3540
        %v3731 = vsel %vm3729, %v2023, %v2024
        %3732 = vmin.index.xlane.f32.xlu0 %v3730
        %v3733 = vpop.xlane.xlu0 %3732
        %3734 = vset.pattern.permute.xlu0 %v3733
        %3735 = vperm.xlu0 %3734, %v3731
        %v3736 = vpop.permute.xlu0 %3735
        %vm3737 = vcmp.le.f32.partialorder %v3541, %v3542
        %v3738 = vsel %vm3737, %v3541, %v3542
        %v3739 = vsel %vm3737, %v2023, %v2024
        %3740 = vmin.index.xlane.f32.xlu0 %v3738
        %v3741 = vpop.xlane.xlu0 %3740
        %3742 = vset.pattern.permute.xlu0 %v3741
        %3743 = vperm.xlu0 %3742, %v3739
        %v3744 = vpop.permute.xlu0 %3743
        %vm3745 = vcmp.le.f32.partialorder %v3543, %v3544
        %v3746 = vsel %vm3745, %v3543, %v3544
        %v3747 = vsel %vm3745, %v2023, %v2024
        %3748 = vmin.index.xlane.f32.xlu0 %v3746
        %v3749 = vpop.xlane.xlu0 %3748
        %3750 = vset.pattern.permute.xlu0 %v3749
        %3751 = vperm.xlu0 %3750, %v3747
        %v3752 = vpop.permute.xlu0 %3751
        %vm3753 = vcmp.le.f32.partialorder %v3545, %v3546
        %v3754 = vsel %vm3753, %v3545, %v3546
        %v3755 = vsel %vm3753, %v2023, %v2024
        %3756 = vmin.index.xlane.f32.xlu0 %v3754
        %v3757 = vpop.xlane.xlu0 %3756
        %3758 = vset.pattern.permute.xlu0 %v3757
        %3759 = vperm.xlu0 %3758, %v3755
        %v3760 = vpop.permute.xlu0 %3759
        %vm3761 = vcmp.le.f32.partialorder %v3547, %v3548
        %v3762 = vsel %vm3761, %v3547, %v3548
        %v3763 = vsel %vm3761, %v2023, %v2024
        %3764 = vmin.index.xlane.f32.xlu0 %v3762
        %v3765 = vpop.xlane.xlu0 %3764
        %3766 = vset.pattern.permute.xlu0 %v3765
        %3767 = vperm.xlu0 %3766, %v3763
        %v3768 = vpop.permute.xlu0 %3767
        %vm3769 = vcmp.le.f32.partialorder %v3549, %v3550
        %v3770 = vsel %vm3769, %v3549, %v3550
        %v3771 = vsel %vm3769, %v2023, %v2024
        %3772 = vmin.index.xlane.f32.xlu0 %v3770
        %v3773 = vpop.xlane.xlu0 %3772
        %3774 = vset.pattern.permute.xlu0 %v3773
        %3775 = vperm.xlu0 %3774, %v3771
        %v3776 = vpop.permute.xlu0 %3775
        %vm3777 = vcmp.le.f32.partialorder %v3551, %v3552
        %v3778 = vsel %vm3777, %v3551, %v3552
        %v3779 = vsel %vm3777, %v2023, %v2024
        %3780 = vmin.index.xlane.f32.xlu0 %v3778
        %v3781 = vpop.xlane.xlu0 %3780
        %3782 = vset.pattern.permute.xlu0 %v3781
        %3783 = vperm.xlu0 %3782, %v3779
        %v3784 = vpop.permute.xlu0 %3783
        %vm3785 = vcmp.le.f32.partialorder %v3553, %v3554
        %v3786 = vsel %vm3785, %v3553, %v3554
        %v3787 = vsel %vm3785, %v2023, %v2024
        %3788 = vmin.index.xlane.f32.xlu0 %v3786
        %v3789 = vpop.xlane.xlu0 %3788
        %3790 = vset.pattern.permute.xlu0 %v3789
        %3791 = vperm.xlu0 %3790, %v3787
        %v3792 = vpop.permute.xlu0 %3791
        %vm3793 = vcmp.le.f32.partialorder %v3555, %v3556
        %v3794 = vsel %vm3793, %v3555, %v3556
        %v3795 = vsel %vm3793, %v2023, %v2024
        %3796 = vmin.index.xlane.f32.xlu0 %v3794
        %v3797 = vpop.xlane.xlu0 %3796
        %3798 = vset.pattern.permute.xlu0 %v3797
        %3799 = vperm.xlu0 %3798, %v3795
        %v3800 = vpop.permute.xlu0 %3799
        %vm3801 = vcmp.le.f32.partialorder %v3557, %v3558
        %v3802 = vsel %vm3801, %v3557, %v3558
        %v3803 = vsel %vm3801, %v2023, %v2024
        %3804 = vmin.index.xlane.f32.xlu0 %v3802
        %v3805 = vpop.xlane.xlu0 %3804
        %3806 = vset.pattern.permute.xlu0 %v3805
        %3807 = vperm.xlu0 %3806, %v3803
        %v3808 = vpop.permute.xlu0 %3807
        %vm3809 = vcmp.le.f32.partialorder %v3559, %v3560
        %v3810 = vsel %vm3809, %v3559, %v3560
        %v3811 = vsel %vm3809, %v2023, %v2024
        %3812 = vmin.index.xlane.f32.xlu0 %v3810
        %v3813 = vpop.xlane.xlu0 %3812
        %3814 = vset.pattern.permute.xlu0 %v3813
        %3815 = vperm.xlu0 %3814, %v3811
        %v3816 = vpop.permute.xlu0 %3815
        %vm3817 = vcmp.eq.s32.totalorder %v2023, %v3568
        %vm3818 = vcmp.eq.s32.totalorder %v2024, %v3568
        %vm3819 = vcmp.eq.s32.totalorder %v2023, %v3576
        %vm3820 = vcmp.eq.s32.totalorder %v2024, %v3576
        %vm3821 = vcmp.eq.s32.totalorder %v2023, %v3584
        %vm3822 = vcmp.eq.s32.totalorder %v2024, %v3584
        %vm3823 = vcmp.eq.s32.totalorder %v2023, %v3592
        %vm3824 = vcmp.eq.s32.totalorder %v2024, %v3592
        %vm3825 = vcmp.eq.s32.totalorder %v2023, %v3600
        %vm3826 = vcmp.eq.s32.totalorder %v2024, %v3600
        %vm3827 = vcmp.eq.s32.totalorder %v2023, %v3608
        %vm3828 = vcmp.eq.s32.totalorder %v2024, %v3608
        %vm3829 = vcmp.eq.s32.totalorder %v2023, %v3616
        %vm3830 = vcmp.eq.s32.totalorder %v2024, %v3616
        %vm3831 = vcmp.eq.s32.totalorder %v2023, %v3624
        %vm3832 = vcmp.eq.s32.totalorder %v2024, %v3624
        %vm3833 = vcmp.eq.s32.totalorder %v2023, %v3632
        %vm3834 = vcmp.eq.s32.totalorder %v2024, %v3632
        %vm3835 = vcmp.eq.s32.totalorder %v2023, %v3640
        %vm3836 = vcmp.eq.s32.totalorder %v2024, %v3640
        %vm3837 = vcmp.eq.s32.totalorder %v2023, %v3648
        %vm3838 = vcmp.eq.s32.totalorder %v2024, %v3648
        %vm3839 = vcmp.eq.s32.totalorder %v2023, %v3656
        %vm3840 = vcmp.eq.s32.totalorder %v2024, %v3656
        %vm3841 = vcmp.eq.s32.totalorder %v2023, %v3664
        %vm3842 = vcmp.eq.s32.totalorder %v2024, %v3664
        %vm3843 = vcmp.eq.s32.totalorder %v2023, %v3672
        %vm3844 = vcmp.eq.s32.totalorder %v2024, %v3672
        %vm3845 = vcmp.eq.s32.totalorder %v2023, %v3680
        %vm3846 = vcmp.eq.s32.totalorder %v2024, %v3680
        %vm3847 = vcmp.eq.s32.totalorder %v2023, %v3688
        %vm3848 = vcmp.eq.s32.totalorder %v2024, %v3688
        %vm3849 = vcmp.eq.s32.totalorder %v2023, %v3696
        %vm3850 = vcmp.eq.s32.totalorder %v2024, %v3696
        %vm3851 = vcmp.eq.s32.totalorder %v2023, %v3704
        %vm3852 = vcmp.eq.s32.totalorder %v2024, %v3704
        %vm3853 = vcmp.eq.s32.totalorder %v2023, %v3712
        %vm3854 = vcmp.eq.s32.totalorder %v2024, %v3712
        %vm3855 = vcmp.eq.s32.totalorder %v2023, %v3720
        %vm3856 = vcmp.eq.s32.totalorder %v2024, %v3720
        %vm3857 = vcmp.eq.s32.totalorder %v2023, %v3728
        %vm3858 = vcmp.eq.s32.totalorder %v2024, %v3728
        %vm3859 = vcmp.eq.s32.totalorder %v2023, %v3736
        %vm3860 = vcmp.eq.s32.totalorder %v2024, %v3736
        %vm3861 = vcmp.eq.s32.totalorder %v2023, %v3744
        %vm3862 = vcmp.eq.s32.totalorder %v2024, %v3744
        %vm3863 = vcmp.eq.s32.totalorder %v2023, %v3752
        %vm3864 = vcmp.eq.s32.totalorder %v2024, %v3752
        %vm3865 = vcmp.eq.s32.totalorder %v2023, %v3760
        %vm3866 = vcmp.eq.s32.totalorder %v2024, %v3760
        %vm3867 = vcmp.eq.s32.totalorder %v2023, %v3768
        %vm3868 = vcmp.eq.s32.totalorder %v2024, %v3768
        %vm3869 = vcmp.eq.s32.totalorder %v2023, %v3776
        %vm3870 = vcmp.eq.s32.totalorder %v2024, %v3776
        %vm3871 = vcmp.eq.s32.totalorder %v2023, %v3784
        %vm3872 = vcmp.eq.s32.totalorder %v2024, %v3784
        %vm3873 = vcmp.eq.s32.totalorder %v2023, %v3792
        %vm3874 = vcmp.eq.s32.totalorder %v2024, %v3792
        %vm3875 = vcmp.eq.s32.totalorder %v2023, %v3800
        %vm3876 = vcmp.eq.s32.totalorder %v2024, %v3800
        %vm3877 = vcmp.eq.s32.totalorder %v2023, %v3808
        %vm3878 = vcmp.eq.s32.totalorder %v2024, %v3808
        %vm3879 = vcmp.eq.s32.totalorder %v2023, %v3816
        %vm3880 = vcmp.eq.s32.totalorder %v2024, %v3816
        %v3881 = vsel %vm3817, 3e+38, %v3497
        %v3882 = vsel %vm3818, 3e+38, %v3498
        %v3883 = vsel %vm3819, 3e+38, %v3499
        %v3884 = vsel %vm3820, 3e+38, %v3500
        %v3885 = vsel %vm3821, 3e+38, %v3501
        %v3886 = vsel %vm3822, 3e+38, %v3502
        %v3887 = vsel %vm3823, 3e+38, %v3503
        %v3888 = vsel %vm3824, 3e+38, %v3504
        %v3889 = vsel %vm3825, 3e+38, %v3505
        %v3890 = vsel %vm3826, 3e+38, %v3506
        %v3891 = vsel %vm3827, 3e+38, %v3507
        %v3892 = vsel %vm3828, 3e+38, %v3508
        %v3893 = vsel %vm3829, 3e+38, %v3509
        %v3894 = vsel %vm3830, 3e+38, %v3510
        %v3895 = vsel %vm3831, 3e+38, %v3511
        %v3896 = vsel %vm3832, 3e+38, %v3512
        %v3897 = vsel %vm3833, 3e+38, %v3513
        %v3898 = vsel %vm3834, 3e+38, %v3514
        %v3899 = vsel %vm3835, 3e+38, %v3515
        %v3900 = vsel %vm3836, 3e+38, %v3516
        %v3901 = vsel %vm3837, 3e+38, %v3517
        %v3902 = vsel %vm3838, 3e+38, %v3518
        %v3903 = vsel %vm3839, 3e+38, %v3519
        %v3904 = vsel %vm3840, 3e+38, %v3520
        %v3905 = vsel %vm3841, 3e+38, %v3521
        %v3906 = vsel %vm3842, 3e+38, %v3522
        %v3907 = vsel %vm3843, 3e+38, %v3523
        %v3908 = vsel %vm3844, 3e+38, %v3524
        %v3909 = vsel %vm3845, 3e+38, %v3525
        %v3910 = vsel %vm3846, 3e+38, %v3526
        %v3911 = vsel %vm3847, 3e+38, %v3527
        %v3912 = vsel %vm3848, 3e+38, %v3528
        %v3913 = vsel %vm3849, 3e+38, %v3529
        %v3914 = vsel %vm3850, 3e+38, %v3530
        %v3915 = vsel %vm3851, 3e+38, %v3531
        %v3916 = vsel %vm3852, 3e+38, %v3532
        %v3917 = vsel %vm3853, 3e+38, %v3533
        %v3918 = vsel %vm3854, 3e+38, %v3534
        %v3919 = vsel %vm3855, 3e+38, %v3535
        %v3920 = vsel %vm3856, 3e+38, %v3536
        %v3921 = vsel %vm3857, 3e+38, %v3537
        %v3922 = vsel %vm3858, 3e+38, %v3538
        %v3923 = vsel %vm3859, 3e+38, %v3539
        %v3924 = vsel %vm3860, 3e+38, %v3540
        %v3925 = vsel %vm3861, 3e+38, %v3541
        %v3926 = vsel %vm3862, 3e+38, %v3542
        %v3927 = vsel %vm3863, 3e+38, %v3543
        %v3928 = vsel %vm3864, 3e+38, %v3544
        %v3929 = vsel %vm3865, 3e+38, %v3545
        %v3930 = vsel %vm3866, 3e+38, %v3546
        %v3931 = vsel %vm3867, 3e+38, %v3547
        %v3932 = vsel %vm3868, 3e+38, %v3548
        %v3933 = vsel %vm3869, 3e+38, %v3549
        %v3934 = vsel %vm3870, 3e+38, %v3550
        %v3935 = vsel %vm3871, 3e+38, %v3551
        %v3936 = vsel %vm3872, 3e+38, %v3552
        %v3937 = vsel %vm3873, 3e+38, %v3553
        %v3938 = vsel %vm3874, 3e+38, %v3554
        %v3939 = vsel %vm3875, 3e+38, %v3555
        %v3940 = vsel %vm3876, 3e+38, %v3556
        %v3941 = vsel %vm3877, 3e+38, %v3557
        %v3942 = vsel %vm3878, 3e+38, %v3558
        %v3943 = vsel %vm3879, 3e+38, %v3559
        %v3944 = vsel %vm3880, 3e+38, %v3560
        %vm3945 = vcmp.le.f32.partialorder %v3881, %v3882
        %v3946 = vsel %vm3945, %v3881, %v3882
        %v3947 = vsel %vm3945, %v2023, %v2024
        %3948 = vmin.index.xlane.f32.xlu0 %v3946
        %v3949 = vpop.xlane.xlu0 %3948
        %3950 = vset.pattern.permute.xlu0 %v3949
        %3951 = vperm.xlu0 %3950, %v3947
        %v3952 = vpop.permute.xlu0 %3951
        %vm3953 = vcmp.le.f32.partialorder %v3883, %v3884
        %v3954 = vsel %vm3953, %v3883, %v3884
        %v3955 = vsel %vm3953, %v2023, %v2024
        %3956 = vmin.index.xlane.f32.xlu0 %v3954
        %v3957 = vpop.xlane.xlu0 %3956
        %3958 = vset.pattern.permute.xlu0 %v3957
        %3959 = vperm.xlu0 %3958, %v3955
        %v3960 = vpop.permute.xlu0 %3959
        %vm3961 = vcmp.le.f32.partialorder %v3885, %v3886
        %v3962 = vsel %vm3961, %v3885, %v3886
        %v3963 = vsel %vm3961, %v2023, %v2024
        %3964 = vmin.index.xlane.f32.xlu0 %v3962
        %v3965 = vpop.xlane.xlu0 %3964
        %3966 = vset.pattern.permute.xlu0 %v3965
        %3967 = vperm.xlu0 %3966, %v3963
        %v3968 = vpop.permute.xlu0 %3967
        %vm3969 = vcmp.le.f32.partialorder %v3887, %v3888
        %v3970 = vsel %vm3969, %v3887, %v3888
        %v3971 = vsel %vm3969, %v2023, %v2024
        %3972 = vmin.index.xlane.f32.xlu0 %v3970
        %v3973 = vpop.xlane.xlu0 %3972
        %3974 = vset.pattern.permute.xlu0 %v3973
        %3975 = vperm.xlu0 %3974, %v3971
        %v3976 = vpop.permute.xlu0 %3975
        %vm3977 = vcmp.le.f32.partialorder %v3889, %v3890
        %v3978 = vsel %vm3977, %v3889, %v3890
        %v3979 = vsel %vm3977, %v2023, %v2024
        %3980 = vmin.index.xlane.f32.xlu0 %v3978
        %v3981 = vpop.xlane.xlu0 %3980
        %3982 = vset.pattern.permute.xlu0 %v3981
        %3983 = vperm.xlu0 %3982, %v3979
        %v3984 = vpop.permute.xlu0 %3983
        %vm3985 = vcmp.le.f32.partialorder %v3891, %v3892
        %v3986 = vsel %vm3985, %v3891, %v3892
        %v3987 = vsel %vm3985, %v2023, %v2024
        %3988 = vmin.index.xlane.f32.xlu0 %v3986
        %v3989 = vpop.xlane.xlu0 %3988
        %3990 = vset.pattern.permute.xlu0 %v3989
        %3991 = vperm.xlu0 %3990, %v3987
        %v3992 = vpop.permute.xlu0 %3991
        %vm3993 = vcmp.le.f32.partialorder %v3893, %v3894
        %v3994 = vsel %vm3993, %v3893, %v3894
        %v3995 = vsel %vm3993, %v2023, %v2024
        %3996 = vmin.index.xlane.f32.xlu0 %v3994
        %v3997 = vpop.xlane.xlu0 %3996
        %3998 = vset.pattern.permute.xlu0 %v3997
        %3999 = vperm.xlu0 %3998, %v3995
        %v4000 = vpop.permute.xlu0 %3999
        %vm4001 = vcmp.le.f32.partialorder %v3895, %v3896
        %v4002 = vsel %vm4001, %v3895, %v3896
        %v4003 = vsel %vm4001, %v2023, %v2024
        %4004 = vmin.index.xlane.f32.xlu0 %v4002
        %v4005 = vpop.xlane.xlu0 %4004
        %4006 = vset.pattern.permute.xlu0 %v4005
        %4007 = vperm.xlu0 %4006, %v4003
        %v4008 = vpop.permute.xlu0 %4007
        %vm4009 = vcmp.le.f32.partialorder %v3897, %v3898
        %v4010 = vsel %vm4009, %v3897, %v3898
        %v4011 = vsel %vm4009, %v2023, %v2024
        %4012 = vmin.index.xlane.f32.xlu0 %v4010
        %v4013 = vpop.xlane.xlu0 %4012
        %4014 = vset.pattern.permute.xlu0 %v4013
        %4015 = vperm.xlu0 %4014, %v4011
        %v4016 = vpop.permute.xlu0 %4015
        %vm4017 = vcmp.le.f32.partialorder %v3899, %v3900
        %v4018 = vsel %vm4017, %v3899, %v3900
        %v4019 = vsel %vm4017, %v2023, %v2024
        %4020 = vmin.index.xlane.f32.xlu0 %v4018
        %v4021 = vpop.xlane.xlu0 %4020
        %4022 = vset.pattern.permute.xlu0 %v4021
        %4023 = vperm.xlu0 %4022, %v4019
        %v4024 = vpop.permute.xlu0 %4023
        %vm4025 = vcmp.le.f32.partialorder %v3901, %v3902
        %v4026 = vsel %vm4025, %v3901, %v3902
        %v4027 = vsel %vm4025, %v2023, %v2024
        %4028 = vmin.index.xlane.f32.xlu0 %v4026
        %v4029 = vpop.xlane.xlu0 %4028
        %4030 = vset.pattern.permute.xlu0 %v4029
        %4031 = vperm.xlu0 %4030, %v4027
        %v4032 = vpop.permute.xlu0 %4031
        %vm4033 = vcmp.le.f32.partialorder %v3903, %v3904
        %v4034 = vsel %vm4033, %v3903, %v3904
        %v4035 = vsel %vm4033, %v2023, %v2024
        %4036 = vmin.index.xlane.f32.xlu0 %v4034
        %v4037 = vpop.xlane.xlu0 %4036
        %4038 = vset.pattern.permute.xlu0 %v4037
        %4039 = vperm.xlu0 %4038, %v4035
        %v4040 = vpop.permute.xlu0 %4039
        %vm4041 = vcmp.le.f32.partialorder %v3905, %v3906
        %v4042 = vsel %vm4041, %v3905, %v3906
        %v4043 = vsel %vm4041, %v2023, %v2024
        %4044 = vmin.index.xlane.f32.xlu0 %v4042
        %v4045 = vpop.xlane.xlu0 %4044
        %4046 = vset.pattern.permute.xlu0 %v4045
        %4047 = vperm.xlu0 %4046, %v4043
        %v4048 = vpop.permute.xlu0 %4047
        %vm4049 = vcmp.le.f32.partialorder %v3907, %v3908
        %v4050 = vsel %vm4049, %v3907, %v3908
        %v4051 = vsel %vm4049, %v2023, %v2024
        %4052 = vmin.index.xlane.f32.xlu0 %v4050
        %v4053 = vpop.xlane.xlu0 %4052
        %4054 = vset.pattern.permute.xlu0 %v4053
        %4055 = vperm.xlu0 %4054, %v4051
        %v4056 = vpop.permute.xlu0 %4055
        %vm4057 = vcmp.le.f32.partialorder %v3909, %v3910
        %v4058 = vsel %vm4057, %v3909, %v3910
        %v4059 = vsel %vm4057, %v2023, %v2024
        %4060 = vmin.index.xlane.f32.xlu0 %v4058
        %v4061 = vpop.xlane.xlu0 %4060
        %4062 = vset.pattern.permute.xlu0 %v4061
        %4063 = vperm.xlu0 %4062, %v4059
        %v4064 = vpop.permute.xlu0 %4063
        %vm4065 = vcmp.le.f32.partialorder %v3911, %v3912
        %v4066 = vsel %vm4065, %v3911, %v3912
        %v4067 = vsel %vm4065, %v2023, %v2024
        %4068 = vmin.index.xlane.f32.xlu0 %v4066
        %v4069 = vpop.xlane.xlu0 %4068
        %4070 = vset.pattern.permute.xlu0 %v4069
        %4071 = vperm.xlu0 %4070, %v4067
        %v4072 = vpop.permute.xlu0 %4071
        %vm4073 = vcmp.le.f32.partialorder %v3913, %v3914
        %v4074 = vsel %vm4073, %v3913, %v3914
        %v4075 = vsel %vm4073, %v2023, %v2024
        %4076 = vmin.index.xlane.f32.xlu0 %v4074
        %v4077 = vpop.xlane.xlu0 %4076
        %4078 = vset.pattern.permute.xlu0 %v4077
        %4079 = vperm.xlu0 %4078, %v4075
        %v4080 = vpop.permute.xlu0 %4079
        %vm4081 = vcmp.le.f32.partialorder %v3915, %v3916
        %v4082 = vsel %vm4081, %v3915, %v3916
        %v4083 = vsel %vm4081, %v2023, %v2024
        %4084 = vmin.index.xlane.f32.xlu0 %v4082
        %v4085 = vpop.xlane.xlu0 %4084
        %4086 = vset.pattern.permute.xlu0 %v4085
        %4087 = vperm.xlu0 %4086, %v4083
        %v4088 = vpop.permute.xlu0 %4087
        %vm4089 = vcmp.le.f32.partialorder %v3917, %v3918
        %v4090 = vsel %vm4089, %v3917, %v3918
        %v4091 = vsel %vm4089, %v2023, %v2024
        %4092 = vmin.index.xlane.f32.xlu0 %v4090
        %v4093 = vpop.xlane.xlu0 %4092
        %4094 = vset.pattern.permute.xlu0 %v4093
        %4095 = vperm.xlu0 %4094, %v4091
        %v4096 = vpop.permute.xlu0 %4095
        %vm4097 = vcmp.le.f32.partialorder %v3919, %v3920
        %v4098 = vsel %vm4097, %v3919, %v3920
        %v4099 = vsel %vm4097, %v2023, %v2024
        %4100 = vmin.index.xlane.f32.xlu0 %v4098
        %v4101 = vpop.xlane.xlu0 %4100
        %4102 = vset.pattern.permute.xlu0 %v4101
        %4103 = vperm.xlu0 %4102, %v4099
        %v4104 = vpop.permute.xlu0 %4103
        %vm4105 = vcmp.le.f32.partialorder %v3921, %v3922
        %v4106 = vsel %vm4105, %v3921, %v3922
        %v4107 = vsel %vm4105, %v2023, %v2024
        %4108 = vmin.index.xlane.f32.xlu0 %v4106
        %v4109 = vpop.xlane.xlu0 %4108
        %4110 = vset.pattern.permute.xlu0 %v4109
        %4111 = vperm.xlu0 %4110, %v4107
        %v4112 = vpop.permute.xlu0 %4111
        %vm4113 = vcmp.le.f32.partialorder %v3923, %v3924
        %v4114 = vsel %vm4113, %v3923, %v3924
        %v4115 = vsel %vm4113, %v2023, %v2024
        %4116 = vmin.index.xlane.f32.xlu0 %v4114
        %v4117 = vpop.xlane.xlu0 %4116
        %4118 = vset.pattern.permute.xlu0 %v4117
        %4119 = vperm.xlu0 %4118, %v4115
        %v4120 = vpop.permute.xlu0 %4119
        %vm4121 = vcmp.le.f32.partialorder %v3925, %v3926
        %v4122 = vsel %vm4121, %v3925, %v3926
        %v4123 = vsel %vm4121, %v2023, %v2024
        %4124 = vmin.index.xlane.f32.xlu0 %v4122
        %v4125 = vpop.xlane.xlu0 %4124
        %4126 = vset.pattern.permute.xlu0 %v4125
        %4127 = vperm.xlu0 %4126, %v4123
        %v4128 = vpop.permute.xlu0 %4127
        %vm4129 = vcmp.le.f32.partialorder %v3927, %v3928
        %v4130 = vsel %vm4129, %v3927, %v3928
        %v4131 = vsel %vm4129, %v2023, %v2024
        %4132 = vmin.index.xlane.f32.xlu0 %v4130
        %v4133 = vpop.xlane.xlu0 %4132
        %4134 = vset.pattern.permute.xlu0 %v4133
        %4135 = vperm.xlu0 %4134, %v4131
        %v4136 = vpop.permute.xlu0 %4135
        %vm4137 = vcmp.le.f32.partialorder %v3929, %v3930
        %v4138 = vsel %vm4137, %v3929, %v3930
        %v4139 = vsel %vm4137, %v2023, %v2024
        %4140 = vmin.index.xlane.f32.xlu0 %v4138
        %v4141 = vpop.xlane.xlu0 %4140
        %4142 = vset.pattern.permute.xlu0 %v4141
        %4143 = vperm.xlu0 %4142, %v4139
        %v4144 = vpop.permute.xlu0 %4143
        %vm4145 = vcmp.le.f32.partialorder %v3931, %v3932
        %v4146 = vsel %vm4145, %v3931, %v3932
        %v4147 = vsel %vm4145, %v2023, %v2024
        %4148 = vmin.index.xlane.f32.xlu0 %v4146
        %v4149 = vpop.xlane.xlu0 %4148
        %4150 = vset.pattern.permute.xlu0 %v4149
        %4151 = vperm.xlu0 %4150, %v4147
        %v4152 = vpop.permute.xlu0 %4151
        %vm4153 = vcmp.le.f32.partialorder %v3933, %v3934
        %v4154 = vsel %vm4153, %v3933, %v3934
        %v4155 = vsel %vm4153, %v2023, %v2024
        %4156 = vmin.index.xlane.f32.xlu0 %v4154
        %v4157 = vpop.xlane.xlu0 %4156
        %4158 = vset.pattern.permute.xlu0 %v4157
        %4159 = vperm.xlu0 %4158, %v4155
        %v4160 = vpop.permute.xlu0 %4159
        %vm4161 = vcmp.le.f32.partialorder %v3935, %v3936
        %v4162 = vsel %vm4161, %v3935, %v3936
        %v4163 = vsel %vm4161, %v2023, %v2024
        %4164 = vmin.index.xlane.f32.xlu0 %v4162
        %v4165 = vpop.xlane.xlu0 %4164
        %4166 = vset.pattern.permute.xlu0 %v4165
        %4167 = vperm.xlu0 %4166, %v4163
        %v4168 = vpop.permute.xlu0 %4167
        %vm4169 = vcmp.le.f32.partialorder %v3937, %v3938
        %v4170 = vsel %vm4169, %v3937, %v3938
        %v4171 = vsel %vm4169, %v2023, %v2024
        %4172 = vmin.index.xlane.f32.xlu0 %v4170
        %v4173 = vpop.xlane.xlu0 %4172
        %4174 = vset.pattern.permute.xlu0 %v4173
        %4175 = vperm.xlu0 %4174, %v4171
        %v4176 = vpop.permute.xlu0 %4175
        %vm4177 = vcmp.le.f32.partialorder %v3939, %v3940
        %v4178 = vsel %vm4177, %v3939, %v3940
        %v4179 = vsel %vm4177, %v2023, %v2024
        %4180 = vmin.index.xlane.f32.xlu0 %v4178
        %v4181 = vpop.xlane.xlu0 %4180
        %4182 = vset.pattern.permute.xlu0 %v4181
        %4183 = vperm.xlu0 %4182, %v4179
        %v4184 = vpop.permute.xlu0 %4183
        %vm4185 = vcmp.le.f32.partialorder %v3941, %v3942
        %v4186 = vsel %vm4185, %v3941, %v3942
        %v4187 = vsel %vm4185, %v2023, %v2024
        %4188 = vmin.index.xlane.f32.xlu0 %v4186
        %v4189 = vpop.xlane.xlu0 %4188
        %4190 = vset.pattern.permute.xlu0 %v4189
        %4191 = vperm.xlu0 %4190, %v4187
        %v4192 = vpop.permute.xlu0 %4191
        %vm4193 = vcmp.le.f32.partialorder %v3943, %v3944
        %v4194 = vsel %vm4193, %v3943, %v3944
        %v4195 = vsel %vm4193, %v2023, %v2024
        %4196 = vmin.index.xlane.f32.xlu0 %v4194
        %v4197 = vpop.xlane.xlu0 %4196
        %4198 = vset.pattern.permute.xlu0 %v4197
        %4199 = vperm.xlu0 %4198, %v4195
        %v4200 = vpop.permute.xlu0 %4199
        %vm4201 = vcmp.eq.s32.totalorder %v2023, %v3952
        %vm4202 = vcmp.eq.s32.totalorder %v2024, %v3952
        %vm4203 = vcmp.eq.s32.totalorder %v2023, %v3960
        %vm4204 = vcmp.eq.s32.totalorder %v2024, %v3960
        %vm4205 = vcmp.eq.s32.totalorder %v2023, %v3968
        %vm4206 = vcmp.eq.s32.totalorder %v2024, %v3968
        %vm4207 = vcmp.eq.s32.totalorder %v2023, %v3976
        %vm4208 = vcmp.eq.s32.totalorder %v2024, %v3976
        %vm4209 = vcmp.eq.s32.totalorder %v2023, %v3984
        %vm4210 = vcmp.eq.s32.totalorder %v2024, %v3984
        %vm4211 = vcmp.eq.s32.totalorder %v2023, %v3992
        %vm4212 = vcmp.eq.s32.totalorder %v2024, %v3992
        %vm4213 = vcmp.eq.s32.totalorder %v2023, %v4000
        %vm4214 = vcmp.eq.s32.totalorder %v2024, %v4000
        %vm4215 = vcmp.eq.s32.totalorder %v2023, %v4008
        %vm4216 = vcmp.eq.s32.totalorder %v2024, %v4008
        %vm4217 = vcmp.eq.s32.totalorder %v2023, %v4016
        %vm4218 = vcmp.eq.s32.totalorder %v2024, %v4016
        %vm4219 = vcmp.eq.s32.totalorder %v2023, %v4024
        %vm4220 = vcmp.eq.s32.totalorder %v2024, %v4024
        %vm4221 = vcmp.eq.s32.totalorder %v2023, %v4032
        %vm4222 = vcmp.eq.s32.totalorder %v2024, %v4032
        %vm4223 = vcmp.eq.s32.totalorder %v2023, %v4040
        %vm4224 = vcmp.eq.s32.totalorder %v2024, %v4040
        %vm4225 = vcmp.eq.s32.totalorder %v2023, %v4048
        %vm4226 = vcmp.eq.s32.totalorder %v2024, %v4048
        %vm4227 = vcmp.eq.s32.totalorder %v2023, %v4056
        %vm4228 = vcmp.eq.s32.totalorder %v2024, %v4056
        %vm4229 = vcmp.eq.s32.totalorder %v2023, %v4064
        %vm4230 = vcmp.eq.s32.totalorder %v2024, %v4064
        %vm4231 = vcmp.eq.s32.totalorder %v2023, %v4072
        %vm4232 = vcmp.eq.s32.totalorder %v2024, %v4072
        %vm4233 = vcmp.eq.s32.totalorder %v2023, %v4080
        %vm4234 = vcmp.eq.s32.totalorder %v2024, %v4080
        %vm4235 = vcmp.eq.s32.totalorder %v2023, %v4088
        %vm4236 = vcmp.eq.s32.totalorder %v2024, %v4088
        %vm4237 = vcmp.eq.s32.totalorder %v2023, %v4096
        %vm4238 = vcmp.eq.s32.totalorder %v2024, %v4096
        %vm4239 = vcmp.eq.s32.totalorder %v2023, %v4104
        %vm4240 = vcmp.eq.s32.totalorder %v2024, %v4104
        %vm4241 = vcmp.eq.s32.totalorder %v2023, %v4112
        %vm4242 = vcmp.eq.s32.totalorder %v2024, %v4112
        %vm4243 = vcmp.eq.s32.totalorder %v2023, %v4120
        %vm4244 = vcmp.eq.s32.totalorder %v2024, %v4120
        %vm4245 = vcmp.eq.s32.totalorder %v2023, %v4128
        %vm4246 = vcmp.eq.s32.totalorder %v2024, %v4128
        %vm4247 = vcmp.eq.s32.totalorder %v2023, %v4136
        %vm4248 = vcmp.eq.s32.totalorder %v2024, %v4136
        %vm4249 = vcmp.eq.s32.totalorder %v2023, %v4144
        %vm4250 = vcmp.eq.s32.totalorder %v2024, %v4144
        %vm4251 = vcmp.eq.s32.totalorder %v2023, %v4152
        %vm4252 = vcmp.eq.s32.totalorder %v2024, %v4152
        %vm4253 = vcmp.eq.s32.totalorder %v2023, %v4160
        %vm4254 = vcmp.eq.s32.totalorder %v2024, %v4160
        %vm4255 = vcmp.eq.s32.totalorder %v2023, %v4168
        %vm4256 = vcmp.eq.s32.totalorder %v2024, %v4168
        %vm4257 = vcmp.eq.s32.totalorder %v2023, %v4176
        %vm4258 = vcmp.eq.s32.totalorder %v2024, %v4176
        %vm4259 = vcmp.eq.s32.totalorder %v2023, %v4184
        %vm4260 = vcmp.eq.s32.totalorder %v2024, %v4184
        %vm4261 = vcmp.eq.s32.totalorder %v2023, %v4192
        %vm4262 = vcmp.eq.s32.totalorder %v2024, %v4192
        %vm4263 = vcmp.eq.s32.totalorder %v2023, %v4200
        %vm4264 = vcmp.eq.s32.totalorder %v2024, %v4200
        %v4265 = vsel %vm4201, 3e+38, %v3881
        %v4266 = vsel %vm4202, 3e+38, %v3882
        %v4267 = vsel %vm4203, 3e+38, %v3883
        %v4268 = vsel %vm4204, 3e+38, %v3884
        %v4269 = vsel %vm4205, 3e+38, %v3885
        %v4270 = vsel %vm4206, 3e+38, %v3886
        %v4271 = vsel %vm4207, 3e+38, %v3887
        %v4272 = vsel %vm4208, 3e+38, %v3888
        %v4273 = vsel %vm4209, 3e+38, %v3889
        %v4274 = vsel %vm4210, 3e+38, %v3890
        %v4275 = vsel %vm4211, 3e+38, %v3891
        %v4276 = vsel %vm4212, 3e+38, %v3892
        %v4277 = vsel %vm4213, 3e+38, %v3893
        %v4278 = vsel %vm4214, 3e+38, %v3894
        %v4279 = vsel %vm4215, 3e+38, %v3895
        %v4280 = vsel %vm4216, 3e+38, %v3896
        %v4281 = vsel %vm4217, 3e+38, %v3897
        %v4282 = vsel %vm4218, 3e+38, %v3898
        %v4283 = vsel %vm4219, 3e+38, %v3899
        %v4284 = vsel %vm4220, 3e+38, %v3900
        %v4285 = vsel %vm4221, 3e+38, %v3901
        %v4286 = vsel %vm4222, 3e+38, %v3902
        %v4287 = vsel %vm4223, 3e+38, %v3903
        %v4288 = vsel %vm4224, 3e+38, %v3904
        %v4289 = vsel %vm4225, 3e+38, %v3905
        %v4290 = vsel %vm4226, 3e+38, %v3906
        %v4291 = vsel %vm4227, 3e+38, %v3907
        %v4292 = vsel %vm4228, 3e+38, %v3908
        %v4293 = vsel %vm4229, 3e+38, %v3909
        %v4294 = vsel %vm4230, 3e+38, %v3910
        %v4295 = vsel %vm4231, 3e+38, %v3911
        %v4296 = vsel %vm4232, 3e+38, %v3912
        %v4297 = vsel %vm4233, 3e+38, %v3913
        %v4298 = vsel %vm4234, 3e+38, %v3914
        %v4299 = vsel %vm4235, 3e+38, %v3915
        %v4300 = vsel %vm4236, 3e+38, %v3916
        %v4301 = vsel %vm4237, 3e+38, %v3917
        %v4302 = vsel %vm4238, 3e+38, %v3918
        %v4303 = vsel %vm4239, 3e+38, %v3919
        %v4304 = vsel %vm4240, 3e+38, %v3920
        %v4305 = vsel %vm4241, 3e+38, %v3921
        %v4306 = vsel %vm4242, 3e+38, %v3922
        %v4307 = vsel %vm4243, 3e+38, %v3923
        %v4308 = vsel %vm4244, 3e+38, %v3924
        %v4309 = vsel %vm4245, 3e+38, %v3925
        %v4310 = vsel %vm4246, 3e+38, %v3926
        %v4311 = vsel %vm4247, 3e+38, %v3927
        %v4312 = vsel %vm4248, 3e+38, %v3928
        %v4313 = vsel %vm4249, 3e+38, %v3929
        %v4314 = vsel %vm4250, 3e+38, %v3930
        %v4315 = vsel %vm4251, 3e+38, %v3931
        %v4316 = vsel %vm4252, 3e+38, %v3932
        %v4317 = vsel %vm4253, 3e+38, %v3933
        %v4318 = vsel %vm4254, 3e+38, %v3934
        %v4319 = vsel %vm4255, 3e+38, %v3935
        %v4320 = vsel %vm4256, 3e+38, %v3936
        %v4321 = vsel %vm4257, 3e+38, %v3937
        %v4322 = vsel %vm4258, 3e+38, %v3938
        %v4323 = vsel %vm4259, 3e+38, %v3939
        %v4324 = vsel %vm4260, 3e+38, %v3940
        %v4325 = vsel %vm4261, 3e+38, %v3941
        %v4326 = vsel %vm4262, 3e+38, %v3942
        %v4327 = vsel %vm4263, 3e+38, %v3943
        %v4328 = vsel %vm4264, 3e+38, %v3944
        %vm4329 = vcmp.le.f32.partialorder %v4265, %v4266
        %v4330 = vsel %vm4329, %v4265, %v4266
        %v4331 = vsel %vm4329, %v2023, %v2024
        %4332 = vmin.index.xlane.f32.xlu0 %v4330
        %v4333 = vpop.xlane.xlu0 %4332
        %4334 = vset.pattern.permute.xlu0 %v4333
        %4335 = vperm.xlu0 %4334, %v4331
        %v4336 = vpop.permute.xlu0 %4335
        %vm4337 = vcmp.le.f32.partialorder %v4267, %v4268
        %v4338 = vsel %vm4337, %v4267, %v4268
        %v4339 = vsel %vm4337, %v2023, %v2024
        %4340 = vmin.index.xlane.f32.xlu0 %v4338
        %v4341 = vpop.xlane.xlu0 %4340
        %4342 = vset.pattern.permute.xlu0 %v4341
        %4343 = vperm.xlu0 %4342, %v4339
        %v4344 = vpop.permute.xlu0 %4343
        %vm4345 = vcmp.le.f32.partialorder %v4269, %v4270
        %v4346 = vsel %vm4345, %v4269, %v4270
        %v4347 = vsel %vm4345, %v2023, %v2024
        %4348 = vmin.index.xlane.f32.xlu0 %v4346
        %v4349 = vpop.xlane.xlu0 %4348
        %4350 = vset.pattern.permute.xlu0 %v4349
        %4351 = vperm.xlu0 %4350, %v4347
        %v4352 = vpop.permute.xlu0 %4351
        %vm4353 = vcmp.le.f32.partialorder %v4271, %v4272
        %v4354 = vsel %vm4353, %v4271, %v4272
        %v4355 = vsel %vm4353, %v2023, %v2024
        %4356 = vmin.index.xlane.f32.xlu0 %v4354
        %v4357 = vpop.xlane.xlu0 %4356
        %4358 = vset.pattern.permute.xlu0 %v4357
        %4359 = vperm.xlu0 %4358, %v4355
        %v4360 = vpop.permute.xlu0 %4359
        %vm4361 = vcmp.le.f32.partialorder %v4273, %v4274
        %v4362 = vsel %vm4361, %v4273, %v4274
        %v4363 = vsel %vm4361, %v2023, %v2024
        %4364 = vmin.index.xlane.f32.xlu0 %v4362
        %v4365 = vpop.xlane.xlu0 %4364
        %4366 = vset.pattern.permute.xlu0 %v4365
        %4367 = vperm.xlu0 %4366, %v4363
        %v4368 = vpop.permute.xlu0 %4367
        %vm4369 = vcmp.le.f32.partialorder %v4275, %v4276
        %v4370 = vsel %vm4369, %v4275, %v4276
        %v4371 = vsel %vm4369, %v2023, %v2024
        %4372 = vmin.index.xlane.f32.xlu0 %v4370
        %v4373 = vpop.xlane.xlu0 %4372
        %4374 = vset.pattern.permute.xlu0 %v4373
        %4375 = vperm.xlu0 %4374, %v4371
        %v4376 = vpop.permute.xlu0 %4375
        %vm4377 = vcmp.le.f32.partialorder %v4277, %v4278
        %v4378 = vsel %vm4377, %v4277, %v4278
        %v4379 = vsel %vm4377, %v2023, %v2024
        %4380 = vmin.index.xlane.f32.xlu0 %v4378
        %v4381 = vpop.xlane.xlu0 %4380
        %4382 = vset.pattern.permute.xlu0 %v4381
        %4383 = vperm.xlu0 %4382, %v4379
        %v4384 = vpop.permute.xlu0 %4383
        %vm4385 = vcmp.le.f32.partialorder %v4279, %v4280
        %v4386 = vsel %vm4385, %v4279, %v4280
        %v4387 = vsel %vm4385, %v2023, %v2024
        %4388 = vmin.index.xlane.f32.xlu0 %v4386
        %v4389 = vpop.xlane.xlu0 %4388
        %4390 = vset.pattern.permute.xlu0 %v4389
        %4391 = vperm.xlu0 %4390, %v4387
        %v4392 = vpop.permute.xlu0 %4391
        %vm4393 = vcmp.le.f32.partialorder %v4281, %v4282
        %v4394 = vsel %vm4393, %v4281, %v4282
        %v4395 = vsel %vm4393, %v2023, %v2024
        %4396 = vmin.index.xlane.f32.xlu0 %v4394
        %v4397 = vpop.xlane.xlu0 %4396
        %4398 = vset.pattern.permute.xlu0 %v4397
        %4399 = vperm.xlu0 %4398, %v4395
        %v4400 = vpop.permute.xlu0 %4399
        %vm4401 = vcmp.le.f32.partialorder %v4283, %v4284
        %v4402 = vsel %vm4401, %v4283, %v4284
        %v4403 = vsel %vm4401, %v2023, %v2024
        %4404 = vmin.index.xlane.f32.xlu0 %v4402
        %v4405 = vpop.xlane.xlu0 %4404
        %4406 = vset.pattern.permute.xlu0 %v4405
        %4407 = vperm.xlu0 %4406, %v4403
        %v4408 = vpop.permute.xlu0 %4407
        %vm4409 = vcmp.le.f32.partialorder %v4285, %v4286
        %v4410 = vsel %vm4409, %v4285, %v4286
        %v4411 = vsel %vm4409, %v2023, %v2024
        %4412 = vmin.index.xlane.f32.xlu0 %v4410
        %v4413 = vpop.xlane.xlu0 %4412
        %4414 = vset.pattern.permute.xlu0 %v4413
        %4415 = vperm.xlu0 %4414, %v4411
        %v4416 = vpop.permute.xlu0 %4415
        %vm4417 = vcmp.le.f32.partialorder %v4287, %v4288
        %v4418 = vsel %vm4417, %v4287, %v4288
        %v4419 = vsel %vm4417, %v2023, %v2024
        %4420 = vmin.index.xlane.f32.xlu0 %v4418
        %v4421 = vpop.xlane.xlu0 %4420
        %4422 = vset.pattern.permute.xlu0 %v4421
        %4423 = vperm.xlu0 %4422, %v4419
        %v4424 = vpop.permute.xlu0 %4423
        %vm4425 = vcmp.le.f32.partialorder %v4289, %v4290
        %v4426 = vsel %vm4425, %v4289, %v4290
        %v4427 = vsel %vm4425, %v2023, %v2024
        %4428 = vmin.index.xlane.f32.xlu0 %v4426
        %v4429 = vpop.xlane.xlu0 %4428
        %4430 = vset.pattern.permute.xlu0 %v4429
        %4431 = vperm.xlu0 %4430, %v4427
        %v4432 = vpop.permute.xlu0 %4431
        %vm4433 = vcmp.le.f32.partialorder %v4291, %v4292
        %v4434 = vsel %vm4433, %v4291, %v4292
        %v4435 = vsel %vm4433, %v2023, %v2024
        %4436 = vmin.index.xlane.f32.xlu0 %v4434
        %v4437 = vpop.xlane.xlu0 %4436
        %4438 = vset.pattern.permute.xlu0 %v4437
        %4439 = vperm.xlu0 %4438, %v4435
        %v4440 = vpop.permute.xlu0 %4439
        %vm4441 = vcmp.le.f32.partialorder %v4293, %v4294
        %v4442 = vsel %vm4441, %v4293, %v4294
        %v4443 = vsel %vm4441, %v2023, %v2024
        %4444 = vmin.index.xlane.f32.xlu0 %v4442
        %v4445 = vpop.xlane.xlu0 %4444
        %4446 = vset.pattern.permute.xlu0 %v4445
        %4447 = vperm.xlu0 %4446, %v4443
        %v4448 = vpop.permute.xlu0 %4447
        %vm4449 = vcmp.le.f32.partialorder %v4295, %v4296
        %v4450 = vsel %vm4449, %v4295, %v4296
        %v4451 = vsel %vm4449, %v2023, %v2024
        %4452 = vmin.index.xlane.f32.xlu0 %v4450
        %v4453 = vpop.xlane.xlu0 %4452
        %4454 = vset.pattern.permute.xlu0 %v4453
        %4455 = vperm.xlu0 %4454, %v4451
        %v4456 = vpop.permute.xlu0 %4455
        %vm4457 = vcmp.le.f32.partialorder %v4297, %v4298
        %v4458 = vsel %vm4457, %v4297, %v4298
        %v4459 = vsel %vm4457, %v2023, %v2024
        %4460 = vmin.index.xlane.f32.xlu0 %v4458
        %v4461 = vpop.xlane.xlu0 %4460
        %4462 = vset.pattern.permute.xlu0 %v4461
        %4463 = vperm.xlu0 %4462, %v4459
        %v4464 = vpop.permute.xlu0 %4463
        %vm4465 = vcmp.le.f32.partialorder %v4299, %v4300
        %v4466 = vsel %vm4465, %v4299, %v4300
        %v4467 = vsel %vm4465, %v2023, %v2024
        %4468 = vmin.index.xlane.f32.xlu0 %v4466
        %v4469 = vpop.xlane.xlu0 %4468
        %4470 = vset.pattern.permute.xlu0 %v4469
        %4471 = vperm.xlu0 %4470, %v4467
        %v4472 = vpop.permute.xlu0 %4471
        %vm4473 = vcmp.le.f32.partialorder %v4301, %v4302
        %v4474 = vsel %vm4473, %v4301, %v4302
        %v4475 = vsel %vm4473, %v2023, %v2024
        %4476 = vmin.index.xlane.f32.xlu0 %v4474
        %v4477 = vpop.xlane.xlu0 %4476
        %4478 = vset.pattern.permute.xlu0 %v4477
        %4479 = vperm.xlu0 %4478, %v4475
        %v4480 = vpop.permute.xlu0 %4479
        %vm4481 = vcmp.le.f32.partialorder %v4303, %v4304
        %v4482 = vsel %vm4481, %v4303, %v4304
        %v4483 = vsel %vm4481, %v2023, %v2024
        %4484 = vmin.index.xlane.f32.xlu0 %v4482
        %v4485 = vpop.xlane.xlu0 %4484
        %4486 = vset.pattern.permute.xlu0 %v4485
        %4487 = vperm.xlu0 %4486, %v4483
        %v4488 = vpop.permute.xlu0 %4487
        %vm4489 = vcmp.le.f32.partialorder %v4305, %v4306
        %v4490 = vsel %vm4489, %v4305, %v4306
        %v4491 = vsel %vm4489, %v2023, %v2024
        %4492 = vmin.index.xlane.f32.xlu0 %v4490
        %v4493 = vpop.xlane.xlu0 %4492
        %4494 = vset.pattern.permute.xlu0 %v4493
        %4495 = vperm.xlu0 %4494, %v4491
        %v4496 = vpop.permute.xlu0 %4495
        %vm4497 = vcmp.le.f32.partialorder %v4307, %v4308
        %v4498 = vsel %vm4497, %v4307, %v4308
        %v4499 = vsel %vm4497, %v2023, %v2024
        %4500 = vmin.index.xlane.f32.xlu0 %v4498
        %v4501 = vpop.xlane.xlu0 %4500
        %4502 = vset.pattern.permute.xlu0 %v4501
        %4503 = vperm.xlu0 %4502, %v4499
        %v4504 = vpop.permute.xlu0 %4503
        %vm4505 = vcmp.le.f32.partialorder %v4309, %v4310
        %v4506 = vsel %vm4505, %v4309, %v4310
        %v4507 = vsel %vm4505, %v2023, %v2024
        %4508 = vmin.index.xlane.f32.xlu0 %v4506
        %v4509 = vpop.xlane.xlu0 %4508
        %4510 = vset.pattern.permute.xlu0 %v4509
        %4511 = vperm.xlu0 %4510, %v4507
        %v4512 = vpop.permute.xlu0 %4511
        %vm4513 = vcmp.le.f32.partialorder %v4311, %v4312
        %v4514 = vsel %vm4513, %v4311, %v4312
        %v4515 = vsel %vm4513, %v2023, %v2024
        %4516 = vmin.index.xlane.f32.xlu0 %v4514
        %v4517 = vpop.xlane.xlu0 %4516
        %4518 = vset.pattern.permute.xlu0 %v4517
        %4519 = vperm.xlu0 %4518, %v4515
        %v4520 = vpop.permute.xlu0 %4519
        %vm4521 = vcmp.le.f32.partialorder %v4313, %v4314
        %v4522 = vsel %vm4521, %v4313, %v4314
        %v4523 = vsel %vm4521, %v2023, %v2024
        %4524 = vmin.index.xlane.f32.xlu0 %v4522
        %v4525 = vpop.xlane.xlu0 %4524
        %4526 = vset.pattern.permute.xlu0 %v4525
        %4527 = vperm.xlu0 %4526, %v4523
        %v4528 = vpop.permute.xlu0 %4527
        %vm4529 = vcmp.le.f32.partialorder %v4315, %v4316
        %v4530 = vsel %vm4529, %v4315, %v4316
        %v4531 = vsel %vm4529, %v2023, %v2024
        %4532 = vmin.index.xlane.f32.xlu0 %v4530
        %v4533 = vpop.xlane.xlu0 %4532
        %4534 = vset.pattern.permute.xlu0 %v4533
        %4535 = vperm.xlu0 %4534, %v4531
        %v4536 = vpop.permute.xlu0 %4535
        %vm4537 = vcmp.le.f32.partialorder %v4317, %v4318
        %v4538 = vsel %vm4537, %v4317, %v4318
        %v4539 = vsel %vm4537, %v2023, %v2024
        %4540 = vmin.index.xlane.f32.xlu0 %v4538
        %v4541 = vpop.xlane.xlu0 %4540
        %4542 = vset.pattern.permute.xlu0 %v4541
        %4543 = vperm.xlu0 %4542, %v4539
        %v4544 = vpop.permute.xlu0 %4543
        %vm4545 = vcmp.le.f32.partialorder %v4319, %v4320
        %v4546 = vsel %vm4545, %v4319, %v4320
        %v4547 = vsel %vm4545, %v2023, %v2024
        %4548 = vmin.index.xlane.f32.xlu0 %v4546
        %v4549 = vpop.xlane.xlu0 %4548
        %4550 = vset.pattern.permute.xlu0 %v4549
        %4551 = vperm.xlu0 %4550, %v4547
        %v4552 = vpop.permute.xlu0 %4551
        %vm4553 = vcmp.le.f32.partialorder %v4321, %v4322
        %v4554 = vsel %vm4553, %v4321, %v4322
        %v4555 = vsel %vm4553, %v2023, %v2024
        %4556 = vmin.index.xlane.f32.xlu0 %v4554
        %v4557 = vpop.xlane.xlu0 %4556
        %4558 = vset.pattern.permute.xlu0 %v4557
        %4559 = vperm.xlu0 %4558, %v4555
        %v4560 = vpop.permute.xlu0 %4559
        %vm4561 = vcmp.le.f32.partialorder %v4323, %v4324
        %v4562 = vsel %vm4561, %v4323, %v4324
        %v4563 = vsel %vm4561, %v2023, %v2024
        %4564 = vmin.index.xlane.f32.xlu0 %v4562
        %v4565 = vpop.xlane.xlu0 %4564
        %4566 = vset.pattern.permute.xlu0 %v4565
        %4567 = vperm.xlu0 %4566, %v4563
        %v4568 = vpop.permute.xlu0 %4567
        %vm4569 = vcmp.le.f32.partialorder %v4325, %v4326
        %v4570 = vsel %vm4569, %v4325, %v4326
        %v4571 = vsel %vm4569, %v2023, %v2024
        %4572 = vmin.index.xlane.f32.xlu0 %v4570
        %v4573 = vpop.xlane.xlu0 %4572
        %4574 = vset.pattern.permute.xlu0 %v4573
        %4575 = vperm.xlu0 %4574, %v4571
        %v4576 = vpop.permute.xlu0 %4575
        %vm4577 = vcmp.le.f32.partialorder %v4327, %v4328
        %v4578 = vsel %vm4577, %v4327, %v4328
        %v4579 = vsel %vm4577, %v2023, %v2024
        %4580 = vmin.index.xlane.f32.xlu0 %v4578
        %v4581 = vpop.xlane.xlu0 %4580
        %4582 = vset.pattern.permute.xlu0 %v4581
        %4583 = vperm.xlu0 %4582, %v4579
        %v4584 = vpop.permute.xlu0 %4583
        %vm4585 = vcmp.eq.s32.totalorder %v2023, %v4336
        %vm4586 = vcmp.eq.s32.totalorder %v2024, %v4336
        %vm4587 = vcmp.eq.s32.totalorder %v2023, %v4344
        %vm4588 = vcmp.eq.s32.totalorder %v2024, %v4344
        %vm4589 = vcmp.eq.s32.totalorder %v2023, %v4352
        %vm4590 = vcmp.eq.s32.totalorder %v2024, %v4352
        %vm4591 = vcmp.eq.s32.totalorder %v2023, %v4360
        %vm4592 = vcmp.eq.s32.totalorder %v2024, %v4360
        %vm4593 = vcmp.eq.s32.totalorder %v2023, %v4368
        %vm4594 = vcmp.eq.s32.totalorder %v2024, %v4368
        %vm4595 = vcmp.eq.s32.totalorder %v2023, %v4376
        %vm4596 = vcmp.eq.s32.totalorder %v2024, %v4376
        %vm4597 = vcmp.eq.s32.totalorder %v2023, %v4384
        %vm4598 = vcmp.eq.s32.totalorder %v2024, %v4384
        %vm4599 = vcmp.eq.s32.totalorder %v2023, %v4392
        %vm4600 = vcmp.eq.s32.totalorder %v2024, %v4392
        %vm4601 = vcmp.eq.s32.totalorder %v2023, %v4400
        %vm4602 = vcmp.eq.s32.totalorder %v2024, %v4400
        %vm4603 = vcmp.eq.s32.totalorder %v2023, %v4408
        %vm4604 = vcmp.eq.s32.totalorder %v2024, %v4408
        %vm4605 = vcmp.eq.s32.totalorder %v2023, %v4416
        %vm4606 = vcmp.eq.s32.totalorder %v2024, %v4416
        %vm4607 = vcmp.eq.s32.totalorder %v2023, %v4424
        %vm4608 = vcmp.eq.s32.totalorder %v2024, %v4424
        %vm4609 = vcmp.eq.s32.totalorder %v2023, %v4432
        %vm4610 = vcmp.eq.s32.totalorder %v2024, %v4432
        %vm4611 = vcmp.eq.s32.totalorder %v2023, %v4440
        %vm4612 = vcmp.eq.s32.totalorder %v2024, %v4440
        %vm4613 = vcmp.eq.s32.totalorder %v2023, %v4448
        %vm4614 = vcmp.eq.s32.totalorder %v2024, %v4448
        %vm4615 = vcmp.eq.s32.totalorder %v2023, %v4456
        %vm4616 = vcmp.eq.s32.totalorder %v2024, %v4456
        %vm4617 = vcmp.eq.s32.totalorder %v2023, %v4464
        %vm4618 = vcmp.eq.s32.totalorder %v2024, %v4464
        %vm4619 = vcmp.eq.s32.totalorder %v2023, %v4472
        %vm4620 = vcmp.eq.s32.totalorder %v2024, %v4472
        %vm4621 = vcmp.eq.s32.totalorder %v2023, %v4480
        %vm4622 = vcmp.eq.s32.totalorder %v2024, %v4480
        %vm4623 = vcmp.eq.s32.totalorder %v2023, %v4488
        %vm4624 = vcmp.eq.s32.totalorder %v2024, %v4488
        %vm4625 = vcmp.eq.s32.totalorder %v2023, %v4496
        %vm4626 = vcmp.eq.s32.totalorder %v2024, %v4496
        %vm4627 = vcmp.eq.s32.totalorder %v2023, %v4504
        %vm4628 = vcmp.eq.s32.totalorder %v2024, %v4504
        %vm4629 = vcmp.eq.s32.totalorder %v2023, %v4512
        %vm4630 = vcmp.eq.s32.totalorder %v2024, %v4512
        %vm4631 = vcmp.eq.s32.totalorder %v2023, %v4520
        %vm4632 = vcmp.eq.s32.totalorder %v2024, %v4520
        %vm4633 = vcmp.eq.s32.totalorder %v2023, %v4528
        %vm4634 = vcmp.eq.s32.totalorder %v2024, %v4528
        %vm4635 = vcmp.eq.s32.totalorder %v2023, %v4536
        %vm4636 = vcmp.eq.s32.totalorder %v2024, %v4536
        %vm4637 = vcmp.eq.s32.totalorder %v2023, %v4544
        %vm4638 = vcmp.eq.s32.totalorder %v2024, %v4544
        %vm4639 = vcmp.eq.s32.totalorder %v2023, %v4552
        %vm4640 = vcmp.eq.s32.totalorder %v2024, %v4552
        %vm4641 = vcmp.eq.s32.totalorder %v2023, %v4560
        %vm4642 = vcmp.eq.s32.totalorder %v2024, %v4560
        %vm4643 = vcmp.eq.s32.totalorder %v2023, %v4568
        %vm4644 = vcmp.eq.s32.totalorder %v2024, %v4568
        %vm4645 = vcmp.eq.s32.totalorder %v2023, %v4576
        %vm4646 = vcmp.eq.s32.totalorder %v2024, %v4576
        %vm4647 = vcmp.eq.s32.totalorder %v2023, %v4584
        %vm4648 = vcmp.eq.s32.totalorder %v2024, %v4584
        %v4649 = vsel %vm4585, 3e+38, %v4265
        %v4650 = vsel %vm4586, 3e+38, %v4266
        %v4651 = vsel %vm4587, 3e+38, %v4267
        %v4652 = vsel %vm4588, 3e+38, %v4268
        %v4653 = vsel %vm4589, 3e+38, %v4269
        %v4654 = vsel %vm4590, 3e+38, %v4270
        %v4655 = vsel %vm4591, 3e+38, %v4271
        %v4656 = vsel %vm4592, 3e+38, %v4272
        %v4657 = vsel %vm4593, 3e+38, %v4273
        %v4658 = vsel %vm4594, 3e+38, %v4274
        %v4659 = vsel %vm4595, 3e+38, %v4275
        %v4660 = vsel %vm4596, 3e+38, %v4276
        %v4661 = vsel %vm4597, 3e+38, %v4277
        %v4662 = vsel %vm4598, 3e+38, %v4278
        %v4663 = vsel %vm4599, 3e+38, %v4279
        %v4664 = vsel %vm4600, 3e+38, %v4280
        %v4665 = vsel %vm4601, 3e+38, %v4281
        %v4666 = vsel %vm4602, 3e+38, %v4282
        %v4667 = vsel %vm4603, 3e+38, %v4283
        %v4668 = vsel %vm4604, 3e+38, %v4284
        %v4669 = vsel %vm4605, 3e+38, %v4285
        %v4670 = vsel %vm4606, 3e+38, %v4286
        %v4671 = vsel %vm4607, 3e+38, %v4287
        %v4672 = vsel %vm4608, 3e+38, %v4288
        %v4673 = vsel %vm4609, 3e+38, %v4289
        %v4674 = vsel %vm4610, 3e+38, %v4290
        %v4675 = vsel %vm4611, 3e+38, %v4291
        %v4676 = vsel %vm4612, 3e+38, %v4292
        %v4677 = vsel %vm4613, 3e+38, %v4293
        %v4678 = vsel %vm4614, 3e+38, %v4294
        %v4679 = vsel %vm4615, 3e+38, %v4295
        %v4680 = vsel %vm4616, 3e+38, %v4296
        %v4681 = vsel %vm4617, 3e+38, %v4297
        %v4682 = vsel %vm4618, 3e+38, %v4298
        %v4683 = vsel %vm4619, 3e+38, %v4299
        %v4684 = vsel %vm4620, 3e+38, %v4300
        %v4685 = vsel %vm4621, 3e+38, %v4301
        %v4686 = vsel %vm4622, 3e+38, %v4302
        %v4687 = vsel %vm4623, 3e+38, %v4303
        %v4688 = vsel %vm4624, 3e+38, %v4304
        %v4689 = vsel %vm4625, 3e+38, %v4305
        %v4690 = vsel %vm4626, 3e+38, %v4306
        %v4691 = vsel %vm4627, 3e+38, %v4307
        %v4692 = vsel %vm4628, 3e+38, %v4308
        %v4693 = vsel %vm4629, 3e+38, %v4309
        %v4694 = vsel %vm4630, 3e+38, %v4310
        %v4695 = vsel %vm4631, 3e+38, %v4311
        %v4696 = vsel %vm4632, 3e+38, %v4312
        %v4697 = vsel %vm4633, 3e+38, %v4313
        %v4698 = vsel %vm4634, 3e+38, %v4314
        %v4699 = vsel %vm4635, 3e+38, %v4315
        %v4700 = vsel %vm4636, 3e+38, %v4316
        %v4701 = vsel %vm4637, 3e+38, %v4317
        %v4702 = vsel %vm4638, 3e+38, %v4318
        %v4703 = vsel %vm4639, 3e+38, %v4319
        %v4704 = vsel %vm4640, 3e+38, %v4320
        %v4705 = vsel %vm4641, 3e+38, %v4321
        %v4706 = vsel %vm4642, 3e+38, %v4322
        %v4707 = vsel %vm4643, 3e+38, %v4323
        %v4708 = vsel %vm4644, 3e+38, %v4324
        %v4709 = vsel %vm4645, 3e+38, %v4325
        %v4710 = vsel %vm4646, 3e+38, %v4326
        %v4711 = vsel %vm4647, 3e+38, %v4327
        %v4712 = vsel %vm4648, 3e+38, %v4328
        %vm4713 = vcmp.le.f32.partialorder %v4649, %v4650
        %v4714 = vsel %vm4713, %v4649, %v4650
        %v4715 = vsel %vm4713, %v2023, %v2024
        %4716 = vmin.index.xlane.f32.xlu0 %v4714
        %v4717 = vpop.xlane.xlu0 %4716
        %4718 = vset.pattern.permute.xlu0 %v4717
        %4719 = vperm.xlu0 %4718, %v4715
        %v4720 = vpop.permute.xlu0 %4719
        %vm4721 = vcmp.le.f32.partialorder %v4651, %v4652
        %v4722 = vsel %vm4721, %v4651, %v4652
        %v4723 = vsel %vm4721, %v2023, %v2024
        %4724 = vmin.index.xlane.f32.xlu0 %v4722
        %v4725 = vpop.xlane.xlu0 %4724
        %4726 = vset.pattern.permute.xlu0 %v4725
        %4727 = vperm.xlu0 %4726, %v4723
        %v4728 = vpop.permute.xlu0 %4727
        %vm4729 = vcmp.le.f32.partialorder %v4653, %v4654
        %v4730 = vsel %vm4729, %v4653, %v4654
        %v4731 = vsel %vm4729, %v2023, %v2024
        %4732 = vmin.index.xlane.f32.xlu0 %v4730
        %v4733 = vpop.xlane.xlu0 %4732
        %4734 = vset.pattern.permute.xlu0 %v4733
        %4735 = vperm.xlu0 %4734, %v4731
        %v4736 = vpop.permute.xlu0 %4735
        %vm4737 = vcmp.le.f32.partialorder %v4655, %v4656
        %v4738 = vsel %vm4737, %v4655, %v4656
        %v4739 = vsel %vm4737, %v2023, %v2024
        %4740 = vmin.index.xlane.f32.xlu0 %v4738
        %v4741 = vpop.xlane.xlu0 %4740
        %4742 = vset.pattern.permute.xlu0 %v4741
        %4743 = vperm.xlu0 %4742, %v4739
        %v4744 = vpop.permute.xlu0 %4743
        %vm4745 = vcmp.le.f32.partialorder %v4657, %v4658
        %v4746 = vsel %vm4745, %v4657, %v4658
        %v4747 = vsel %vm4745, %v2023, %v2024
        %4748 = vmin.index.xlane.f32.xlu0 %v4746
        %v4749 = vpop.xlane.xlu0 %4748
        %4750 = vset.pattern.permute.xlu0 %v4749
        %4751 = vperm.xlu0 %4750, %v4747
        %v4752 = vpop.permute.xlu0 %4751
        %vm4753 = vcmp.le.f32.partialorder %v4659, %v4660
        %v4754 = vsel %vm4753, %v4659, %v4660
        %v4755 = vsel %vm4753, %v2023, %v2024
        %4756 = vmin.index.xlane.f32.xlu0 %v4754
        %v4757 = vpop.xlane.xlu0 %4756
        %4758 = vset.pattern.permute.xlu0 %v4757
        %4759 = vperm.xlu0 %4758, %v4755
        %v4760 = vpop.permute.xlu0 %4759
        %vm4761 = vcmp.le.f32.partialorder %v4661, %v4662
        %v4762 = vsel %vm4761, %v4661, %v4662
        %v4763 = vsel %vm4761, %v2023, %v2024
        %4764 = vmin.index.xlane.f32.xlu0 %v4762
        %v4765 = vpop.xlane.xlu0 %4764
        %4766 = vset.pattern.permute.xlu0 %v4765
        %4767 = vperm.xlu0 %4766, %v4763
        %v4768 = vpop.permute.xlu0 %4767
        %vm4769 = vcmp.le.f32.partialorder %v4663, %v4664
        %v4770 = vsel %vm4769, %v4663, %v4664
        %v4771 = vsel %vm4769, %v2023, %v2024
        %4772 = vmin.index.xlane.f32.xlu0 %v4770
        %v4773 = vpop.xlane.xlu0 %4772
        %4774 = vset.pattern.permute.xlu0 %v4773
        %4775 = vperm.xlu0 %4774, %v4771
        %v4776 = vpop.permute.xlu0 %4775
        %vm4777 = vcmp.le.f32.partialorder %v4665, %v4666
        %v4778 = vsel %vm4777, %v4665, %v4666
        %v4779 = vsel %vm4777, %v2023, %v2024
        %4780 = vmin.index.xlane.f32.xlu0 %v4778
        %v4781 = vpop.xlane.xlu0 %4780
        %4782 = vset.pattern.permute.xlu0 %v4781
        %4783 = vperm.xlu0 %4782, %v4779
        %v4784 = vpop.permute.xlu0 %4783
        %vm4785 = vcmp.le.f32.partialorder %v4667, %v4668
        %v4786 = vsel %vm4785, %v4667, %v4668
        %v4787 = vsel %vm4785, %v2023, %v2024
        %4788 = vmin.index.xlane.f32.xlu0 %v4786
        %v4789 = vpop.xlane.xlu0 %4788
        %4790 = vset.pattern.permute.xlu0 %v4789
        %4791 = vperm.xlu0 %4790, %v4787
        %v4792 = vpop.permute.xlu0 %4791
        %vm4793 = vcmp.le.f32.partialorder %v4669, %v4670
        %v4794 = vsel %vm4793, %v4669, %v4670
        %v4795 = vsel %vm4793, %v2023, %v2024
        %4796 = vmin.index.xlane.f32.xlu0 %v4794
        %v4797 = vpop.xlane.xlu0 %4796
        %4798 = vset.pattern.permute.xlu0 %v4797
        %4799 = vperm.xlu0 %4798, %v4795
        %v4800 = vpop.permute.xlu0 %4799
        %vm4801 = vcmp.le.f32.partialorder %v4671, %v4672
        %v4802 = vsel %vm4801, %v4671, %v4672
        %v4803 = vsel %vm4801, %v2023, %v2024
        %4804 = vmin.index.xlane.f32.xlu0 %v4802
        %v4805 = vpop.xlane.xlu0 %4804
        %4806 = vset.pattern.permute.xlu0 %v4805
        %4807 = vperm.xlu0 %4806, %v4803
        %v4808 = vpop.permute.xlu0 %4807
        %vm4809 = vcmp.le.f32.partialorder %v4673, %v4674
        %v4810 = vsel %vm4809, %v4673, %v4674
        %v4811 = vsel %vm4809, %v2023, %v2024
        %4812 = vmin.index.xlane.f32.xlu0 %v4810
        %v4813 = vpop.xlane.xlu0 %4812
        %4814 = vset.pattern.permute.xlu0 %v4813
        %4815 = vperm.xlu0 %4814, %v4811
        %v4816 = vpop.permute.xlu0 %4815
        %vm4817 = vcmp.le.f32.partialorder %v4675, %v4676
        %v4818 = vsel %vm4817, %v4675, %v4676
        %v4819 = vsel %vm4817, %v2023, %v2024
        %4820 = vmin.index.xlane.f32.xlu0 %v4818
        %v4821 = vpop.xlane.xlu0 %4820
        %4822 = vset.pattern.permute.xlu0 %v4821
        %4823 = vperm.xlu0 %4822, %v4819
        %v4824 = vpop.permute.xlu0 %4823
        %vm4825 = vcmp.le.f32.partialorder %v4677, %v4678
        %v4826 = vsel %vm4825, %v4677, %v4678
        %v4827 = vsel %vm4825, %v2023, %v2024
        %4828 = vmin.index.xlane.f32.xlu0 %v4826
        %v4829 = vpop.xlane.xlu0 %4828
        %4830 = vset.pattern.permute.xlu0 %v4829
        %4831 = vperm.xlu0 %4830, %v4827
        %v4832 = vpop.permute.xlu0 %4831
        %vm4833 = vcmp.le.f32.partialorder %v4679, %v4680
        %v4834 = vsel %vm4833, %v4679, %v4680
        %v4835 = vsel %vm4833, %v2023, %v2024
        %4836 = vmin.index.xlane.f32.xlu0 %v4834
        %v4837 = vpop.xlane.xlu0 %4836
        %4838 = vset.pattern.permute.xlu0 %v4837
        %4839 = vperm.xlu0 %4838, %v4835
        %v4840 = vpop.permute.xlu0 %4839
        %vm4841 = vcmp.le.f32.partialorder %v4681, %v4682
        %v4842 = vsel %vm4841, %v4681, %v4682
        %v4843 = vsel %vm4841, %v2023, %v2024
        %4844 = vmin.index.xlane.f32.xlu0 %v4842
        %v4845 = vpop.xlane.xlu0 %4844
        %4846 = vset.pattern.permute.xlu0 %v4845
        %4847 = vperm.xlu0 %4846, %v4843
        %v4848 = vpop.permute.xlu0 %4847
        %vm4849 = vcmp.le.f32.partialorder %v4683, %v4684
        %v4850 = vsel %vm4849, %v4683, %v4684
        %v4851 = vsel %vm4849, %v2023, %v2024
        %4852 = vmin.index.xlane.f32.xlu0 %v4850
        %v4853 = vpop.xlane.xlu0 %4852
        %4854 = vset.pattern.permute.xlu0 %v4853
        %4855 = vperm.xlu0 %4854, %v4851
        %v4856 = vpop.permute.xlu0 %4855
        %vm4857 = vcmp.le.f32.partialorder %v4685, %v4686
        %v4858 = vsel %vm4857, %v4685, %v4686
        %v4859 = vsel %vm4857, %v2023, %v2024
        %4860 = vmin.index.xlane.f32.xlu0 %v4858
        %v4861 = vpop.xlane.xlu0 %4860
        %4862 = vset.pattern.permute.xlu0 %v4861
        %4863 = vperm.xlu0 %4862, %v4859
        %v4864 = vpop.permute.xlu0 %4863
        %vm4865 = vcmp.le.f32.partialorder %v4687, %v4688
        %v4866 = vsel %vm4865, %v4687, %v4688
        %v4867 = vsel %vm4865, %v2023, %v2024
        %4868 = vmin.index.xlane.f32.xlu0 %v4866
        %v4869 = vpop.xlane.xlu0 %4868
        %4870 = vset.pattern.permute.xlu0 %v4869
        %4871 = vperm.xlu0 %4870, %v4867
        %v4872 = vpop.permute.xlu0 %4871
        %vm4873 = vcmp.le.f32.partialorder %v4689, %v4690
        %v4874 = vsel %vm4873, %v4689, %v4690
        %v4875 = vsel %vm4873, %v2023, %v2024
        %4876 = vmin.index.xlane.f32.xlu0 %v4874
        %v4877 = vpop.xlane.xlu0 %4876
        %4878 = vset.pattern.permute.xlu0 %v4877
        %4879 = vperm.xlu0 %4878, %v4875
        %v4880 = vpop.permute.xlu0 %4879
        %vm4881 = vcmp.le.f32.partialorder %v4691, %v4692
        %v4882 = vsel %vm4881, %v4691, %v4692
        %v4883 = vsel %vm4881, %v2023, %v2024
        %4884 = vmin.index.xlane.f32.xlu0 %v4882
        %v4885 = vpop.xlane.xlu0 %4884
        %4886 = vset.pattern.permute.xlu0 %v4885
        %4887 = vperm.xlu0 %4886, %v4883
        %v4888 = vpop.permute.xlu0 %4887
        %vm4889 = vcmp.le.f32.partialorder %v4693, %v4694
        %v4890 = vsel %vm4889, %v4693, %v4694
        %v4891 = vsel %vm4889, %v2023, %v2024
        %4892 = vmin.index.xlane.f32.xlu0 %v4890
        %v4893 = vpop.xlane.xlu0 %4892
        %4894 = vset.pattern.permute.xlu0 %v4893
        %4895 = vperm.xlu0 %4894, %v4891
        %v4896 = vpop.permute.xlu0 %4895
        %vm4897 = vcmp.le.f32.partialorder %v4695, %v4696
        %v4898 = vsel %vm4897, %v4695, %v4696
        %v4899 = vsel %vm4897, %v2023, %v2024
        %4900 = vmin.index.xlane.f32.xlu0 %v4898
        %v4901 = vpop.xlane.xlu0 %4900
        %4902 = vset.pattern.permute.xlu0 %v4901
        %4903 = vperm.xlu0 %4902, %v4899
        %v4904 = vpop.permute.xlu0 %4903
        %vm4905 = vcmp.le.f32.partialorder %v4697, %v4698
        %v4906 = vsel %vm4905, %v4697, %v4698
        %v4907 = vsel %vm4905, %v2023, %v2024
        %4908 = vmin.index.xlane.f32.xlu0 %v4906
        %v4909 = vpop.xlane.xlu0 %4908
        %4910 = vset.pattern.permute.xlu0 %v4909
        %4911 = vperm.xlu0 %4910, %v4907
        %v4912 = vpop.permute.xlu0 %4911
        %vm4913 = vcmp.le.f32.partialorder %v4699, %v4700
        %v4914 = vsel %vm4913, %v4699, %v4700
        %v4915 = vsel %vm4913, %v2023, %v2024
        %4916 = vmin.index.xlane.f32.xlu0 %v4914
        %v4917 = vpop.xlane.xlu0 %4916
        %4918 = vset.pattern.permute.xlu0 %v4917
        %4919 = vperm.xlu0 %4918, %v4915
        %v4920 = vpop.permute.xlu0 %4919
        %vm4921 = vcmp.le.f32.partialorder %v4701, %v4702
        %v4922 = vsel %vm4921, %v4701, %v4702
        %v4923 = vsel %vm4921, %v2023, %v2024
        %4924 = vmin.index.xlane.f32.xlu0 %v4922
        %v4925 = vpop.xlane.xlu0 %4924
        %4926 = vset.pattern.permute.xlu0 %v4925
        %4927 = vperm.xlu0 %4926, %v4923
        %v4928 = vpop.permute.xlu0 %4927
        %vm4929 = vcmp.le.f32.partialorder %v4703, %v4704
        %v4930 = vsel %vm4929, %v4703, %v4704
        %v4931 = vsel %vm4929, %v2023, %v2024
        %4932 = vmin.index.xlane.f32.xlu0 %v4930
        %v4933 = vpop.xlane.xlu0 %4932
        %4934 = vset.pattern.permute.xlu0 %v4933
        %4935 = vperm.xlu0 %4934, %v4931
        %v4936 = vpop.permute.xlu0 %4935
        %vm4937 = vcmp.le.f32.partialorder %v4705, %v4706
        %v4938 = vsel %vm4937, %v4705, %v4706
        %v4939 = vsel %vm4937, %v2023, %v2024
        %4940 = vmin.index.xlane.f32.xlu0 %v4938
        %v4941 = vpop.xlane.xlu0 %4940
        %4942 = vset.pattern.permute.xlu0 %v4941
        %4943 = vperm.xlu0 %4942, %v4939
        %v4944 = vpop.permute.xlu0 %4943
        %vm4945 = vcmp.le.f32.partialorder %v4707, %v4708
        %v4946 = vsel %vm4945, %v4707, %v4708
        %v4947 = vsel %vm4945, %v2023, %v2024
        %4948 = vmin.index.xlane.f32.xlu0 %v4946
        %v4949 = vpop.xlane.xlu0 %4948
        %4950 = vset.pattern.permute.xlu0 %v4949
        %4951 = vperm.xlu0 %4950, %v4947
        %v4952 = vpop.permute.xlu0 %4951
        %vm4953 = vcmp.le.f32.partialorder %v4709, %v4710
        %v4954 = vsel %vm4953, %v4709, %v4710
        %v4955 = vsel %vm4953, %v2023, %v2024
        %4956 = vmin.index.xlane.f32.xlu0 %v4954
        %v4957 = vpop.xlane.xlu0 %4956
        %4958 = vset.pattern.permute.xlu0 %v4957
        %4959 = vperm.xlu0 %4958, %v4955
        %v4960 = vpop.permute.xlu0 %4959
        %vm4961 = vcmp.le.f32.partialorder %v4711, %v4712
        %v4962 = vsel %vm4961, %v4711, %v4712
        %v4963 = vsel %vm4961, %v2023, %v2024
        %4964 = vmin.index.xlane.f32.xlu0 %v4962
        %v4965 = vpop.xlane.xlu0 %4964
        %4966 = vset.pattern.permute.xlu0 %v4965
        %4967 = vperm.xlu0 %4966, %v4963
        %v4968 = vpop.permute.xlu0 %4967
        %v4969 = vperm.slane %v2032, %v2023
        %v4970 = vadd.s32 %v2023, 4294967288
        %v4971 = vperm.slane %v2040, %v4970
        %vm4972 = vcmask 130112
        %v4973 = vsel %vm4972, %v4971, %v4969
        %v4974 = vadd.s32 %v2023, 4294967280
        %v4975 = vperm.slane %v2048, %v4974
        %vm4976 = vcmask 195712
        %v4977 = vsel %vm4976, %v4975, %v4973
        %v4978 = vadd.s32 %v2023, 4294967272
        %v4979 = vperm.slane %v2056, %v4978
        %vm4980 = vcmask 261312
        %v4981 = vsel %vm4980, %v4979, %v4977
        %v4982 = vadd.s32 %v2023, 4294967264
        %v4983 = vperm.slane %v2064, %v4982
        %vm4984 = vcmask 326912
        %v4985 = vsel %vm4984, %v4983, %v4981
        %v4986 = vadd.s32 %v2023, 4294967256
        %v4987 = vperm.slane %v2072, %v4986
        %vm4988 = vcmask 392512
        %v4989 = vsel %vm4988, %v4987, %v4985
        %v4990 = vadd.s32 %v2023, 4294967248
        %v4991 = vperm.slane %v2080, %v4990
        %vm4992 = vcmask 458112
        %v4993 = vsel %vm4992, %v4991, %v4989
        %v4994 = vadd.s32 %v2023, 4294967240
        %v4995 = vperm.slane %v2088, %v4994
        %vm4996 = vcmask 523712
        %v4997 = vsel %vm4996, %v4995, %v4993
        %v4998 = vadd.s32 %v2023, 4294967232
        %v4999 = vperm.slane %v2096, %v4998
        %vm5000 = vcmask 589312
        %v5001 = vsel %vm5000, %v4999, %v4997
        %v5002 = vadd.s32 %v2023, 4294967224
        %v5003 = vperm.slane %v2104, %v5002
        %vm5004 = vcmask 654912
        %v5005 = vsel %vm5004, %v5003, %v5001
        %v5006 = vadd.s32 %v2023, 4294967216
        %v5007 = vperm.slane %v2112, %v5006
        %vm5008 = vcmask 720512
        %v5009 = vsel %vm5008, %v5007, %v5005
        %v5010 = vadd.s32 %v2023, 4294967208
        %v5011 = vperm.slane %v2120, %v5010
        %vm5012 = vcmask 786112
        %v5013 = vsel %vm5012, %v5011, %v5009
        %v5014 = vadd.s32 %v2023, 4294967200
        %v5015 = vperm.slane %v2128, %v5014
        %vm5016 = vcmask 851712
        %v5017 = vsel %vm5016, %v5015, %v5013
        %v5018 = vadd.s32 %v2023, 4294967192
        %v5019 = vperm.slane %v2136, %v5018
        %vm5020 = vcmask 917312
        %v5021 = vsel %vm5020, %v5019, %v5017
        %v5022 = vadd.s32 %v2023, 4294967184
        %v5023 = vperm.slane %v2144, %v5022
        %vm5024 = vcmask 982912
        %v5025 = vsel %vm5024, %v5023, %v5021
        %v5026 = vadd.s32 %v2023, 4294967176
        %v5027 = vperm.slane %v2152, %v5026
        %vm5028 = vcmask 1048512
        %v5029 = vsel %vm5028, %v5027, %v5025
        %v5030 = vperm.slane %v2160, %v2023
        %v5031 = vperm.slane %v2168, %v4970
        %v5032 = vsel %vm4972, %v5031, %v5030
        %v5033 = vperm.slane %v2176, %v4974
        %v5034 = vsel %vm4976, %v5033, %v5032
        %v5035 = vperm.slane %v2184, %v4978
        %v5036 = vsel %vm4980, %v5035, %v5034
        %v5037 = vperm.slane %v2192, %v4982
        %v5038 = vsel %vm4984, %v5037, %v5036
        %v5039 = vperm.slane %v2200, %v4986
        %v5040 = vsel %vm4988, %v5039, %v5038
        %v5041 = vperm.slane %v2208, %v4990
        %v5042 = vsel %vm4992, %v5041, %v5040
        %v5043 = vperm.slane %v2216, %v4994
        %v5044 = vsel %vm4996, %v5043, %v5042
        %v5045 = vperm.slane %v2224, %v4998
        %v5046 = vsel %vm5000, %v5045, %v5044
        %v5047 = vperm.slane %v2232, %v5002
        %v5048 = vsel %vm5004, %v5047, %v5046
        %v5049 = vperm.slane %v2240, %v5006
        %v5050 = vsel %vm5008, %v5049, %v5048
        %v5051 = vperm.slane %v2248, %v5010
        %v5052 = vsel %vm5012, %v5051, %v5050
        %v5053 = vperm.slane %v2256, %v5014
        %v5054 = vsel %vm5016, %v5053, %v5052
        %v5055 = vperm.slane %v2264, %v5018
        %v5056 = vsel %vm5020, %v5055, %v5054
        %v5057 = vperm.slane %v2272, %v5022
        %v5058 = vsel %vm5024, %v5057, %v5056
        %v5059 = vperm.slane %v2280, %v5026
        %v5060 = vsel %vm5028, %v5059, %v5058
        %v5061 = vperm.slane %v2416, %v2023
        %v5062 = vperm.slane %v2424, %v4970
        %v5063 = vsel %vm4972, %v5062, %v5061
        %v5064 = vperm.slane %v2432, %v4974
        %v5065 = vsel %vm4976, %v5064, %v5063
        %v5066 = vperm.slane %v2440, %v4978
        %v5067 = vsel %vm4980, %v5066, %v5065
        %v5068 = vperm.slane %v2448, %v4982
        %v5069 = vsel %vm4984, %v5068, %v5067
        %v5070 = vperm.slane %v2456, %v4986
        %v5071 = vsel %vm4988, %v5070, %v5069
        %v5072 = vperm.slane %v2464, %v4990
        %v5073 = vsel %vm4992, %v5072, %v5071
        %v5074 = vperm.slane %v2472, %v4994
        %v5075 = vsel %vm4996, %v5074, %v5073
        %v5076 = vperm.slane %v2480, %v4998
        %v5077 = vsel %vm5000, %v5076, %v5075
        %v5078 = vperm.slane %v2488, %v5002
        %v5079 = vsel %vm5004, %v5078, %v5077
        %v5080 = vperm.slane %v2496, %v5006
        %v5081 = vsel %vm5008, %v5080, %v5079
        %v5082 = vperm.slane %v2504, %v5010
        %v5083 = vsel %vm5012, %v5082, %v5081
        %v5084 = vperm.slane %v2512, %v5014
        %v5085 = vsel %vm5016, %v5084, %v5083
        %v5086 = vperm.slane %v2520, %v5018
        %v5087 = vsel %vm5020, %v5086, %v5085
        %v5088 = vperm.slane %v2528, %v5022
        %v5089 = vsel %vm5024, %v5088, %v5087
        %v5090 = vperm.slane %v2536, %v5026
        %v5091 = vsel %vm5028, %v5090, %v5089
        %v5092 = vperm.slane %v2544, %v2023
        %v5093 = vperm.slane %v2552, %v4970
        %v5094 = vsel %vm4972, %v5093, %v5092
        %v5095 = vperm.slane %v2560, %v4974
        %v5096 = vsel %vm4976, %v5095, %v5094
        %v5097 = vperm.slane %v2568, %v4978
        %v5098 = vsel %vm4980, %v5097, %v5096
        %v5099 = vperm.slane %v2576, %v4982
        %v5100 = vsel %vm4984, %v5099, %v5098
        %v5101 = vperm.slane %v2584, %v4986
        %v5102 = vsel %vm4988, %v5101, %v5100
        %v5103 = vperm.slane %v2592, %v4990
        %v5104 = vsel %vm4992, %v5103, %v5102
        %v5105 = vperm.slane %v2600, %v4994
        %v5106 = vsel %vm4996, %v5105, %v5104
        %v5107 = vperm.slane %v2608, %v4998
        %v5108 = vsel %vm5000, %v5107, %v5106
        %v5109 = vperm.slane %v2616, %v5002
        %v5110 = vsel %vm5004, %v5109, %v5108
        %v5111 = vperm.slane %v2624, %v5006
        %v5112 = vsel %vm5008, %v5111, %v5110
        %v5113 = vperm.slane %v2632, %v5010
        %v5114 = vsel %vm5012, %v5113, %v5112
        %v5115 = vperm.slane %v2640, %v5014
        %v5116 = vsel %vm5016, %v5115, %v5114
        %v5117 = vperm.slane %v2648, %v5018
        %v5118 = vsel %vm5020, %v5117, %v5116
        %v5119 = vperm.slane %v2656, %v5022
        %v5120 = vsel %vm5024, %v5119, %v5118
        %v5121 = vperm.slane %v2664, %v5026
        %v5122 = vsel %vm5028, %v5121, %v5120
        %v5123 = vperm.slane %v2800, %v2023
        %v5124 = vperm.slane %v2808, %v4970
        %v5125 = vsel %vm4972, %v5124, %v5123
        %v5126 = vperm.slane %v2816, %v4974
        %v5127 = vsel %vm4976, %v5126, %v5125
        %v5128 = vperm.slane %v2824, %v4978
        %v5129 = vsel %vm4980, %v5128, %v5127
        %v5130 = vperm.slane %v2832, %v4982
        %v5131 = vsel %vm4984, %v5130, %v5129
        %v5132 = vperm.slane %v2840, %v4986
        %v5133 = vsel %vm4988, %v5132, %v5131
        %v5134 = vperm.slane %v2848, %v4990
        %v5135 = vsel %vm4992, %v5134, %v5133
        %v5136 = vperm.slane %v2856, %v4994
        %v5137 = vsel %vm4996, %v5136, %v5135
        %v5138 = vperm.slane %v2864, %v4998
        %v5139 = vsel %vm5000, %v5138, %v5137
        %v5140 = vperm.slane %v2872, %v5002
        %v5141 = vsel %vm5004, %v5140, %v5139
        %v5142 = vperm.slane %v2880, %v5006
        %v5143 = vsel %vm5008, %v5142, %v5141
        %v5144 = vperm.slane %v2888, %v5010
        %v5145 = vsel %vm5012, %v5144, %v5143
        %v5146 = vperm.slane %v2896, %v5014
        %v5147 = vsel %vm5016, %v5146, %v5145
        %v5148 = vperm.slane %v2904, %v5018
        %v5149 = vsel %vm5020, %v5148, %v5147
        %v5150 = vperm.slane %v2912, %v5022
        %v5151 = vsel %vm5024, %v5150, %v5149
        %v5152 = vperm.slane %v2920, %v5026
        %v5153 = vsel %vm5028, %v5152, %v5151
        %v5154 = vperm.slane %v2928, %v2023
        %v5155 = vperm.slane %v2936, %v4970
        %v5156 = vsel %vm4972, %v5155, %v5154
        %v5157 = vperm.slane %v2944, %v4974
        %v5158 = vsel %vm4976, %v5157, %v5156
        %v5159 = vperm.slane %v2952, %v4978
        %v5160 = vsel %vm4980, %v5159, %v5158
        %v5161 = vperm.slane %v2960, %v4982
        %v5162 = vsel %vm4984, %v5161, %v5160
        %v5163 = vperm.slane %v2968, %v4986
        %v5164 = vsel %vm4988, %v5163, %v5162
        %v5165 = vperm.slane %v2976, %v4990
        %v5166 = vsel %vm4992, %v5165, %v5164
        %v5167 = vperm.slane %v2984, %v4994
        %v5168 = vsel %vm4996, %v5167, %v5166
        %v5169 = vperm.slane %v2992, %v4998
        %v5170 = vsel %vm5000, %v5169, %v5168
        %v5171 = vperm.slane %v3000, %v5002
        %v5172 = vsel %vm5004, %v5171, %v5170
        %v5173 = vperm.slane %v3008, %v5006
        %v5174 = vsel %vm5008, %v5173, %v5172
        %v5175 = vperm.slane %v3016, %v5010
        %v5176 = vsel %vm5012, %v5175, %v5174
        %v5177 = vperm.slane %v3024, %v5014
        %v5178 = vsel %vm5016, %v5177, %v5176
        %v5179 = vperm.slane %v3032, %v5018
        %v5180 = vsel %vm5020, %v5179, %v5178
        %v5181 = vperm.slane %v3040, %v5022
        %v5182 = vsel %vm5024, %v5181, %v5180
        %v5183 = vperm.slane %v3048, %v5026
        %v5184 = vsel %vm5028, %v5183, %v5182
        %v5185 = vperm.slane %v3184, %v2023
        %v5186 = vperm.slane %v3192, %v4970
        %v5187 = vsel %vm4972, %v5186, %v5185
        %v5188 = vperm.slane %v3200, %v4974
        %v5189 = vsel %vm4976, %v5188, %v5187
        %v5190 = vperm.slane %v3208, %v4978
        %v5191 = vsel %vm4980, %v5190, %v5189
        %v5192 = vperm.slane %v3216, %v4982
        %v5193 = vsel %vm4984, %v5192, %v5191
        %v5194 = vperm.slane %v3224, %v4986
        %v5195 = vsel %vm4988, %v5194, %v5193
        %v5196 = vperm.slane %v3232, %v4990
        %v5197 = vsel %vm4992, %v5196, %v5195
        %v5198 = vperm.slane %v3240, %v4994
        %v5199 = vsel %vm4996, %v5198, %v5197
        %v5200 = vperm.slane %v3248, %v4998
        %v5201 = vsel %vm5000, %v5200, %v5199
        %v5202 = vperm.slane %v3256, %v5002
        %v5203 = vsel %vm5004, %v5202, %v5201
        %v5204 = vperm.slane %v3264, %v5006
        %v5205 = vsel %vm5008, %v5204, %v5203
        %v5206 = vperm.slane %v3272, %v5010
        %v5207 = vsel %vm5012, %v5206, %v5205
        %v5208 = vperm.slane %v3280, %v5014
        %v5209 = vsel %vm5016, %v5208, %v5207
        %v5210 = vperm.slane %v3288, %v5018
        %v5211 = vsel %vm5020, %v5210, %v5209
        %v5212 = vperm.slane %v3296, %v5022
        %v5213 = vsel %vm5024, %v5212, %v5211
        %v5214 = vperm.slane %v3304, %v5026
        %v5215 = vsel %vm5028, %v5214, %v5213
        %v5216 = vperm.slane %v3312, %v2023
        %v5217 = vperm.slane %v3320, %v4970
        %v5218 = vsel %vm4972, %v5217, %v5216
        %v5219 = vperm.slane %v3328, %v4974
        %v5220 = vsel %vm4976, %v5219, %v5218
        %v5221 = vperm.slane %v3336, %v4978
        %v5222 = vsel %vm4980, %v5221, %v5220
        %v5223 = vperm.slane %v3344, %v4982
        %v5224 = vsel %vm4984, %v5223, %v5222
        %v5225 = vperm.slane %v3352, %v4986
        %v5226 = vsel %vm4988, %v5225, %v5224
        %v5227 = vperm.slane %v3360, %v4990
        %v5228 = vsel %vm4992, %v5227, %v5226
        %v5229 = vperm.slane %v3368, %v4994
        %v5230 = vsel %vm4996, %v5229, %v5228
        %v5231 = vperm.slane %v3376, %v4998
        %v5232 = vsel %vm5000, %v5231, %v5230
        %v5233 = vperm.slane %v3384, %v5002
        %v5234 = vsel %vm5004, %v5233, %v5232
        %v5235 = vperm.slane %v3392, %v5006
        %v5236 = vsel %vm5008, %v5235, %v5234
        %v5237 = vperm.slane %v3400, %v5010
        %v5238 = vsel %vm5012, %v5237, %v5236
        %v5239 = vperm.slane %v3408, %v5014
        %v5240 = vsel %vm5016, %v5239, %v5238
        %v5241 = vperm.slane %v3416, %v5018
        %v5242 = vsel %vm5020, %v5241, %v5240
        %v5243 = vperm.slane %v3424, %v5022
        %v5244 = vsel %vm5024, %v5243, %v5242
        %v5245 = vperm.slane %v3432, %v5026
        %v5246 = vsel %vm5028, %v5245, %v5244
        %v5247 = vperm.slane %v3568, %v2023
        %v5248 = vperm.slane %v3576, %v4970
        %v5249 = vsel %vm4972, %v5248, %v5247
        %v5250 = vperm.slane %v3584, %v4974
        %v5251 = vsel %vm4976, %v5250, %v5249
        %v5252 = vperm.slane %v3592, %v4978
        %v5253 = vsel %vm4980, %v5252, %v5251
        %v5254 = vperm.slane %v3600, %v4982
        %v5255 = vsel %vm4984, %v5254, %v5253
        %v5256 = vperm.slane %v3608, %v4986
        %v5257 = vsel %vm4988, %v5256, %v5255
        %v5258 = vperm.slane %v3616, %v4990
        %v5259 = vsel %vm4992, %v5258, %v5257
        %v5260 = vperm.slane %v3624, %v4994
        %v5261 = vsel %vm4996, %v5260, %v5259
        %v5262 = vperm.slane %v3632, %v4998
        %v5263 = vsel %vm5000, %v5262, %v5261
        %v5264 = vperm.slane %v3640, %v5002
        %v5265 = vsel %vm5004, %v5264, %v5263
        %v5266 = vperm.slane %v3648, %v5006
        %v5267 = vsel %vm5008, %v5266, %v5265
        %v5268 = vperm.slane %v3656, %v5010
        %v5269 = vsel %vm5012, %v5268, %v5267
        %v5270 = vperm.slane %v3664, %v5014
        %v5271 = vsel %vm5016, %v5270, %v5269
        %v5272 = vperm.slane %v3672, %v5018
        %v5273 = vsel %vm5020, %v5272, %v5271
        %v5274 = vperm.slane %v3680, %v5022
        %v5275 = vsel %vm5024, %v5274, %v5273
        %v5276 = vperm.slane %v3688, %v5026
        %v5277 = vsel %vm5028, %v5276, %v5275
        %v5278 = vperm.slane %v3696, %v2023
        %v5279 = vperm.slane %v3704, %v4970
        %v5280 = vsel %vm4972, %v5279, %v5278
        %v5281 = vperm.slane %v3712, %v4974
        %v5282 = vsel %vm4976, %v5281, %v5280
        %v5283 = vperm.slane %v3720, %v4978
        %v5284 = vsel %vm4980, %v5283, %v5282
        %v5285 = vperm.slane %v3728, %v4982
        %v5286 = vsel %vm4984, %v5285, %v5284
        %v5287 = vperm.slane %v3736, %v4986
        %v5288 = vsel %vm4988, %v5287, %v5286
        %v5289 = vperm.slane %v3744, %v4990
        %v5290 = vsel %vm4992, %v5289, %v5288
        %v5291 = vperm.slane %v3752, %v4994
        %v5292 = vsel %vm4996, %v5291, %v5290
        %v5293 = vperm.slane %v3760, %v4998
        %v5294 = vsel %vm5000, %v5293, %v5292
        %v5295 = vperm.slane %v3768, %v5002
        %v5296 = vsel %vm5004, %v5295, %v5294
        %v5297 = vperm.slane %v3776, %v5006
        %v5298 = vsel %vm5008, %v5297, %v5296
        %v5299 = vperm.slane %v3784, %v5010
        %v5300 = vsel %vm5012, %v5299, %v5298
        %v5301 = vperm.slane %v3792, %v5014
        %v5302 = vsel %vm5016, %v5301, %v5300
        %v5303 = vperm.slane %v3800, %v5018
        %v5304 = vsel %vm5020, %v5303, %v5302
        %v5305 = vperm.slane %v3808, %v5022
        %v5306 = vsel %vm5024, %v5305, %v5304
        %v5307 = vperm.slane %v3816, %v5026
        %v5308 = vsel %vm5028, %v5307, %v5306
        %v5309 = vperm.slane %v3952, %v2023
        %v5310 = vperm.slane %v3960, %v4970
        %v5311 = vsel %vm4972, %v5310, %v5309
        %v5312 = vperm.slane %v3968, %v4974
        %v5313 = vsel %vm4976, %v5312, %v5311
        %v5314 = vperm.slane %v3976, %v4978
        %v5315 = vsel %vm4980, %v5314, %v5313
        %v5316 = vperm.slane %v3984, %v4982
        %v5317 = vsel %vm4984, %v5316, %v5315
        %v5318 = vperm.slane %v3992, %v4986
        %v5319 = vsel %vm4988, %v5318, %v5317
        %v5320 = vperm.slane %v4000, %v4990
        %v5321 = vsel %vm4992, %v5320, %v5319
        %v5322 = vperm.slane %v4008, %v4994
        %v5323 = vsel %vm4996, %v5322, %v5321
        %v5324 = vperm.slane %v4016, %v4998
        %v5325 = vsel %vm5000, %v5324, %v5323
        %v5326 = vperm.slane %v4024, %v5002
        %v5327 = vsel %vm5004, %v5326, %v5325
        %v5328 = vperm.slane %v4032, %v5006
        %v5329 = vsel %vm5008, %v5328, %v5327
        %v5330 = vperm.slane %v4040, %v5010
        %v5331 = vsel %vm5012, %v5330, %v5329
        %v5332 = vperm.slane %v4048, %v5014
        %v5333 = vsel %vm5016, %v5332, %v5331
        %v5334 = vperm.slane %v4056, %v5018
        %v5335 = vsel %vm5020, %v5334, %v5333
        %v5336 = vperm.slane %v4064, %v5022
        %v5337 = vsel %vm5024, %v5336, %v5335
        %v5338 = vperm.slane %v4072, %v5026
        %v5339 = vsel %vm5028, %v5338, %v5337
        %v5340 = vperm.slane %v4080, %v2023
        %v5341 = vperm.slane %v4088, %v4970
        %v5342 = vsel %vm4972, %v5341, %v5340
        %v5343 = vperm.slane %v4096, %v4974
        %v5344 = vsel %vm4976, %v5343, %v5342
        %v5345 = vperm.slane %v4104, %v4978
        %v5346 = vsel %vm4980, %v5345, %v5344
        %v5347 = vperm.slane %v4112, %v4982
        %v5348 = vsel %vm4984, %v5347, %v5346
        %v5349 = vperm.slane %v4120, %v4986
        %v5350 = vsel %vm4988, %v5349, %v5348
        %v5351 = vperm.slane %v4128, %v4990
        %v5352 = vsel %vm4992, %v5351, %v5350
        %v5353 = vperm.slane %v4136, %v4994
        %v5354 = vsel %vm4996, %v5353, %v5352
        %v5355 = vperm.slane %v4144, %v4998
        %v5356 = vsel %vm5000, %v5355, %v5354
        %v5357 = vperm.slane %v4152, %v5002
        %v5358 = vsel %vm5004, %v5357, %v5356
        %v5359 = vperm.slane %v4160, %v5006
        %v5360 = vsel %vm5008, %v5359, %v5358
        %v5361 = vperm.slane %v4168, %v5010
        %v5362 = vsel %vm5012, %v5361, %v5360
        %v5363 = vperm.slane %v4176, %v5014
        %v5364 = vsel %vm5016, %v5363, %v5362
        %v5365 = vperm.slane %v4184, %v5018
        %v5366 = vsel %vm5020, %v5365, %v5364
        %v5367 = vperm.slane %v4192, %v5022
        %v5368 = vsel %vm5024, %v5367, %v5366
        %v5369 = vperm.slane %v4200, %v5026
        %v5370 = vsel %vm5028, %v5369, %v5368
        %v5371 = vperm.slane %v4336, %v2023
        %v5372 = vperm.slane %v4344, %v4970
        %v5373 = vsel %vm4972, %v5372, %v5371
        %v5374 = vperm.slane %v4352, %v4974
        %v5375 = vsel %vm4976, %v5374, %v5373
        %v5376 = vperm.slane %v4360, %v4978
        %v5377 = vsel %vm4980, %v5376, %v5375
        %v5378 = vperm.slane %v4368, %v4982
        %v5379 = vsel %vm4984, %v5378, %v5377
        %v5380 = vperm.slane %v4376, %v4986
        %v5381 = vsel %vm4988, %v5380, %v5379
        %v5382 = vperm.slane %v4384, %v4990
        %v5383 = vsel %vm4992, %v5382, %v5381
        %v5384 = vperm.slane %v4392, %v4994
        %v5385 = vsel %vm4996, %v5384, %v5383
        %v5386 = vperm.slane %v4400, %v4998
        %v5387 = vsel %vm5000, %v5386, %v5385
        %v5388 = vperm.slane %v4408, %v5002
        %v5389 = vsel %vm5004, %v5388, %v5387
        %v5390 = vperm.slane %v4416, %v5006
        %v5391 = vsel %vm5008, %v5390, %v5389
        %v5392 = vperm.slane %v4424, %v5010
        %v5393 = vsel %vm5012, %v5392, %v5391
        %v5394 = vperm.slane %v4432, %v5014
        %v5395 = vsel %vm5016, %v5394, %v5393
        %v5396 = vperm.slane %v4440, %v5018
        %v5397 = vsel %vm5020, %v5396, %v5395
        %v5398 = vperm.slane %v4448, %v5022
        %v5399 = vsel %vm5024, %v5398, %v5397
        %v5400 = vperm.slane %v4456, %v5026
        %v5401 = vsel %vm5028, %v5400, %v5399
        %v5402 = vperm.slane %v4464, %v2023
        %v5403 = vperm.slane %v4472, %v4970
        %v5404 = vsel %vm4972, %v5403, %v5402
        %v5405 = vperm.slane %v4480, %v4974
        %v5406 = vsel %vm4976, %v5405, %v5404
        %v5407 = vperm.slane %v4488, %v4978
        %v5408 = vsel %vm4980, %v5407, %v5406
        %v5409 = vperm.slane %v4496, %v4982
        %v5410 = vsel %vm4984, %v5409, %v5408
        %v5411 = vperm.slane %v4504, %v4986
        %v5412 = vsel %vm4988, %v5411, %v5410
        %v5413 = vperm.slane %v4512, %v4990
        %v5414 = vsel %vm4992, %v5413, %v5412
        %v5415 = vperm.slane %v4520, %v4994
        %v5416 = vsel %vm4996, %v5415, %v5414
        %v5417 = vperm.slane %v4528, %v4998
        %v5418 = vsel %vm5000, %v5417, %v5416
        %v5419 = vperm.slane %v4536, %v5002
        %v5420 = vsel %vm5004, %v5419, %v5418
        %v5421 = vperm.slane %v4544, %v5006
        %v5422 = vsel %vm5008, %v5421, %v5420
        %v5423 = vperm.slane %v4552, %v5010
        %v5424 = vsel %vm5012, %v5423, %v5422
        %v5425 = vperm.slane %v4560, %v5014
        %v5426 = vsel %vm5016, %v5425, %v5424
        %v5427 = vperm.slane %v4568, %v5018
        %v5428 = vsel %vm5020, %v5427, %v5426
        %v5429 = vperm.slane %v4576, %v5022
        %v5430 = vsel %vm5024, %v5429, %v5428
        %v5431 = vperm.slane %v4584, %v5026
        %v5432 = vsel %vm5028, %v5431, %v5430
        %v5433 = vperm.slane %v4720, %v2023
        %v5434 = vperm.slane %v4728, %v4970
        %v5435 = vsel %vm4972, %v5434, %v5433
        %v5436 = vperm.slane %v4736, %v4974
        %v5437 = vsel %vm4976, %v5436, %v5435
        %v5438 = vperm.slane %v4744, %v4978
        %v5439 = vsel %vm4980, %v5438, %v5437
        %v5440 = vperm.slane %v4752, %v4982
        %v5441 = vsel %vm4984, %v5440, %v5439
        %v5442 = vperm.slane %v4760, %v4986
        %v5443 = vsel %vm4988, %v5442, %v5441
        %v5444 = vperm.slane %v4768, %v4990
        %v5445 = vsel %vm4992, %v5444, %v5443
        %v5446 = vperm.slane %v4776, %v4994
        %v5447 = vsel %vm4996, %v5446, %v5445
        %v5448 = vperm.slane %v4784, %v4998
        %v5449 = vsel %vm5000, %v5448, %v5447
        %v5450 = vperm.slane %v4792, %v5002
        %v5451 = vsel %vm5004, %v5450, %v5449
        %v5452 = vperm.slane %v4800, %v5006
        %v5453 = vsel %vm5008, %v5452, %v5451
        %v5454 = vperm.slane %v4808, %v5010
        %v5455 = vsel %vm5012, %v5454, %v5453
        %v5456 = vperm.slane %v4816, %v5014
        %v5457 = vsel %vm5016, %v5456, %v5455
        %v5458 = vperm.slane %v4824, %v5018
        %v5459 = vsel %vm5020, %v5458, %v5457
        %v5460 = vperm.slane %v4832, %v5022
        %v5461 = vsel %vm5024, %v5460, %v5459
        %v5462 = vperm.slane %v4840, %v5026
        %v5463 = vsel %vm5028, %v5462, %v5461
        %v5464 = vperm.slane %v4848, %v2023
        %v5465 = vperm.slane %v4856, %v4970
        %v5466 = vsel %vm4972, %v5465, %v5464
        %v5467 = vperm.slane %v4864, %v4974
        %v5468 = vsel %vm4976, %v5467, %v5466
        %v5469 = vperm.slane %v4872, %v4978
        %v5470 = vsel %vm4980, %v5469, %v5468
        %v5471 = vperm.slane %v4880, %v4982
        %v5472 = vsel %vm4984, %v5471, %v5470
        %v5473 = vperm.slane %v4888, %v4986
        %v5474 = vsel %vm4988, %v5473, %v5472
        %v5475 = vperm.slane %v4896, %v4990
        %v5476 = vsel %vm4992, %v5475, %v5474
        %v5477 = vperm.slane %v4904, %v4994
        %v5478 = vsel %vm4996, %v5477, %v5476
        %v5479 = vperm.slane %v4912, %v4998
        %v5480 = vsel %vm5000, %v5479, %v5478
        %v5481 = vperm.slane %v4920, %v5002
        %v5482 = vsel %vm5004, %v5481, %v5480
        %v5483 = vperm.slane %v4928, %v5006
        %v5484 = vsel %vm5008, %v5483, %v5482
        %v5485 = vperm.slane %v4936, %v5010
        %v5486 = vsel %vm5012, %v5485, %v5484
        %v5487 = vperm.slane %v4944, %v5014
        %v5488 = vsel %vm5016, %v5487, %v5486
        %v5489 = vperm.slane %v4952, %v5018
        %v5490 = vsel %vm5020, %v5489, %v5488
        %v5491 = vperm.slane %v4960, %v5022
        %v5492 = vsel %vm5024, %v5491, %v5490
        %v5493 = vperm.slane %v4968, %v5026
        %v5494 = vsel %vm5028, %v5493, %v5492
        %vm5495 = vcmask 1040384
        %v5496 = vsel %vm5495, %v5029, %v5091
        %v5497 = vsel %vm5495, %v5060, %v5122
        %vm5498 = vcmask 1041408
        %v5499 = vsel %vm5498, %v5496, %v5153
        %v5500 = vsel %vm5498, %v5497, %v5184
        %vm5501 = vcmask 1042432
        %v5502 = vsel %vm5501, %v5499, %v5215
        %v5503 = vsel %vm5501, %v5500, %v5246
        %vm5504 = vcmask 1043456
        %v5505 = vsel %vm5504, %v5502, %v5277
        %v5506 = vsel %vm5504, %v5503, %v5308
        %vm5507 = vcmask 1044480
        %v5508 = vsel %vm5507, %v5505, %v5339
        %v5509 = vsel %vm5507, %v5506, %v5370
        %vm5510 = vcmask 1045504
        %v5511 = vsel %vm5510, %v5508, %v5401
        %v5512 = vsel %vm5510, %v5509, %v5432
        %vm5513 = vcmask 1046528
        %v5514 = vsel %vm5513, %v5511, %v5463
        %v5515 = vsel %vm5513, %v5512, %v5494
        %5516 = vst [vmem:[%s176] sm:$0xff] %v5514
        %5517 = vst [vmem:[%s176 + $0x8] sm:$0xff] %v5515
        %s5518 = sand.u32 %s92, 1
        %s5519 = scalar_lea.sflag [#allocation3], %s5518
        %s5520 = sand.u32 %s92, 1
        %s5521 = smul.addr %s5520, 16
        %s5522 = scalar_lea.vmem [#allocation2], %s5521
        // Predicated region
        $region29: #{tpu_custom_call.1} parent=27 // pred_check
          %p5523 = pneg %p102
        $region30: #{tpu_custom_call.1} parent=27 // pred_check_branch
          %5525 = sbr.rel (%p5523) target = $region32
        $region31: #{tpu_custom_call.1} parent=27 // pred_region
          %s5526 = smul.u32 2, %s21
          %5528 = vsyncadd %s5519, 0
          %s5529 = smul.addr %s20, 2
          %s5530 = sadd.s32 %s5526, %s5529
          %s5531 = smul.addr %s5530, 8
          %s5532 = scalar_lea.hbm %s2, %s5531
          %s5534 = sshll.u32 %s5522, 4
          %s5535 = int_to_ptr.vmem [resolvable:$true] %s5534
          %s5536 = sshll.u32 %s5532, 4
          %s5537 = int_to_ptr.hbm [resolvable:$true] %s5536
          %5539 = dma.vmem_to_hbm [thread:$0]  %s5535, 256, %s5537, %s5519
        $region32: #{tpu_custom_call.1} parent=27 // pred_fallthru
          _
      $region28: #{tpu_custom_call.1} parent=5 // pred_fallthru
        _
      %p5540 = scmp.le.s32.totalorder 2, %s11
      // Predicated region
      $region33: #{tpu_custom_call.1} parent=5 // pred_check
        %p5541 = pneg %p5540
      $region34: #{tpu_custom_call.1} parent=5 // pred_check_branch
        %5543 = sbr.rel (%p5541) target = $region36
      $region35: #{tpu_custom_call.1} parent=5 // pred_region
        %s5544 = ssub.s32 %s11, 2
        // Predicated region
        $region37: #{tpu_custom_call.1} parent=35 // pred_check
          %p5545 = pneg %p108
        $region38: #{tpu_custom_call.1} parent=35 // pred_check_branch
          %5547 = sbr.rel (%p5545) target = $region40
        $region39: #{tpu_custom_call.1} parent=35 // pred_region
          %s5548 = sand.u32 %s93, 1
          %s5549 = scalar_lea.sflag [#allocation3], %s5548
          %s5550 = sand.u32 %s93, 1
          %s5551 = smul.addr %s5550, 16
          %s5552 = scalar_lea.vmem [#allocation2], %s5551
          %5554 = dma.done %s5549, 256
        $region40: #{tpu_custom_call.1} parent=35 // pred_fallthru
          _
      $region36: #{tpu_custom_call.1} parent=5 // pred_fallthru
        _
    $region6: #{tpu_custom_call.1} parent=1 // loop_footer
      %s15 = sadd.s32 1, %s11
    $region7: #{tpu_custom_call.1} parent=1 // loop_footer_branch
      %10 = sbr.rel target = $region3
    $region8: #{tpu_custom_call.1} parent=1 // loop_exit
      _
    %5555 = vsyncpa [#allocation3], 1
    %s5556 = scalar_lea.sflag [#allocation3], 1
    %5557 = vsyncpa %s5556, 1

</llo_original>
